<compile_context>
chip_gen: v7x
topology: tpu7x:2x2x1
jax: 0.10.0
libtpu: 0.0.40
codegen_flags: <defaults>
</compile_context>

<pallas_src>
import functools

import jax
import jax.numpy as jnp
from jax.experimental import pallas as pl
from jax.experimental.pallas import tpu as pltpu


def _gcn_fused_kernel(x_ref, a_ref, w_ref, b_ref, o_ref, *,
                      n_prop, tg, c_in, c_out, compute_dtype, precision):
    """Fused nconv + 1x1-conv (per-block weight accumulation) for one tile.

    x_ref: (tg, C, Vp)       activations, stream dtype, lanes = nodes
    a_ref: (B, Vp, Vp)       precomputed adjacency powers (compute dtype)
    w_ref: (B+1, Cout, C)    1x1-conv weight split into torch.cat-order slabs
    b_ref: (Cout, 1)         bias (f32)
    o_ref: (tg, Cout, Vp)    output tile, lanes = nodes (lane-dense)
    """
    x3 = x_ref[...].astype(compute_dtype)                     # (tg, C, Vp)

    def weight_contrib(h3, b):
        # h3 is channel block `b` of the (virtual) torch.cat; apply its weight
        # slab immediately and return the f32 contribution (tg, Cout, Vp).
        wb = jnp.broadcast_to(w_ref[b][None], (tg, c_out, c_in))   # (tg,Cout,C)
        return jnp.einsum('goc,gcv->gov', wb, h3,
                          preferred_element_type=jnp.float32,
                          precision=precision)

    # k = 0: identity block.
    acc = weight_contrib(x3, 0)

    # k = 1..B: independent propagations (MXU matmuls); each propagated slab
    # is consumed by its weight slab right away and then freed.
    for b in range(n_prop):
        p = jnp.dot(x3, a_ref[b], preferred_element_type=jnp.float32,
                    precision=precision)                       # (tg, C, Vp)
        acc = acc + weight_contrib(p.astype(compute_dtype), b + 1)

    acc = acc + b_ref[...][None]                               # bias, once
    o_ref[...] = acc.astype(o_ref.dtype)                       # one store


def gcn_forward(x, supports, weight, bias, *, order=2, dropout=0.3,
                tg=None, compute_dtype=jnp.bfloat16):
    """Pallas implementation of GraphWaveNet gcn.forward (inference semantics).

    x:        (N, C_in, V, L) float32
    supports: list of (V, V)  float32 adjacency matrices
    weight:   (C_out, (order*len(supports)+1)*C_in, 1, 1)
    bias:     (C_out,)
    returns   (N, C_out, V, L) in x.dtype
    """
    N, C, V, L = x.shape
    S = len(supports)
    B = order * S                                  # number of propagated blocks
    Ctot = (B + 1) * C
    Cout = weight.shape[0]
    G = N * L                                      # number of (n, l) groups

    stream_dtype = compute_dtype                   # stream activations at compute precision
    precision = (jax.lax.Precision.HIGHEST
                 if jnp.dtype(compute_dtype) == jnp.dtype(jnp.float32) else None)

    # ---- lane padding: node axis -> multiple of 128 --------------------------
    Vp = ((V + 127) // 128) * 128

    # ---- tile-size selection (groups per grid step) --------------------------
    if tg is None:
        tg = max(8, 4096 // max(C, 1))             # ~4k propagation rows / tile
    tg = max(1, min(tg, G))
    if G > 1 and pl.cdiv(G, tg) < 2:               # keep both v7x TCs busy
        tg = pl.cdiv(G, 2)
    n_tiles = pl.cdiv(G, tg)
    Gp = n_tiles * tg

    # ---- precompute adjacency powers (cheap, V^3), pad, pre-cast -------------
    pows = []
    for a in supports:
        ak = a
        pows.append(ak)
        for _ in range(2, order + 1):
            ak = jnp.dot(ak, a)
            pows.append(ak)
    a_pows = jnp.stack(pows, axis=0)                               # (B, V, V)
    a_pows = jnp.pad(a_pows, ((0, 0), (0, Vp - V), (0, Vp - V)))
    a_pows = a_pows.astype(compute_dtype)                          # (B, Vp, Vp)

    # ---- activations: (group, channel, node) with node lane-dense ------------
    xg = jnp.transpose(x, (0, 3, 1, 2)).reshape(G, C, V)           # (G, C, V)
    xg = jnp.pad(xg, ((0, Gp - G), (0, 0), (0, Vp - V)))
    xg = xg.astype(stream_dtype)                                   # (Gp, C, Vp)

    # ---- weight split into torch.cat-order slabs, pre-cast; f32 bias ---------
    w3 = weight.reshape(Cout, B + 1, C)
    w3 = jnp.transpose(w3, (1, 0, 2)).astype(compute_dtype)        # (B+1,Cout,C)
    b2 = bias.reshape(Cout, 1).astype(jnp.float32)                 # (Cout, 1)

    # ---- VMEM budget: v7x-safe default, larger on v5e/v6e --------------------
    vmem_limit = 48 * 1024 * 1024
    try:
        if getattr(pltpu.get_tpu_info(), "vmem_capacity_bytes", 0) >= 100 * 1024 * 1024:
            vmem_limit = 96 * 1024 * 1024
    except Exception:
        pass

    sb = jnp.dtype(stream_dtype).itemsize
    cb = jnp.dtype(compute_dtype).itemsize
    flops = 2 * Gp * C * Vp * Vp * B + 2 * Gp * Vp * Ctot * Cout
    bytes_accessed = (sb * Gp * C * Vp + sb * Gp * Cout * Vp
                      + cb * B * Vp * Vp + cb * (B + 1) * Cout * C + 4 * Cout)

    kernel = functools.partial(
        _gcn_fused_kernel, n_prop=B, tg=tg, c_in=C, c_out=Cout,
        compute_dtype=compute_dtype, precision=precision)

    out3 = pl.pallas_call(
        kernel,
        out_shape=jax.ShapeDtypeStruct((Gp, Cout, Vp), stream_dtype),
        grid=(n_tiles,),
        in_specs=[
            pl.BlockSpec((tg, C, Vp), lambda i: (i, 0, 0)),        # activations
            pl.BlockSpec((B, Vp, Vp), lambda i: (0, 0, 0)),        # adj powers
            pl.BlockSpec((B + 1, Cout, C), lambda i: (0, 0, 0)),   # weight slabs
            pl.BlockSpec((Cout, 1), lambda i: (0, 0)),             # bias
        ],
        out_specs=pl.BlockSpec((tg, Cout, Vp), lambda i: (i, 0, 0)),
        compiler_params=pltpu.CompilerParams(
            dimension_semantics=("parallel",),       # megacore-shard on v7x
            vmem_limit_bytes=vmem_limit),
        cost_estimate=pl.CostEstimate(
            flops=flops, transcendentals=0, bytes_accessed=bytes_accessed),
    )(xg, a_pows, w3, b2)

    out = out3[:G, :, :V].astype(x.dtype)                          # drop padding
    out = jnp.transpose(out.reshape(N, L, Cout, V), (0, 2, 3, 1))  # (N,Cout,V,L)
    # TODO(synk): F.dropout is identity at inference; training-mode dropout
    # would use pltpu.prng_seed / pltpu.prng_random_bits on the output tile.
    return out


def gcn_reference(x, supports, weight, bias, *, order=2):
    """Pure-JAX reference mirroring the PyTorch forward (eval mode, f32)."""
    out = [x]
    for a in supports:
        x1 = jnp.einsum('ncvl,vw->ncwl', x, a)
        out.append(x1)
        for _ in range(2, order + 1):
            x1 = jnp.einsum('ncvl,vw->ncwl', x1, a)
            out.append(x1)
    h = jnp.concatenate(out, axis=1)
    w2 = weight.reshape(weight.shape[0], -1)
    return jnp.einsum('ncvl,dc->ndvl', h, w2) + bias[None, :, None, None]


if __name__ == "__main__":
    # Small shapes: batch=2, c_in=8, num_nodes=16, seq_len=8, support_len=3, order=2
    N, C_in, V, L = 2, 8, 16, 8
    support_len, order = 3, 2
    C_out = 8
    Ctot = (order * support_len + 1) * C_in       # 56

    key = jax.random.PRNGKey(0)
    kx, ks, kw, kb = jax.random.split(key, 4)
    x = jax.random.normal(kx, (N, C_in, V, L), dtype=jnp.float32)
    sup_raw = jax.random.uniform(ks, (support_len, V, V), dtype=jnp.float32)
    # row-normalized adjacencies (typical GraphWaveNet supports)
    supports = [sup_raw[i] / jnp.sum(sup_raw[i], axis=1, keepdims=True)
                for i in range(support_len)]
    bound = 1.0 / (Ctot ** 0.5)                   # PyTorch Conv2d default-ish init
    weight = jax.random.uniform(kw, (C_out, Ctot, 1, 1),
                                minval=-bound, maxval=bound, dtype=jnp.float32)
    bias = jax.random.uniform(kb, (C_out,),
                              minval=-bound, maxval=bound, dtype=jnp.float32)

    # default tg heuristic -> tg=8, a 2-step "parallel" grid at these shapes
    out = gcn_forward(x, supports, weight, bias, order=order, dropout=0.3)
    out = jax.block_until_ready(out)

    ref = gcn_reference(x, supports, weight, bias, order=order)
    assert out.shape == (N, C_out, V, L), out.shape
    err_max = float(jnp.max(jnp.abs(out - ref)))
    err_mean = float(jnp.mean(jnp.abs(out - ref)))
    # bf16 compute / bf16 streaming: loose max tolerance, tight mean tolerance.
    assert err_max < 1e-1, ("max abs err", err_max)
    assert err_mean < 2e-2, ("mean abs err", err_mean)
    print("KERNEL_OK")
</pallas_src>

<mosaic_0001>
module attributes {stable_mosaic.version = 11 : i64} {
  func.func @_gcn_fused_kernel(%arg0: i32, %arg1: memref<8x8x128xbf16, #tpu.memory_space<vmem>>, %arg2: memref<6x128x128xbf16, #tpu.memory_space<vmem>>, %arg3: memref<7x8x8xbf16, #tpu.memory_space<vmem>>, %arg4: memref<8x1xf32, #tpu.memory_space<vmem>>, %arg5: memref<8x8x128xbf16, #tpu.memory_space<vmem>>) attributes {dimension_semantics = [#tpu.dimension_semantics<parallel>], iteration_bounds = array<i64: 2>, scalar_prefetch = 0 : i64, scratch_operands = 0 : i64, tpu.core_type = #tpu.core_type<tc>, window_params = [{transform_indices = @transform_0, window_bounds = array<i64: 8, 8, 128>}, {pipeline_mode = #tpu.pipeline_mode<synchronous>, transform_indices = @transform_1, window_bounds = array<i64: 6, 128, 128>}, {pipeline_mode = #tpu.pipeline_mode<synchronous>, transform_indices = @transform_2, window_bounds = array<i64: 7, 8, 8>}, {pipeline_mode = #tpu.pipeline_mode<synchronous>, transform_indices = @transform_3, window_bounds = array<i64: 8, 1>}, {transform_indices = @transform_4, window_bounds = array<i64: 8, 8, 128>}]} {
    %c0 = arith.constant 0 : index
    %c0_0 = arith.constant 0 : index
    %c0_1 = arith.constant 0 : index
    %0 = vector.load %arg1[%c0, %c0_0, %c0_1] : memref<8x8x128xbf16, #tpu.memory_space<vmem>>, vector<8x8x128xbf16>
    %c0_2 = arith.constant 0 : index
    %c0_3 = arith.constant 0 : index
    %c0_4 = arith.constant 0 : index
    %1 = vector.load %arg3[%c0_2, %c0_3, %c0_4] : memref<7x8x8xbf16, #tpu.memory_space<vmem>>, vector<1x8x8xbf16>
    %2 = vector.shape_cast %1 : vector<1x8x8xbf16> to vector<8x8xbf16>
    %3 = vector.shape_cast %2 : vector<8x8xbf16> to vector<1x8x8xbf16>
    %4 = vector.shape_cast %3 : vector<1x8x8xbf16> to vector<1x8x8xbf16>
    %5 = vector.broadcast %4 : vector<1x8x8xbf16> to vector<8x8x8xbf16>
    "tpu.trace_start"() <{level = 10 : i32, message = "goc,gcv->gov"}> : () -> ()
    %cst = arith.constant dense<0.000000e+00> : vector<8x8x128xf32>
    %6 = tpu.matmul %5, %0, %cst {dimension_numbers = #tpu.dot_dimension_numbers<[2], [1], [1], [2], [0, 0, 0, 1, 1, 2], [0], [0]>} : vector<8x8x8xbf16>, vector<8x8x128xbf16>, vector<8x8x128xf32> -> vector<8x8x128xf32>
    "tpu.trace_stop"() : () -> ()
    %c0_5 = arith.constant 0 : index
    %c0_6 = arith.constant 0 : index
    %c0_7 = arith.constant 0 : index
    %7 = vector.load %arg2[%c0_5, %c0_6, %c0_7] : memref<6x128x128xbf16, #tpu.memory_space<vmem>>, vector<1x128x128xbf16>
    %8 = vector.shape_cast %7 : vector<1x128x128xbf16> to vector<128x128xbf16>
    %cst_8 = arith.constant dense<0.000000e+00> : vector<8x8x128xf32>
    %9 = tpu.matmul %0, %8, %cst_8 {dimension_numbers = #tpu.dot_dimension_numbers<[2], [0], [0, 1], [1], [0, 0, 0, 1, 1, 1], [], []>} : vector<8x8x128xbf16>, vector<128x128xbf16>, vector<8x8x128xf32> -> vector<8x8x128xf32>
    %10 = arith.truncf %9 : vector<8x8x128xf32> to vector<8x8x128xbf16>
    %c1 = arith.constant 1 : index
    %c0_9 = arith.constant 0 : index
    %c0_10 = arith.constant 0 : index
    %11 = vector.load %arg3[%c1, %c0_9, %c0_10] : memref<7x8x8xbf16, #tpu.memory_space<vmem>>, vector<1x8x8xbf16>
    %12 = vector.shape_cast %11 : vector<1x8x8xbf16> to vector<8x8xbf16>
    %13 = vector.shape_cast %12 : vector<8x8xbf16> to vector<1x8x8xbf16>
    %14 = vector.shape_cast %13 : vector<1x8x8xbf16> to vector<1x8x8xbf16>
    %15 = vector.broadcast %14 : vector<1x8x8xbf16> to vector<8x8x8xbf16>
    "tpu.trace_start"() <{level = 10 : i32, message = "goc,gcv->gov"}> : () -> ()
    %cst_11 = arith.constant dense<0.000000e+00> : vector<8x8x128xf32>
    %16 = tpu.matmul %15, %10, %cst_11 {dimension_numbers = #tpu.dot_dimension_numbers<[2], [1], [1], [2], [0, 0, 0, 1, 1, 2], [0], [0]>} : vector<8x8x8xbf16>, vector<8x8x128xbf16>, vector<8x8x128xf32> -> vector<8x8x128xf32>
    "tpu.trace_stop"() : () -> ()
    %17 = arith.addf %6, %16 : vector<8x8x128xf32>
    %c1_12 = arith.constant 1 : index
    %c0_13 = arith.constant 0 : index
    %c0_14 = arith.constant 0 : index
    %18 = vector.load %arg2[%c1_12, %c0_13, %c0_14] : memref<6x128x128xbf16, #tpu.memory_space<vmem>>, vector<1x128x128xbf16>
    %19 = vector.shape_cast %18 : vector<1x128x128xbf16> to vector<128x128xbf16>
    %cst_15 = arith.constant dense<0.000000e+00> : vector<8x8x128xf32>
    %20 = tpu.matmul %0, %19, %cst_15 {dimension_numbers = #tpu.dot_dimension_numbers<[2], [0], [0, 1], [1], [0, 0, 0, 1, 1, 1], [], []>} : vector<8x8x128xbf16>, vector<128x128xbf16>, vector<8x8x128xf32> -> vector<8x8x128xf32>
    %21 = arith.truncf %20 : vector<8x8x128xf32> to vector<8x8x128xbf16>
    %c2 = arith.constant 2 : index
    %c0_16 = arith.constant 0 : index
    %c0_17 = arith.constant 0 : index
    %22 = vector.load %arg3[%c2, %c0_16, %c0_17] : memref<7x8x8xbf16, #tpu.memory_space<vmem>>, vector<1x8x8xbf16>
    %23 = vector.shape_cast %22 : vector<1x8x8xbf16> to vector<8x8xbf16>
    %24 = vector.shape_cast %23 : vector<8x8xbf16> to vector<1x8x8xbf16>
    %25 = vector.shape_cast %24 : vector<1x8x8xbf16> to vector<1x8x8xbf16>
    %26 = vector.broadcast %25 : vector<1x8x8xbf16> to vector<8x8x8xbf16>
    "tpu.trace_start"() <{level = 10 : i32, message = "goc,gcv->gov"}> : () -> ()
    %cst_18 = arith.constant dense<0.000000e+00> : vector<8x8x128xf32>
    %27 = tpu.matmul %26, %21, %cst_18 {dimension_numbers = #tpu.dot_dimension_numbers<[2], [1], [1], [2], [0, 0, 0, 1, 1, 2], [0], [0]>} : vector<8x8x8xbf16>, vector<8x8x128xbf16>, vector<8x8x128xf32> -> vector<8x8x128xf32>
    "tpu.trace_stop"() : () -> ()
    %28 = arith.addf %17, %27 : vector<8x8x128xf32>
    %c2_19 = arith.constant 2 : index
    %c0_20 = arith.constant 0 : index
    %c0_21 = arith.constant 0 : index
    %29 = vector.load %arg2[%c2_19, %c0_20, %c0_21] : memref<6x128x128xbf16, #tpu.memory_space<vmem>>, vector<1x128x128xbf16>
    %30 = vector.shape_cast %29 : vector<1x128x128xbf16> to vector<128x128xbf16>
    %cst_22 = arith.constant dense<0.000000e+00> : vector<8x8x128xf32>
    %31 = tpu.matmul %0, %30, %cst_22 {dimension_numbers = #tpu.dot_dimension_numbers<[2], [0], [0, 1], [1], [0, 0, 0, 1, 1, 1], [], []>} : vector<8x8x128xbf16>, vector<128x128xbf16>, vector<8x8x128xf32> -> vector<8x8x128xf32>
    %32 = arith.truncf %31 : vector<8x8x128xf32> to vector<8x8x128xbf16>
    %c3 = arith.constant 3 : index
    %c0_23 = arith.constant 0 : index
    %c0_24 = arith.constant 0 : index
    %33 = vector.load %arg3[%c3, %c0_23, %c0_24] : memref<7x8x8xbf16, #tpu.memory_space<vmem>>, vector<1x8x8xbf16>
    %34 = vector.shape_cast %33 : vector<1x8x8xbf16> to vector<8x8xbf16>
    %35 = vector.shape_cast %34 : vector<8x8xbf16> to vector<1x8x8xbf16>
    %36 = vector.shape_cast %35 : vector<1x8x8xbf16> to vector<1x8x8xbf16>
    %37 = vector.broadcast %36 : vector<1x8x8xbf16> to vector<8x8x8xbf16>
    "tpu.trace_start"() <{level = 10 : i32, message = "goc,gcv->gov"}> : () -> ()
    %cst_25 = arith.constant dense<0.000000e+00> : vector<8x8x128xf32>
    %38 = tpu.matmul %37, %32, %cst_25 {dimension_numbers = #tpu.dot_dimension_numbers<[2], [1], [1], [2], [0, 0, 0, 1, 1, 2], [0], [0]>} : vector<8x8x8xbf16>, vector<8x8x128xbf16>, vector<8x8x128xf32> -> vector<8x8x128xf32>
    "tpu.trace_stop"() : () -> ()
    %39 = arith.addf %28, %38 : vector<8x8x128xf32>
    %c3_26 = arith.constant 3 : index
    %c0_27 = arith.constant 0 : index
    %c0_28 = arith.constant 0 : index
    %40 = vector.load %arg2[%c3_26, %c0_27, %c0_28] : memref<6x128x128xbf16, #tpu.memory_space<vmem>>, vector<1x128x128xbf16>
    %41 = vector.shape_cast %40 : vector<1x128x128xbf16> to vector<128x128xbf16>
    %cst_29 = arith.constant dense<0.000000e+00> : vector<8x8x128xf32>
    %42 = tpu.matmul %0, %41, %cst_29 {dimension_numbers = #tpu.dot_dimension_numbers<[2], [0], [0, 1], [1], [0, 0, 0, 1, 1, 1], [], []>} : vector<8x8x128xbf16>, vector<128x128xbf16>, vector<8x8x128xf32> -> vector<8x8x128xf32>
    %43 = arith.truncf %42 : vector<8x8x128xf32> to vector<8x8x128xbf16>
    %c4 = arith.constant 4 : index
    %c0_30 = arith.constant 0 : index
    %c0_31 = arith.constant 0 : index
    %44 = vector.load %arg3[%c4, %c0_30, %c0_31] : memref<7x8x8xbf16, #tpu.memory_space<vmem>>, vector<1x8x8xbf16>
    %45 = vector.shape_cast %44 : vector<1x8x8xbf16> to vector<8x8xbf16>
    %46 = vector.shape_cast %45 : vector<8x8xbf16> to vector<1x8x8xbf16>
    %47 = vector.shape_cast %46 : vector<1x8x8xbf16> to vector<1x8x8xbf16>
    %48 = vector.broadcast %47 : vector<1x8x8xbf16> to vector<8x8x8xbf16>
    "tpu.trace_start"() <{level = 10 : i32, message = "goc,gcv->gov"}> : () -> ()
    %cst_32 = arith.constant dense<0.000000e+00> : vector<8x8x128xf32>
    %49 = tpu.matmul %48, %43, %cst_32 {dimension_numbers = #tpu.dot_dimension_numbers<[2], [1], [1], [2], [0, 0, 0, 1, 1, 2], [0], [0]>} : vector<8x8x8xbf16>, vector<8x8x128xbf16>, vector<8x8x128xf32> -> vector<8x8x128xf32>
    "tpu.trace_stop"() : () -> ()
    %50 = arith.addf %39, %49 : vector<8x8x128xf32>
    %c4_33 = arith.constant 4 : index
    %c0_34 = arith.constant 0 : index
    %c0_35 = arith.constant 0 : index
    %51 = vector.load %arg2[%c4_33, %c0_34, %c0_35] : memref<6x128x128xbf16, #tpu.memory_space<vmem>>, vector<1x128x128xbf16>
    %52 = vector.shape_cast %51 : vector<1x128x128xbf16> to vector<128x128xbf16>
    %cst_36 = arith.constant dense<0.000000e+00> : vector<8x8x128xf32>
    %53 = tpu.matmul %0, %52, %cst_36 {dimension_numbers = #tpu.dot_dimension_numbers<[2], [0], [0, 1], [1], [0, 0, 0, 1, 1, 1], [], []>} : vector<8x8x128xbf16>, vector<128x128xbf16>, vector<8x8x128xf32> -> vector<8x8x128xf32>
    %54 = arith.truncf %53 : vector<8x8x128xf32> to vector<8x8x128xbf16>
    %c5 = arith.constant 5 : index
    %c0_37 = arith.constant 0 : index
    %c0_38 = arith.constant 0 : index
    %55 = vector.load %arg3[%c5, %c0_37, %c0_38] : memref<7x8x8xbf16, #tpu.memory_space<vmem>>, vector<1x8x8xbf16>
    %56 = vector.shape_cast %55 : vector<1x8x8xbf16> to vector<8x8xbf16>
    %57 = vector.shape_cast %56 : vector<8x8xbf16> to vector<1x8x8xbf16>
    %58 = vector.shape_cast %57 : vector<1x8x8xbf16> to vector<1x8x8xbf16>
    %59 = vector.broadcast %58 : vector<1x8x8xbf16> to vector<8x8x8xbf16>
    "tpu.trace_start"() <{level = 10 : i32, message = "goc,gcv->gov"}> : () -> ()
    %cst_39 = arith.constant dense<0.000000e+00> : vector<8x8x128xf32>
    %60 = tpu.matmul %59, %54, %cst_39 {dimension_numbers = #tpu.dot_dimension_numbers<[2], [1], [1], [2], [0, 0, 0, 1, 1, 2], [0], [0]>} : vector<8x8x8xbf16>, vector<8x8x128xbf16>, vector<8x8x128xf32> -> vector<8x8x128xf32>
    "tpu.trace_stop"() : () -> ()
    %61 = arith.addf %50, %60 : vector<8x8x128xf32>
    %c5_40 = arith.constant 5 : index
    %c0_41 = arith.constant 0 : index
    %c0_42 = arith.constant 0 : index
    %62 = vector.load %arg2[%c5_40, %c0_41, %c0_42] : memref<6x128x128xbf16, #tpu.memory_space<vmem>>, vector<1x128x128xbf16>
    %63 = vector.shape_cast %62 : vector<1x128x128xbf16> to vector<128x128xbf16>
    %cst_43 = arith.constant dense<0.000000e+00> : vector<8x8x128xf32>
    %64 = tpu.matmul %0, %63, %cst_43 {dimension_numbers = #tpu.dot_dimension_numbers<[2], [0], [0, 1], [1], [0, 0, 0, 1, 1, 1], [], []>} : vector<8x8x128xbf16>, vector<128x128xbf16>, vector<8x8x128xf32> -> vector<8x8x128xf32>
    %65 = arith.truncf %64 : vector<8x8x128xf32> to vector<8x8x128xbf16>
    %c6 = arith.constant 6 : index
    %c0_44 = arith.constant 0 : index
    %c0_45 = arith.constant 0 : index
    %66 = vector.load %arg3[%c6, %c0_44, %c0_45] : memref<7x8x8xbf16, #tpu.memory_space<vmem>>, vector<1x8x8xbf16>
    %67 = vector.shape_cast %66 : vector<1x8x8xbf16> to vector<8x8xbf16>
    %68 = vector.shape_cast %67 : vector<8x8xbf16> to vector<1x8x8xbf16>
    %69 = vector.shape_cast %68 : vector<1x8x8xbf16> to vector<1x8x8xbf16>
    %70 = vector.broadcast %69 : vector<1x8x8xbf16> to vector<8x8x8xbf16>
    "tpu.trace_start"() <{level = 10 : i32, message = "goc,gcv->gov"}> : () -> ()
    %cst_46 = arith.constant dense<0.000000e+00> : vector<8x8x128xf32>
    %71 = tpu.matmul %70, %65, %cst_46 {dimension_numbers = #tpu.dot_dimension_numbers<[2], [1], [1], [2], [0, 0, 0, 1, 1, 2], [0], [0]>} : vector<8x8x8xbf16>, vector<8x8x128xbf16>, vector<8x8x128xf32> -> vector<8x8x128xf32>
    "tpu.trace_stop"() : () -> ()
    %72 = arith.addf %61, %71 : vector<8x8x128xf32>
    %c0_47 = arith.constant 0 : index
    %c0_48 = arith.constant 0 : index
    %73 = vector.load %arg4[%c0_47, %c0_48] : memref<8x1xf32, #tpu.memory_space<vmem>>, vector<8x1xf32>
    %74 = vector.shape_cast %73 : vector<8x1xf32> to vector<1x8x1xf32>
    %75 = vector.broadcast %74 : vector<1x8x1xf32> to vector<8x8x128xf32>
    %76 = arith.addf %72, %75 : vector<8x8x128xf32>
    %77 = arith.truncf %76 : vector<8x8x128xf32> to vector<8x8x128xbf16>
    %c0_49 = arith.constant 0 : index
    %c0_50 = arith.constant 0 : index
    %c0_51 = arith.constant 0 : index
    %78 = vector.load %arg5[%c0_49, %c0_50, %c0_51] : memref<8x8x128xbf16, #tpu.memory_space<vmem>>, vector<8x8x128xbf16>
    tpu.vector_store %arg5[%c0_49, %c0_50, %c0_51], %77 {strides = array<i32>} : memref<8x8x128xbf16, #tpu.memory_space<vmem>>, vector<8x8x128xbf16>,
    return
  }
  func.func @transform_0(%arg0: i32) -> (i32, i32, i32) {
    %c0_i32 = arith.constant 0 : i32
    %c0_i32_0 = arith.constant 0 : i32
    %c0_i32_1 = arith.constant 0 : i32
    return %arg0, %c0_i32, %c0_i32_0 : i32, i32, i32
  }
  func.func @transform_1(%arg0: i32) -> (i32, i32, i32) {
    %c0_i32 = arith.constant 0 : i32
    %c0_i32_0 = arith.constant 0 : i32
    %c0_i32_1 = arith.constant 0 : i32
    %c0_i32_2 = arith.constant 0 : i32
    return %c0_i32, %c0_i32_0, %c0_i32_1 : i32, i32, i32
  }
  func.func @transform_2(%arg0: i32) -> (i32, i32, i32) {
    %c0_i32 = arith.constant 0 : i32
    %c0_i32_0 = arith.constant 0 : i32
    %c0_i32_1 = arith.constant 0 : i32
    %c0_i32_2 = arith.constant 0 : i32
    return %c0_i32, %c0_i32_0, %c0_i32_1 : i32, i32, i32
  }
  func.func @transform_3(%arg0: i32) -> (i32, i32) {
    %c0_i32 = arith.constant 0 : i32
    %c0_i32_0 = arith.constant 0 : i32
    %c0_i32_1 = arith.constant 0 : i32
    return %c0_i32, %c0_i32_0 : i32, i32
  }
  func.func @transform_4(%arg0: i32) -> (i32, i32, i32) {
    %c0_i32 = arith.constant 0 : i32
    %c0_i32_0 = arith.constant 0 : i32
    %c0_i32_1 = arith.constant 0 : i32
    return %arg0, %c0_i32, %c0_i32_0 : i32, i32, i32
  }
}

</mosaic_0001>

<llo_original>
// kernel: tpu_custom_call.1
$region0: #{tpu_custom_call.1}
  #allocation0 [shape = 'u32[]', space=smem, size = 0x4, offset = 0x4, fixed_abs, tag = 'smem constant byte address 0x4 - core index']
  #allocation1 [shape = 'u32[144,128]{1,0:T(1,128)}', space=vmem, size = 0x12000, scoped, tag = 'internal scratch']
  %s0 = inlined_call_operand.hbm [shape: bf16[16,8,128], index: 0, kind: input, shape index: {}]
  %s1 = inlined_call_operand.hbm [shape: bf16[6,128,128], index: 1, kind: input, shape index: {}]
  %s2 = inlined_call_operand.hbm [shape: bf16[7,8,8], index: 2, kind: input, shape index: {}]
  %s3 = inlined_call_operand.vmem [shape: f32[8,1], index: 3, kind: input, shape index: {}]
  %s4 = inlined_call_operand.hbm [shape: bf16[16,8,128], index: 4, kind: output, shape index: {}]
  %s5 = sld [smem:[#allocation0]]
  $region61: #{tpu_custom_call.1} parent=0
    _
  %s7 = ssub.s32 1, %s5
  %s8 = scalar_select 0, %s7, %s5
  $region1: #{tpu_custom_call.1} parent=0
    #allocation2 [shape = 'u8[32768]{0}', space=vmem, size = 0x8000, scoped, tag = 'input window, operand 0']
    #allocation3 [shape = 's32[2]{0}', space=sflag, size = 0x8, scoped, tag = 'scoped memory for tpu_custom_call.1']
    #allocation4 [shape = 's32[2]{0}', space=sflag, size = 0x8, scoped, tag = 'scoped memory for tpu_custom_call.1']
    #allocation5 [shape = 'u8[196608]{0}', space=vmem, size = 0x30000, scoped, tag = 'input window, operand 1, single buffered']
    #allocation6 [shape = 's32[1]{0}', space=sflag, size = 0x4, scoped, tag = 'scoped memory for tpu_custom_call.1']
    #allocation7 [shape = 'u8[14336]{0}', space=vmem, size = 0x3800, scoped, tag = 'input window, operand 2, single buffered']
    #allocation8 [shape = 'u8[32768]{0}', space=vmem, size = 0x8000, scoped, tag = 'output window, operand 0']
    %9 = vsyncpa [#allocation3], 0
    %s10 = scalar_lea.sflag [#allocation3], 1
    %11 = vsyncpa %s10, 0
    %12 = vsyncpa [#allocation6], 0
    %13 = vsyncpa [#allocation4], 0
    %s14 = scalar_lea.sflag [#allocation4], 1
    %15 = vsyncpa %s14, 0
    loop: start=0, step=1, limit=4
    $region2: #{tpu_custom_call.1} parent=1 // loop_pre_header
      _
    $region3: #{tpu_custom_call.1} parent=1 // loop_header
      %s17 = sphi 0, %s21
      %p18 = scmp.ge.s32.totalorder %s17, 4
      %s27 = sphi 0, %s29
      %s30 = sphi 0, %s27
      %s31 = sphi 0, %s30
      %s47 = sphi 0, %s31
      %s51 = sphi 0, %s51
      %s53 = sphi 0, %s51
      %s54 = sphi 0, %s53
      %s68 = sphi 0, %s54
      %s72 = sphi 0, %s72
      %s74 = sphi 0, %s72
      %s75 = sphi 0, %s74
      %s89 = sphi 0, %s75
      %s93 = sphi 0, %s93
      %s95 = sphi 0, %s93
      %s96 = sphi 0, %s95
      %s110 = sphi 0, %s96
      %s116 = sphi 0, %s118
      %s119 = sphi 0, %s116
      %s120 = sphi 0, %s119
      %s136 = sphi 0, %s120
    $region4: #{tpu_custom_call.1} parent=1 // loop_header_branch
      %20 = sbr.rel (%p18) target = $region8
    $region5: #{tpu_custom_call.1} parent=1 // loop_body
      %s22 = ssub.s32 %s17, 1
      %s23 = ssub.s32 %s17, 2
      %s24 = sadd.s32 %s17, 1
      %s25 = ssub.s32 %s17, %s24
      %p26 = scmp.eq.s32.totalorder %s25, 0
      %s28 = sadd.s32 %s27, 1
      %s29 = scalar_select %p26, %s27, %s28
      %p32 = pneg %p26
      %p33 = scmp.eq.s32.totalorder %s17, 1
      %p34 = por %p32, %p33
      %p35 = scmp.ne.s32.totalorder %s27, %s30
      %p36 = scmp.eq.s32.totalorder %s17, 0
      %p37 = por %p35, %p36
      %p38 = scmp.ne.s32.totalorder %s27, %s30
      %p39 = scmp.eq.s32.totalorder %s22, 1
      %p40 = por %p38, %p39
      %p41 = scmp.ne.s32.totalorder %s30, %s31
      %p42 = scmp.eq.s32.totalorder %s22, 0
      %p43 = por %p41, %p42
      %p44 = scmp.ne.s32.totalorder %s30, %s31
      %p45 = scmp.eq.s32.totalorder %s23, 1
      %p46 = por %p44, %p45
      %p48 = scmp.ne.s32.totalorder %s31, %s47
      %p49 = scmp.eq.s32.totalorder %s23, 0
      %p50 = por %p48, %p49
      %s52 = sadd.s32 %s51, 1
      %p55 = scmp.eq.s32.totalorder %s17, 1
      %p56 = scmp.ne.s32.totalorder %s51, %s53
      %p57 = scmp.eq.s32.totalorder %s17, 0
      %p58 = por %p56, %p57
      %p59 = scmp.ne.s32.totalorder %s51, %s53
      %p60 = scmp.eq.s32.totalorder %s22, 1
      %p61 = por %p59, %p60
      %p62 = scmp.ne.s32.totalorder %s53, %s54
      %p63 = scmp.eq.s32.totalorder %s22, 0
      %p64 = por %p62, %p63
      %p65 = scmp.ne.s32.totalorder %s53, %s54
      %p66 = scmp.eq.s32.totalorder %s23, 1
      %p67 = por %p65, %p66
      %p69 = scmp.ne.s32.totalorder %s54, %s68
      %p70 = scmp.eq.s32.totalorder %s23, 0
      %p71 = por %p69, %p70
      %s73 = sadd.s32 %s72, 1
      %p76 = scmp.eq.s32.totalorder %s17, 1
      %p77 = scmp.ne.s32.totalorder %s72, %s74
      %p78 = scmp.eq.s32.totalorder %s17, 0
      %p79 = por %p77, %p78
      %p80 = scmp.ne.s32.totalorder %s72, %s74
      %p81 = scmp.eq.s32.totalorder %s22, 1
      %p82 = por %p80, %p81
      %p83 = scmp.ne.s32.totalorder %s74, %s75
      %p84 = scmp.eq.s32.totalorder %s22, 0
      %p85 = por %p83, %p84
      %p86 = scmp.ne.s32.totalorder %s74, %s75
      %p87 = scmp.eq.s32.totalorder %s23, 1
      %p88 = por %p86, %p87
      %p90 = scmp.ne.s32.totalorder %s75, %s89
      %p91 = scmp.eq.s32.totalorder %s23, 0
      %p92 = por %p90, %p91
      %s94 = sadd.s32 %s93, 1
      %p97 = scmp.eq.s32.totalorder %s17, 1
      %p98 = scmp.ne.s32.totalorder %s93, %s95
      %p99 = scmp.eq.s32.totalorder %s17, 0
      %p100 = por %p98, %p99
      %p101 = scmp.ne.s32.totalorder %s93, %s95
      %p102 = scmp.eq.s32.totalorder %s22, 1
      %p103 = por %p101, %p102
      %p104 = scmp.ne.s32.totalorder %s95, %s96
      %p105 = scmp.eq.s32.totalorder %s22, 0
      %p106 = por %p104, %p105
      %p107 = scmp.ne.s32.totalorder %s95, %s96
      %p108 = scmp.eq.s32.totalorder %s23, 1
      %p109 = por %p107, %p108
      %p111 = scmp.ne.s32.totalorder %s96, %s110
      %p112 = scmp.eq.s32.totalorder %s23, 0
      %p113 = por %p111, %p112
      %s114 = ssub.s32 %s17, %s24
      %p115 = scmp.eq.s32.totalorder %s114, 0
      %s117 = sadd.s32 %s116, 1
      %s118 = scalar_select %p115, %s116, %s117
      %p121 = pneg %p115
      %p122 = scmp.eq.s32.totalorder %s17, 1
      %p123 = por %p121, %p122
      %p124 = scmp.ne.s32.totalorder %s116, %s119
      %p125 = scmp.eq.s32.totalorder %s17, 0
      %p126 = por %p124, %p125
      %p127 = scmp.ne.s32.totalorder %s116, %s119
      %p128 = scmp.eq.s32.totalorder %s22, 1
      %p129 = por %p127, %p128
      %p130 = scmp.ne.s32.totalorder %s119, %s120
      %p131 = scmp.eq.s32.totalorder %s22, 0
      %p132 = por %p130, %p131
      %p133 = scmp.ne.s32.totalorder %s119, %s120
      %p134 = scmp.eq.s32.totalorder %s23, 1
      %p135 = por %p133, %p134
      %p137 = scmp.ne.s32.totalorder %s120, %s136
      %p138 = scmp.eq.s32.totalorder %s23, 0
      %p139 = por %p137, %p138
      %p140 = scmp.le.s32.totalorder 1, %s17
      %p141 = scmp.lt.s32.totalorder %s17, 3
      %p142 = pnand %p140, %p141
      %p143 = pneg %p142
      // Predicated region
      $region9: #{tpu_custom_call.1} parent=5 // pred_check
        _
      $region10: #{tpu_custom_call.1} parent=5 // pred_check_branch
        %145 = sbr.rel (%p142) target = $region12
      $region11: #{tpu_custom_call.1} parent=5 // pred_region
        %s146 = ssub.s32 %s17, 1
        // Predicated region
        $region13: #{tpu_custom_call.1} parent=11 // pred_check
          %p147 = pneg %p64
        $region14: #{tpu_custom_call.1} parent=11 // pred_check_branch
          %149 = sbr.rel (%p147) target = $region16
        $region15: #{tpu_custom_call.1} parent=11 // pred_region
          %s151 = ssub.s32 6144, 6144
          %152 = vsyncadd [#allocation6], %s151
          %s153 = sshll.u32 [#allocation5], 4
          %s154 = int_to_ptr.vmem [resolvable:$true] %s153
          %159 = dma.hbm_to_vmem [thread:$0]  %s1, 6144, %s154, [#allocation6], 64, 64, 4
        $region16: #{tpu_custom_call.1} parent=11 // pred_fallthru
          _
        // Predicated region
        $region17: #{tpu_custom_call.1} parent=11 // pred_check
          %p160 = pneg %p85
        $region18: #{tpu_custom_call.1} parent=11 // pred_check_branch
          %162 = sbr.rel (%p160) target = $region20
        $region19: #{tpu_custom_call.1} parent=11 // pred_region
          %s164 = ssub.s32 448, 448
          %165 = vsyncadd [#allocation6], %s164
          %s166 = sshll.u32 [#allocation7], 4
          %s167 = int_to_ptr.vmem [resolvable:$true] %s166
          %172 = dma.hbm_to_vmem [thread:$0]  %s2, 448, %s167, [#allocation6], 64, 64, 4
        $region20: #{tpu_custom_call.1} parent=11 // pred_fallthru
          _
        // Predicated region
        $region21: #{tpu_custom_call.1} parent=11 // pred_check
          %p173 = pneg %p106
        $region22: #{tpu_custom_call.1} parent=11 // pred_check_branch
          %175 = sbr.rel (%p173) target = $region24
        $region23: #{tpu_custom_call.1} parent=11 // pred_region
          _
        $region24: #{tpu_custom_call.1} parent=11 // pred_fallthru
          _
      $region12: #{tpu_custom_call.1} parent=5 // pred_fallthru
        _
      %p176 = scmp.lt.s32.totalorder %s17, 2
      // Predicated region
      $region25: #{tpu_custom_call.1} parent=5 // pred_check
        %p177 = pneg %p176
      $region26: #{tpu_custom_call.1} parent=5 // pred_check_branch
        %179 = sbr.rel (%p177) target = $region28
      $region27: #{tpu_custom_call.1} parent=5 // pred_region
        // Predicated region
        $region29: #{tpu_custom_call.1} parent=27 // pred_check
          %p180 = pneg %p37
        $region30: #{tpu_custom_call.1} parent=27 // pred_check_branch
          %182 = sbr.rel (%p180) target = $region32
        $region31: #{tpu_custom_call.1} parent=27 // pred_region
          %s183 = sand.u32 %s27, 1
          %s184 = scalar_lea.sflag [#allocation3], %s183
          %s185 = sand.u32 %s27, 1
          %s186 = smul.addr %s185, 32
          %s187 = scalar_lea.vmem [#allocation2], %s186
          %s188 = smul.u32 8, %s17
          %s190 = ssub.s32 512, 512
          %191 = vsyncadd %s184, %s190
          %s192 = smul.addr %s188, 64
          %s193 = scalar_lea.hbm %s0, %s192
          %s194 = sshll.u32 %s187, 4
          %s195 = int_to_ptr.vmem [resolvable:$true] %s194
          %200 = dma.hbm_to_vmem [thread:$0]  %s193, 512, %s195, %s184, 64, 64, 4
        $region32: #{tpu_custom_call.1} parent=27 // pred_fallthru
          _
      $region28: #{tpu_custom_call.1} parent=5 // pred_fallthru
        _
      %p201 = scmp.le.s32.totalorder 1, %s17
      %p202 = scmp.lt.s32.totalorder %s17, 3
      %p203 = pnand %p201, %p202
      %p204 = pneg %p203
      // Predicated region
      $region33: #{tpu_custom_call.1} parent=5 // pred_check
        _
      $region34: #{tpu_custom_call.1} parent=5 // pred_check_branch
        %206 = sbr.rel (%p203) target = $region36
      $region35: #{tpu_custom_call.1} parent=5 // pred_region
        %s207 = ssub.s32 %s17, 1
        %s208 = sand.u32 %s30, 1
        %s209 = scalar_lea.sflag [#allocation3], %s208
        %s210 = sand.u32 %s30, 1
        %s211 = smul.addr %s210, 32
        %s212 = scalar_lea.vmem [#allocation2], %s211
        // Predicated region
        $region37: #{tpu_custom_call.1} parent=35 // pred_check
          %p213 = pneg %p43
        $region38: #{tpu_custom_call.1} parent=35 // pred_check_branch
          %215 = sbr.rel (%p213) target = $region40
        $region39: #{tpu_custom_call.1} parent=35 // pred_region
          %216 = dma.done %s209, 512
        $region40: #{tpu_custom_call.1} parent=35 // pred_fallthru
          _
        // Predicated region
        $region41: #{tpu_custom_call.1} parent=35 // pred_check
          %p217 = pneg %p64
        $region42: #{tpu_custom_call.1} parent=35 // pred_check_branch
          %219 = sbr.rel (%p217) target = $region44
        $region43: #{tpu_custom_call.1} parent=35 // pred_region
          %220 = dma.done [#allocation6], 6144
        $region44: #{tpu_custom_call.1} parent=35 // pred_fallthru
          _
        // Predicated region
        $region45: #{tpu_custom_call.1} parent=35 // pred_check
          %p221 = pneg %p85
        $region46: #{tpu_custom_call.1} parent=35 // pred_check_branch
          %223 = sbr.rel (%p221) target = $region48
        $region47: #{tpu_custom_call.1} parent=35 // pred_region
          %224 = dma.done [#allocation6], 448
        $region48: #{tpu_custom_call.1} parent=35 // pred_fallthru
          _
        %s225 = sand.u32 %s30, 1
        %s226 = scalar_lea.sflag [#allocation3], %s225
        %s227 = sand.u32 %s30, 1
        %s228 = smul.addr %s227, 32
        %s229 = scalar_lea.vmem [#allocation2], %s228
        %p230 = pneg %p43
        %p231 = pneg %p40
        %p232 = pneg %p64
        %p233 = pneg %p61
        %p234 = pneg %p85
        %p235 = pneg %p82
        %p236 = pneg %p106
        %p237 = pneg %p103
        %p238 = pneg %p132
        %p239 = pneg %p129
        %s240 = sand.u32 %s119, 1
        %s241 = scalar_lea.sflag [#allocation4], %s240
        %s242 = sand.u32 %s119, 1
        %s243 = smul.addr %s242, 32
        %s244 = scalar_lea.vmem [#allocation8], %s243
        %s245 = smul.u32 8, %s22
        %s246 = smul.u32 8, %s22
        %v248 = vld [vmem:[%s212] sm:$0xf]
        %v249 = vld [vmem:[%s212 + $0x4] sm:$0xf]
        %v250 = vld [vmem:[%s212 + $0x8] sm:$0xf]
        %v251 = vld [vmem:[%s212 + $0xc] sm:$0xf]
        %v252 = vld [vmem:[%s212 + $0x10] sm:$0xf]
        %v253 = vld [vmem:[%s212 + $0x14] sm:$0xf]
        %v254 = vld [vmem:[%s212 + $0x18] sm:$0xf]
        %v255 = vld [vmem:[%s212 + $0x1c] sm:$0xf]
        %v256 = vld [vmem:[#allocation7] sm:$0xf]
        %v257 = vld [vmem:[#allocation5] sm:$0xf]
        %v258 = vld [vmem:[#allocation5 + $0x4] sm:$0xf]
        %v259 = vld [vmem:[#allocation5 + $0x8] sm:$0xf]
        %v260 = vld [vmem:[#allocation5 + $0xc] sm:$0xf]
        %v261 = vld [vmem:[#allocation5 + $0x10] sm:$0xf]
        %v262 = vld [vmem:[#allocation5 + $0x14] sm:$0xf]
        %v263 = vld [vmem:[#allocation5 + $0x18] sm:$0xf]
        %v264 = vld [vmem:[#allocation5 + $0x1c] sm:$0xf]
        %v265 = vld [vmem:[#allocation5 + $0x20] sm:$0xf]
        %v266 = vld [vmem:[#allocation5 + $0x24] sm:$0xf]
        %v267 = vld [vmem:[#allocation5 + $0x28] sm:$0xf]
        %v268 = vld [vmem:[#allocation5 + $0x2c] sm:$0xf]
        %v269 = vld [vmem:[#allocation5 + $0x30] sm:$0xf]
        %v270 = vld [vmem:[#allocation5 + $0x34] sm:$0xf]
        %v271 = vld [vmem:[#allocation5 + $0x38] sm:$0xf]
        %v272 = vld [vmem:[#allocation5 + $0x3c] sm:$0xf]
        %v281 = vunpack.c.l.b16 %v248
        %v282 = vunpack.c.l.b16 %v249
        %v283 = vunpack.c.l.b16 %v250
        %v284 = vunpack.c.l.b16 %v251
        %v285 = vunpack.c.l.b16 %v252
        %v286 = vunpack.c.l.b16 %v253
        %v287 = vunpack.c.l.b16 %v254
        %v288 = vunpack.c.l.b16 %v255
        %v289 = vpack.c.b16 %v282, %v281
        %v290 = vpack.c.b16 %v284, %v283
        %v291 = vpack.c.b16 %v286, %v285
        %v292 = vpack.c.b16 %v288, %v287
        %v313 = vunpack.c.l.b16 %v257
        %v314 = vunpack.c.l.b16 %v258
        %v315 = vunpack.c.l.b16 %v259
        %v316 = vunpack.c.l.b16 %v260
        %v317 = vunpack.c.l.b16 %v261
        %v318 = vunpack.c.l.b16 %v262
        %v319 = vunpack.c.l.b16 %v263
        %v320 = vunpack.c.l.b16 %v264
        %v321 = vunpack.c.l.b16 %v265
        %v322 = vunpack.c.l.b16 %v266
        %v323 = vunpack.c.l.b16 %v267
        %v324 = vunpack.c.l.b16 %v268
        %v325 = vunpack.c.l.b16 %v269
        %v326 = vunpack.c.l.b16 %v270
        %v327 = vunpack.c.l.b16 %v271
        %v328 = vunpack.c.l.b16 %v272
        %v329 = vpack.c.b16 %v314, %v313
        %v330 = vpack.c.b16 %v316, %v315
        %v331 = vpack.c.b16 %v318, %v317
        %v332 = vpack.c.b16 %v320, %v319
        %v333 = vpack.c.b16 %v322, %v321
        %v334 = vpack.c.b16 %v324, %v323
        %v335 = vpack.c.b16 %v326, %v325
        %v336 = vpack.c.b16 %v328, %v327
        %345 = vmatprep.subr.bf16.mxu0 0
        %346 = vmatpush1.bf16.msra.mxu0 %v329
        %347 = vmatprep.subr.bf16.mxu0 0
        %348 = vmatpush1.bf16.msra.mxu0 %v330
        %349 = vmatprep.subr.bf16.mxu0 0
        %350 = vmatpush1.bf16.msra.mxu0 %v331
        %351 = vmatprep.subr.bf16.mxu0 0
        %352 = vmatpush1.bf16.msra.mxu0 %v332
        %353 = vmatprep.subr.bf16.mxu0 0
        %354 = vmatpush1.bf16.msra.mxu0 %v333
        %355 = vmatprep.subr.bf16.mxu0 0
        %356 = vmatpush1.bf16.msra.mxu0 %v334
        %357 = vmatprep.subr.bf16.mxu0 0
        %358 = vmatpush1.bf16.msra.mxu0 %v335
        %359 = vmatprep.subr.bf16.mxu0 0
        %360 = vmatpush1.bf16.msra.mxu0 %v336
        %361 = vmatprep.subr.bf16.mxu0 0
        %362 = vmatpush1.bf16.msra.mxu0 0
        %363 = vmatprep.subr.bf16.mxu0 0
        %364 = vmatpush1.bf16.msra.mxu0 0
        %365 = vmatprep.subr.bf16.mxu0 0
        %366 = vmatpush1.bf16.msra.mxu0 0
        %367 = vmatprep.subr.bf16.mxu0 0
        %368 = vmatpush1.bf16.msra.mxu0 0
        %369 = vmatprep.subr.bf16.mxu0 0
        %370 = vmatpush1.bf16.msra.mxu0 0
        %371 = vmatprep.subr.bf16.mxu0 0
        %372 = vmatpush1.bf16.msra.mxu0 0
        %373 = vmatprep.subr.bf16.mxu0 0
        %374 = vmatpush1.bf16.msra.mxu0 0
        %375 = vmatprep.subr.bf16.mxu0 0
        %376 = vmatpush1.bf16.msra.mxu0 0
        %377 = vmatprep.mubr.bf16.mxu0 0
        %378 = vmatmul.mubr.bf16.gmra.mrb[0].mxu0 %v289
        %v379 = vpop.f32.mrb[0].mxu0
        %v380 = vadd.f32 0.0, %v379
        %v381 = vpop.f32.mrb[0].mxu0
        %v382 = vpop.f32.mrb[0].mxu0
        %v383 = vadd.f32 0.0, %v382
        %v384 = vpop.f32.mrb[0].mxu0
        %385 = vmatprep.mubr.bf16.mxu0 0
        %386 = vmatmul.mubr.bf16.gmra.mrb[0].mxu0 %v290
        %v387 = vpop.f32.mrb[0].mxu0
        %v388 = vadd.f32 0.0, %v387
        %v389 = vpop.f32.mrb[0].mxu0
        %v390 = vpop.f32.mrb[0].mxu0
        %v391 = vadd.f32 0.0, %v390
        %v392 = vpop.f32.mrb[0].mxu0
        %393 = vmatprep.mubr.bf16.mxu0 0
        %394 = vmatmul.mubr.bf16.gmra.mrb[0].mxu0 %v291
        %v395 = vpop.f32.mrb[0].mxu0
        %v396 = vadd.f32 0.0, %v395
        %v397 = vpop.f32.mrb[0].mxu0
        %v398 = vpop.f32.mrb[0].mxu0
        %v399 = vadd.f32 0.0, %v398
        %v400 = vpop.f32.mrb[0].mxu0
        %401 = vmatprep.mubr.bf16.mxu0 0
        %402 = vmatmul.mubr.bf16.gmra.mrb[0].mxu0 %v292
        %v403 = vpop.f32.mrb[0].mxu0
        %v404 = vadd.f32 0.0, %v403
        %v405 = vpop.f32.mrb[0].mxu0
        %v406 = vpop.f32.mrb[0].mxu0
        %v407 = vadd.f32 0.0, %v406
        %v408 = vpop.f32.mrb[0].mxu0
        %409 = vdwg.mxu0
        %v410 = vpack.c.bf16 %v380, %v380
        %v411 = vpack.c.bf16 %v383, %v383
        %v412 = vpack.c.bf16 %v388, %v388
        %v413 = vpack.c.bf16 %v391, %v391
        %v414 = vpack.c.bf16 %v396, %v396
        %v415 = vpack.c.bf16 %v399, %v399
        %v416 = vpack.c.bf16 %v404, %v404
        %v417 = vpack.c.bf16 %v407, %v407
        %s418 = scalar_lea.vmem [#allocation7], 4
        %v419 = vld [vmem:[%s418] sm:$0xf]
        %vm420 = vcmask 64512
        %v422 = vsel %vm420, %v419, 0
        %vm424 = vcmask 1043456
        %v426 = vsel %vm424, %v410, 0
        %428 = vmatprep.subr.bf16.mxu0 0
        %429 = vmatpush1.bf16.msra.mxu0 %v426
        %430 = vmatprep.subr.bf16.mxu0 0
        %431 = vmatpush1.bf16.msra.mxu0 0
        %432 = vmatprep.subr.bf16.mxu0 0
        %433 = vmatpush1.bf16.msra.mxu0 0
        %434 = vmatprep.subr.bf16.mxu0 0
        %435 = vmatpush1.bf16.msra.mxu0 0
        %436 = vmatprep.subr.bf16.mxu0 0
        %437 = vmatpush1.bf16.msra.mxu0 0
        %438 = vmatprep.subr.bf16.mxu0 0
        %439 = vmatpush1.bf16.msra.mxu0 0
        %440 = vmatprep.subr.bf16.mxu0 0
        %441 = vmatpush1.bf16.msra.mxu0 0
        %442 = vmatprep.subr.bf16.mxu0 0
        %443 = vmatpush1.bf16.msra.mxu0 0
        %444 = vmatprep.subr.bf16.mxu0 0
        %445 = vmatpush1.bf16.msra.mxu0 0
        %446 = vmatprep.subr.bf16.mxu0 0
        %447 = vmatpush1.bf16.msra.mxu0 0
        %448 = vmatprep.subr.bf16.mxu0 0
        %449 = vmatpush1.bf16.msra.mxu0 0
        %450 = vmatprep.subr.bf16.mxu0 0
        %451 = vmatpush1.bf16.msra.mxu0 0
        %452 = vmatprep.subr.bf16.mxu0 0
        %453 = vmatpush1.bf16.msra.mxu0 0
        %454 = vmatprep.subr.bf16.mxu0 0
        %455 = vmatpush1.bf16.msra.mxu0 0
        %456 = vmatprep.subr.bf16.mxu0 0
        %457 = vmatpush1.bf16.msra.mxu0 0
        %458 = vmatprep.subr.bf16.mxu0 0
        %459 = vmatpush1.bf16.msra.mxu0 0
        %460 = vmatprep.mubr.bf16.mxu0 0
        %461 = vmatmul.mubr.bf16.gmra.mrb[0].mxu0 %v422
        %v462 = vpop.f32.mrb[0].mxu0
        %v463 = vadd.f32 0.0, %v462
        %v464 = vpop.f32.mrb[0].mxu0
        %v465 = vpop.f32.mrb[0].mxu0
        %v466 = vpop.f32.mrb[0].mxu0
        %467 = vdwg.mxu0
        %v469 = vsel %vm424, %v411, 0
        %471 = vmatprep.subr.bf16.mxu0 0
        %472 = vmatpush1.bf16.msra.mxu0 %v469
        %473 = vmatprep.subr.bf16.mxu0 0
        %474 = vmatpush1.bf16.msra.mxu0 0
        %475 = vmatprep.subr.bf16.mxu0 0
        %476 = vmatpush1.bf16.msra.mxu0 0
        %477 = vmatprep.subr.bf16.mxu0 0
        %478 = vmatpush1.bf16.msra.mxu0 0
        %479 = vmatprep.subr.bf16.mxu0 0
        %480 = vmatpush1.bf16.msra.mxu0 0
        %481 = vmatprep.subr.bf16.mxu0 0
        %482 = vmatpush1.bf16.msra.mxu0 0
        %483 = vmatprep.subr.bf16.mxu0 0
        %484 = vmatpush1.bf16.msra.mxu0 0
        %485 = vmatprep.subr.bf16.mxu0 0
        %486 = vmatpush1.bf16.msra.mxu0 0
        %487 = vmatprep.subr.bf16.mxu0 0
        %488 = vmatpush1.bf16.msra.mxu0 0
        %489 = vmatprep.subr.bf16.mxu0 0
        %490 = vmatpush1.bf16.msra.mxu0 0
        %491 = vmatprep.subr.bf16.mxu0 0
        %492 = vmatpush1.bf16.msra.mxu0 0
        %493 = vmatprep.subr.bf16.mxu0 0
        %494 = vmatpush1.bf16.msra.mxu0 0
        %495 = vmatprep.subr.bf16.mxu0 0
        %496 = vmatpush1.bf16.msra.mxu0 0
        %497 = vmatprep.subr.bf16.mxu0 0
        %498 = vmatpush1.bf16.msra.mxu0 0
        %499 = vmatprep.subr.bf16.mxu0 0
        %500 = vmatpush1.bf16.msra.mxu0 0
        %501 = vmatprep.subr.bf16.mxu0 0
        %502 = vmatpush1.bf16.msra.mxu0 0
        %503 = vmatprep.mubr.bf16.mxu0 0
        %504 = vmatmul.mubr.bf16.gmra.mrb[0].mxu0 %v422
        %v505 = vpop.f32.mrb[0].mxu0
        %v506 = vadd.f32 0.0, %v505
        %v507 = vpop.f32.mrb[0].mxu0
        %v508 = vpop.f32.mrb[0].mxu0
        %v509 = vpop.f32.mrb[0].mxu0
        %510 = vdwg.mxu0
        %v512 = vsel %vm424, %v412, 0
        %514 = vmatprep.subr.bf16.mxu0 0
        %515 = vmatpush1.bf16.msra.mxu0 %v512
        %516 = vmatprep.subr.bf16.mxu0 0
        %517 = vmatpush1.bf16.msra.mxu0 0
        %518 = vmatprep.subr.bf16.mxu0 0
        %519 = vmatpush1.bf16.msra.mxu0 0
        %520 = vmatprep.subr.bf16.mxu0 0
        %521 = vmatpush1.bf16.msra.mxu0 0
        %522 = vmatprep.subr.bf16.mxu0 0
        %523 = vmatpush1.bf16.msra.mxu0 0
        %524 = vmatprep.subr.bf16.mxu0 0
        %525 = vmatpush1.bf16.msra.mxu0 0
        %526 = vmatprep.subr.bf16.mxu0 0
        %527 = vmatpush1.bf16.msra.mxu0 0
        %528 = vmatprep.subr.bf16.mxu0 0
        %529 = vmatpush1.bf16.msra.mxu0 0
        %530 = vmatprep.subr.bf16.mxu0 0
        %531 = vmatpush1.bf16.msra.mxu0 0
        %532 = vmatprep.subr.bf16.mxu0 0
        %533 = vmatpush1.bf16.msra.mxu0 0
        %534 = vmatprep.subr.bf16.mxu0 0
        %535 = vmatpush1.bf16.msra.mxu0 0
        %536 = vmatprep.subr.bf16.mxu0 0
        %537 = vmatpush1.bf16.msra.mxu0 0
        %538 = vmatprep.subr.bf16.mxu0 0
        %539 = vmatpush1.bf16.msra.mxu0 0
        %540 = vmatprep.subr.bf16.mxu0 0
        %541 = vmatpush1.bf16.msra.mxu0 0
        %542 = vmatprep.subr.bf16.mxu0 0
        %543 = vmatpush1.bf16.msra.mxu0 0
        %544 = vmatprep.subr.bf16.mxu0 0
        %545 = vmatpush1.bf16.msra.mxu0 0
        %546 = vmatprep.mubr.bf16.mxu0 0
        %547 = vmatmul.mubr.bf16.gmra.mrb[0].mxu0 %v422
        %v548 = vpop.f32.mrb[0].mxu0
        %v549 = vadd.f32 0.0, %v548
        %v550 = vpop.f32.mrb[0].mxu0
        %v551 = vpop.f32.mrb[0].mxu0
        %v552 = vpop.f32.mrb[0].mxu0
        %553 = vdwg.mxu0
        %v555 = vsel %vm424, %v413, 0
        %557 = vmatprep.subr.bf16.mxu0 0
        %558 = vmatpush1.bf16.msra.mxu0 %v555
        %559 = vmatprep.subr.bf16.mxu0 0
        %560 = vmatpush1.bf16.msra.mxu0 0
        %561 = vmatprep.subr.bf16.mxu0 0
        %562 = vmatpush1.bf16.msra.mxu0 0
        %563 = vmatprep.subr.bf16.mxu0 0
        %564 = vmatpush1.bf16.msra.mxu0 0
        %565 = vmatprep.subr.bf16.mxu0 0
        %566 = vmatpush1.bf16.msra.mxu0 0
        %567 = vmatprep.subr.bf16.mxu0 0
        %568 = vmatpush1.bf16.msra.mxu0 0
        %569 = vmatprep.subr.bf16.mxu0 0
        %570 = vmatpush1.bf16.msra.mxu0 0
        %571 = vmatprep.subr.bf16.mxu0 0
        %572 = vmatpush1.bf16.msra.mxu0 0
        %573 = vmatprep.subr.bf16.mxu0 0
        %574 = vmatpush1.bf16.msra.mxu0 0
        %575 = vmatprep.subr.bf16.mxu0 0
        %576 = vmatpush1.bf16.msra.mxu0 0
        %577 = vmatprep.subr.bf16.mxu0 0
        %578 = vmatpush1.bf16.msra.mxu0 0
        %579 = vmatprep.subr.bf16.mxu0 0
        %580 = vmatpush1.bf16.msra.mxu0 0
        %581 = vmatprep.subr.bf16.mxu0 0
        %582 = vmatpush1.bf16.msra.mxu0 0
        %583 = vmatprep.subr.bf16.mxu0 0
        %584 = vmatpush1.bf16.msra.mxu0 0
        %585 = vmatprep.subr.bf16.mxu0 0
        %586 = vmatpush1.bf16.msra.mxu0 0
        %587 = vmatprep.subr.bf16.mxu0 0
        %588 = vmatpush1.bf16.msra.mxu0 0
        %589 = vmatprep.mubr.bf16.mxu0 0
        %590 = vmatmul.mubr.bf16.gmra.mrb[0].mxu0 %v422
        %v591 = vpop.f32.mrb[0].mxu0
        %v592 = vadd.f32 0.0, %v591
        %v593 = vpop.f32.mrb[0].mxu0
        %v594 = vpop.f32.mrb[0].mxu0
        %v595 = vpop.f32.mrb[0].mxu0
        %596 = vdwg.mxu0
        %v598 = vsel %vm424, %v414, 0
        %600 = vmatprep.subr.bf16.mxu0 0
        %601 = vmatpush1.bf16.msra.mxu0 %v598
        %602 = vmatprep.subr.bf16.mxu0 0
        %603 = vmatpush1.bf16.msra.mxu0 0
        %604 = vmatprep.subr.bf16.mxu0 0
        %605 = vmatpush1.bf16.msra.mxu0 0
        %606 = vmatprep.subr.bf16.mxu0 0
        %607 = vmatpush1.bf16.msra.mxu0 0
        %608 = vmatprep.subr.bf16.mxu0 0
        %609 = vmatpush1.bf16.msra.mxu0 0
        %610 = vmatprep.subr.bf16.mxu0 0
        %611 = vmatpush1.bf16.msra.mxu0 0
        %612 = vmatprep.subr.bf16.mxu0 0
        %613 = vmatpush1.bf16.msra.mxu0 0
        %614 = vmatprep.subr.bf16.mxu0 0
        %615 = vmatpush1.bf16.msra.mxu0 0
        %616 = vmatprep.subr.bf16.mxu0 0
        %617 = vmatpush1.bf16.msra.mxu0 0
        %618 = vmatprep.subr.bf16.mxu0 0
        %619 = vmatpush1.bf16.msra.mxu0 0
        %620 = vmatprep.subr.bf16.mxu0 0
        %621 = vmatpush1.bf16.msra.mxu0 0
        %622 = vmatprep.subr.bf16.mxu0 0
        %623 = vmatpush1.bf16.msra.mxu0 0
        %624 = vmatprep.subr.bf16.mxu0 0
        %625 = vmatpush1.bf16.msra.mxu0 0
        %626 = vmatprep.subr.bf16.mxu0 0
        %627 = vmatpush1.bf16.msra.mxu0 0
        %628 = vmatprep.subr.bf16.mxu0 0
        %629 = vmatpush1.bf16.msra.mxu0 0
        %630 = vmatprep.subr.bf16.mxu0 0
        %631 = vmatpush1.bf16.msra.mxu0 0
        %632 = vmatprep.mubr.bf16.mxu0 0
        %633 = vmatmul.mubr.bf16.gmra.mrb[0].mxu0 %v422
        %v634 = vpop.f32.mrb[0].mxu0
        %v635 = vadd.f32 0.0, %v634
        %v636 = vpop.f32.mrb[0].mxu0
        %v637 = vpop.f32.mrb[0].mxu0
        %v638 = vpop.f32.mrb[0].mxu0
        %639 = vdwg.mxu0
        %v641 = vsel %vm424, %v415, 0
        %643 = vmatprep.subr.bf16.mxu0 0
        %644 = vmatpush1.bf16.msra.mxu0 %v641
        %645 = vmatprep.subr.bf16.mxu0 0
        %646 = vmatpush1.bf16.msra.mxu0 0
        %647 = vmatprep.subr.bf16.mxu0 0
        %648 = vmatpush1.bf16.msra.mxu0 0
        %649 = vmatprep.subr.bf16.mxu0 0
        %650 = vmatpush1.bf16.msra.mxu0 0
        %651 = vmatprep.subr.bf16.mxu0 0
        %652 = vmatpush1.bf16.msra.mxu0 0
        %653 = vmatprep.subr.bf16.mxu0 0
        %654 = vmatpush1.bf16.msra.mxu0 0
        %655 = vmatprep.subr.bf16.mxu0 0
        %656 = vmatpush1.bf16.msra.mxu0 0
        %657 = vmatprep.subr.bf16.mxu0 0
        %658 = vmatpush1.bf16.msra.mxu0 0
        %659 = vmatprep.subr.bf16.mxu0 0
        %660 = vmatpush1.bf16.msra.mxu0 0
        %661 = vmatprep.subr.bf16.mxu0 0
        %662 = vmatpush1.bf16.msra.mxu0 0
        %663 = vmatprep.subr.bf16.mxu0 0
        %664 = vmatpush1.bf16.msra.mxu0 0
        %665 = vmatprep.subr.bf16.mxu0 0
        %666 = vmatpush1.bf16.msra.mxu0 0
        %667 = vmatprep.subr.bf16.mxu0 0
        %668 = vmatpush1.bf16.msra.mxu0 0
        %669 = vmatprep.subr.bf16.mxu0 0
        %670 = vmatpush1.bf16.msra.mxu0 0
        %671 = vmatprep.subr.bf16.mxu0 0
        %672 = vmatpush1.bf16.msra.mxu0 0
        %673 = vmatprep.subr.bf16.mxu0 0
        %674 = vmatpush1.bf16.msra.mxu0 0
        %675 = vmatprep.mubr.bf16.mxu0 0
        %676 = vmatmul.mubr.bf16.gmra.mrb[0].mxu0 %v422
        %v677 = vpop.f32.mrb[0].mxu0
        %v678 = vadd.f32 0.0, %v677
        %v679 = vpop.f32.mrb[0].mxu0
        %v680 = vpop.f32.mrb[0].mxu0
        %v681 = vpop.f32.mrb[0].mxu0
        %682 = vdwg.mxu0
        %v684 = vsel %vm424, %v416, 0
        %686 = vmatprep.subr.bf16.mxu0 0
        %687 = vmatpush1.bf16.msra.mxu0 %v684
        %688 = vmatprep.subr.bf16.mxu0 0
        %689 = vmatpush1.bf16.msra.mxu0 0
        %690 = vmatprep.subr.bf16.mxu0 0
        %691 = vmatpush1.bf16.msra.mxu0 0
        %692 = vmatprep.subr.bf16.mxu0 0
        %693 = vmatpush1.bf16.msra.mxu0 0
        %694 = vmatprep.subr.bf16.mxu0 0
        %695 = vmatpush1.bf16.msra.mxu0 0
        %696 = vmatprep.subr.bf16.mxu0 0
        %697 = vmatpush1.bf16.msra.mxu0 0
        %698 = vmatprep.subr.bf16.mxu0 0
        %699 = vmatpush1.bf16.msra.mxu0 0
        %700 = vmatprep.subr.bf16.mxu0 0
        %701 = vmatpush1.bf16.msra.mxu0 0
        %702 = vmatprep.subr.bf16.mxu0 0
        %703 = vmatpush1.bf16.msra.mxu0 0
        %704 = vmatprep.subr.bf16.mxu0 0
        %705 = vmatpush1.bf16.msra.mxu0 0
        %706 = vmatprep.subr.bf16.mxu0 0
        %707 = vmatpush1.bf16.msra.mxu0 0
        %708 = vmatprep.subr.bf16.mxu0 0
        %709 = vmatpush1.bf16.msra.mxu0 0
        %710 = vmatprep.subr.bf16.mxu0 0
        %711 = vmatpush1.bf16.msra.mxu0 0
        %712 = vmatprep.subr.bf16.mxu0 0
        %713 = vmatpush1.bf16.msra.mxu0 0
        %714 = vmatprep.subr.bf16.mxu0 0
        %715 = vmatpush1.bf16.msra.mxu0 0
        %716 = vmatprep.subr.bf16.mxu0 0
        %717 = vmatpush1.bf16.msra.mxu0 0
        %718 = vmatprep.mubr.bf16.mxu0 0
        %719 = vmatmul.mubr.bf16.gmra.mrb[0].mxu0 %v422
        %v720 = vpop.f32.mrb[0].mxu0
        %v721 = vadd.f32 0.0, %v720
        %v722 = vpop.f32.mrb[0].mxu0
        %v723 = vpop.f32.mrb[0].mxu0
        %v724 = vpop.f32.mrb[0].mxu0
        %725 = vdwg.mxu0
        %v727 = vsel %vm424, %v417, 0
        %729 = vmatprep.subr.bf16.mxu0 0
        %730 = vmatpush1.bf16.msra.mxu0 %v727
        %731 = vmatprep.subr.bf16.mxu0 0
        %732 = vmatpush1.bf16.msra.mxu0 0
        %733 = vmatprep.subr.bf16.mxu0 0
        %734 = vmatpush1.bf16.msra.mxu0 0
        %735 = vmatprep.subr.bf16.mxu0 0
        %736 = vmatpush1.bf16.msra.mxu0 0
        %737 = vmatprep.subr.bf16.mxu0 0
        %738 = vmatpush1.bf16.msra.mxu0 0
        %739 = vmatprep.subr.bf16.mxu0 0
        %740 = vmatpush1.bf16.msra.mxu0 0
        %741 = vmatprep.subr.bf16.mxu0 0
        %742 = vmatpush1.bf16.msra.mxu0 0
        %743 = vmatprep.subr.bf16.mxu0 0
        %744 = vmatpush1.bf16.msra.mxu0 0
        %745 = vmatprep.subr.bf16.mxu0 0
        %746 = vmatpush1.bf16.msra.mxu0 0
        %747 = vmatprep.subr.bf16.mxu0 0
        %748 = vmatpush1.bf16.msra.mxu0 0
        %749 = vmatprep.subr.bf16.mxu0 0
        %750 = vmatpush1.bf16.msra.mxu0 0
        %751 = vmatprep.subr.bf16.mxu0 0
        %752 = vmatpush1.bf16.msra.mxu0 0
        %753 = vmatprep.subr.bf16.mxu0 0
        %754 = vmatpush1.bf16.msra.mxu0 0
        %755 = vmatprep.subr.bf16.mxu0 0
        %756 = vmatpush1.bf16.msra.mxu0 0
        %757 = vmatprep.subr.bf16.mxu0 0
        %758 = vmatpush1.bf16.msra.mxu0 0
        %759 = vmatprep.subr.bf16.mxu0 0
        %760 = vmatpush1.bf16.msra.mxu0 0
        %761 = vmatprep.mubr.bf16.mxu0 0
        %762 = vmatmul.mubr.bf16.gmra.mrb[0].mxu0 %v422
        %v763 = vpop.f32.mrb[0].mxu0
        %v764 = vadd.f32 0.0, %v763
        %v765 = vpop.f32.mrb[0].mxu0
        %v766 = vpop.f32.mrb[0].mxu0
        %v767 = vpop.f32.mrb[0].mxu0
        %768 = vdwg.mxu0
        %v770 = vsel %vm420, %v256, 0
        %v773 = vsel %vm424, %v248, 0
        %775 = vmatprep.subr.bf16.mxu0 0
        %776 = vmatpush1.bf16.msra.mxu0 %v773
        %777 = vmatprep.subr.bf16.mxu0 0
        %778 = vmatpush1.bf16.msra.mxu0 0
        %779 = vmatprep.subr.bf16.mxu0 0
        %780 = vmatpush1.bf16.msra.mxu0 0
        %781 = vmatprep.subr.bf16.mxu0 0
        %782 = vmatpush1.bf16.msra.mxu0 0
        %783 = vmatprep.subr.bf16.mxu0 0
        %784 = vmatpush1.bf16.msra.mxu0 0
        %785 = vmatprep.subr.bf16.mxu0 0
        %786 = vmatpush1.bf16.msra.mxu0 0
        %787 = vmatprep.subr.bf16.mxu0 0
        %788 = vmatpush1.bf16.msra.mxu0 0
        %789 = vmatprep.subr.bf16.mxu0 0
        %790 = vmatpush1.bf16.msra.mxu0 0
        %791 = vmatprep.subr.bf16.mxu0 0
        %792 = vmatpush1.bf16.msra.mxu0 0
        %793 = vmatprep.subr.bf16.mxu0 0
        %794 = vmatpush1.bf16.msra.mxu0 0
        %795 = vmatprep.subr.bf16.mxu0 0
        %796 = vmatpush1.bf16.msra.mxu0 0
        %797 = vmatprep.subr.bf16.mxu0 0
        %798 = vmatpush1.bf16.msra.mxu0 0
        %799 = vmatprep.subr.bf16.mxu0 0
        %800 = vmatpush1.bf16.msra.mxu0 0
        %801 = vmatprep.subr.bf16.mxu0 0
        %802 = vmatpush1.bf16.msra.mxu0 0
        %803 = vmatprep.subr.bf16.mxu0 0
        %804 = vmatpush1.bf16.msra.mxu0 0
        %805 = vmatprep.subr.bf16.mxu0 0
        %806 = vmatpush1.bf16.msra.mxu0 0
        %807 = vmatprep.mubr.bf16.mxu0 0
        %808 = vmatmul.mubr.bf16.gmra.mrb[0].mxu0 %v770
        %v809 = vpop.f32.mrb[0].mxu0
        %v810 = vadd.f32 %v463, %v809
        %v811 = vpop.f32.mrb[0].mxu0
        %v812 = vpop.f32.mrb[0].mxu0
        %v813 = vpop.f32.mrb[0].mxu0
        %814 = vdwg.mxu0
        %v816 = vsel %vm424, %v249, 0
        %818 = vmatprep.subr.bf16.mxu0 0
        %819 = vmatpush1.bf16.msra.mxu0 %v816
        %820 = vmatprep.subr.bf16.mxu0 0
        %821 = vmatpush1.bf16.msra.mxu0 0
        %822 = vmatprep.subr.bf16.mxu0 0
        %823 = vmatpush1.bf16.msra.mxu0 0
        %824 = vmatprep.subr.bf16.mxu0 0
        %825 = vmatpush1.bf16.msra.mxu0 0
        %826 = vmatprep.subr.bf16.mxu0 0
        %827 = vmatpush1.bf16.msra.mxu0 0
        %828 = vmatprep.subr.bf16.mxu0 0
        %829 = vmatpush1.bf16.msra.mxu0 0
        %830 = vmatprep.subr.bf16.mxu0 0
        %831 = vmatpush1.bf16.msra.mxu0 0
        %832 = vmatprep.subr.bf16.mxu0 0
        %833 = vmatpush1.bf16.msra.mxu0 0
        %834 = vmatprep.subr.bf16.mxu0 0
        %835 = vmatpush1.bf16.msra.mxu0 0
        %836 = vmatprep.subr.bf16.mxu0 0
        %837 = vmatpush1.bf16.msra.mxu0 0
        %838 = vmatprep.subr.bf16.mxu0 0
        %839 = vmatpush1.bf16.msra.mxu0 0
        %840 = vmatprep.subr.bf16.mxu0 0
        %841 = vmatpush1.bf16.msra.mxu0 0
        %842 = vmatprep.subr.bf16.mxu0 0
        %843 = vmatpush1.bf16.msra.mxu0 0
        %844 = vmatprep.subr.bf16.mxu0 0
        %845 = vmatpush1.bf16.msra.mxu0 0
        %846 = vmatprep.subr.bf16.mxu0 0
        %847 = vmatpush1.bf16.msra.mxu0 0
        %848 = vmatprep.subr.bf16.mxu0 0
        %849 = vmatpush1.bf16.msra.mxu0 0
        %850 = vmatprep.mubr.bf16.mxu0 0
        %851 = vmatmul.mubr.bf16.gmra.mrb[0].mxu0 %v770
        %v852 = vpop.f32.mrb[0].mxu0
        %v853 = vadd.f32 %v506, %v852
        %v854 = vpop.f32.mrb[0].mxu0
        %v855 = vpop.f32.mrb[0].mxu0
        %v856 = vpop.f32.mrb[0].mxu0
        %857 = vdwg.mxu0
        %v859 = vsel %vm424, %v250, 0
        %861 = vmatprep.subr.bf16.mxu0 0
        %862 = vmatpush1.bf16.msra.mxu0 %v859
        %863 = vmatprep.subr.bf16.mxu0 0
        %864 = vmatpush1.bf16.msra.mxu0 0
        %865 = vmatprep.subr.bf16.mxu0 0
        %866 = vmatpush1.bf16.msra.mxu0 0
        %867 = vmatprep.subr.bf16.mxu0 0
        %868 = vmatpush1.bf16.msra.mxu0 0
        %869 = vmatprep.subr.bf16.mxu0 0
        %870 = vmatpush1.bf16.msra.mxu0 0
        %871 = vmatprep.subr.bf16.mxu0 0
        %872 = vmatpush1.bf16.msra.mxu0 0
        %873 = vmatprep.subr.bf16.mxu0 0
        %874 = vmatpush1.bf16.msra.mxu0 0
        %875 = vmatprep.subr.bf16.mxu0 0
        %876 = vmatpush1.bf16.msra.mxu0 0
        %877 = vmatprep.subr.bf16.mxu0 0
        %878 = vmatpush1.bf16.msra.mxu0 0
        %879 = vmatprep.subr.bf16.mxu0 0
        %880 = vmatpush1.bf16.msra.mxu0 0
        %881 = vmatprep.subr.bf16.mxu0 0
        %882 = vmatpush1.bf16.msra.mxu0 0
        %883 = vmatprep.subr.bf16.mxu0 0
        %884 = vmatpush1.bf16.msra.mxu0 0
        %885 = vmatprep.subr.bf16.mxu0 0
        %886 = vmatpush1.bf16.msra.mxu0 0
        %887 = vmatprep.subr.bf16.mxu0 0
        %888 = vmatpush1.bf16.msra.mxu0 0
        %889 = vmatprep.subr.bf16.mxu0 0
        %890 = vmatpush1.bf16.msra.mxu0 0
        %891 = vmatprep.subr.bf16.mxu0 0
        %892 = vmatpush1.bf16.msra.mxu0 0
        %893 = vmatprep.mubr.bf16.mxu0 0
        %894 = vmatmul.mubr.bf16.gmra.mrb[0].mxu0 %v770
        %v895 = vpop.f32.mrb[0].mxu0
        %v896 = vadd.f32 %v549, %v895
        %v897 = vpop.f32.mrb[0].mxu0
        %v898 = vpop.f32.mrb[0].mxu0
        %v899 = vpop.f32.mrb[0].mxu0
        %900 = vdwg.mxu0
        %v902 = vsel %vm424, %v251, 0
        %904 = vmatprep.subr.bf16.mxu0 0
        %905 = vmatpush1.bf16.msra.mxu0 %v902
        %906 = vmatprep.subr.bf16.mxu0 0
        %907 = vmatpush1.bf16.msra.mxu0 0
        %908 = vmatprep.subr.bf16.mxu0 0
        %909 = vmatpush1.bf16.msra.mxu0 0
        %910 = vmatprep.subr.bf16.mxu0 0
        %911 = vmatpush1.bf16.msra.mxu0 0
        %912 = vmatprep.subr.bf16.mxu0 0
        %913 = vmatpush1.bf16.msra.mxu0 0
        %914 = vmatprep.subr.bf16.mxu0 0
        %915 = vmatpush1.bf16.msra.mxu0 0
        %916 = vmatprep.subr.bf16.mxu0 0
        %917 = vmatpush1.bf16.msra.mxu0 0
        %918 = vmatprep.subr.bf16.mxu0 0
        %919 = vmatpush1.bf16.msra.mxu0 0
        %920 = vmatprep.subr.bf16.mxu0 0
        %921 = vmatpush1.bf16.msra.mxu0 0
        %922 = vmatprep.subr.bf16.mxu0 0
        %923 = vmatpush1.bf16.msra.mxu0 0
        %924 = vmatprep.subr.bf16.mxu0 0
        %925 = vmatpush1.bf16.msra.mxu0 0
        %926 = vmatprep.subr.bf16.mxu0 0
        %927 = vmatpush1.bf16.msra.mxu0 0
        %928 = vmatprep.subr.bf16.mxu0 0
        %929 = vmatpush1.bf16.msra.mxu0 0
        %930 = vmatprep.subr.bf16.mxu0 0
        %931 = vmatpush1.bf16.msra.mxu0 0
        %932 = vmatprep.subr.bf16.mxu0 0
        %933 = vmatpush1.bf16.msra.mxu0 0
        %934 = vmatprep.subr.bf16.mxu0 0
        %935 = vmatpush1.bf16.msra.mxu0 0
        %936 = vmatprep.mubr.bf16.mxu0 0
        %937 = vmatmul.mubr.bf16.gmra.mrb[0].mxu0 %v770
        %v938 = vpop.f32.mrb[0].mxu0
        %v939 = vadd.f32 %v592, %v938
        %v940 = vpop.f32.mrb[0].mxu0
        %v941 = vpop.f32.mrb[0].mxu0
        %v942 = vpop.f32.mrb[0].mxu0
        %943 = vdwg.mxu0
        %v945 = vsel %vm424, %v252, 0
        %947 = vmatprep.subr.bf16.mxu0 0
        %948 = vmatpush1.bf16.msra.mxu0 %v945
        %949 = vmatprep.subr.bf16.mxu0 0
        %950 = vmatpush1.bf16.msra.mxu0 0
        %951 = vmatprep.subr.bf16.mxu0 0
        %952 = vmatpush1.bf16.msra.mxu0 0
        %953 = vmatprep.subr.bf16.mxu0 0
        %954 = vmatpush1.bf16.msra.mxu0 0
        %955 = vmatprep.subr.bf16.mxu0 0
        %956 = vmatpush1.bf16.msra.mxu0 0
        %957 = vmatprep.subr.bf16.mxu0 0
        %958 = vmatpush1.bf16.msra.mxu0 0
        %959 = vmatprep.subr.bf16.mxu0 0
        %960 = vmatpush1.bf16.msra.mxu0 0
        %961 = vmatprep.subr.bf16.mxu0 0
        %962 = vmatpush1.bf16.msra.mxu0 0
        %963 = vmatprep.subr.bf16.mxu0 0
        %964 = vmatpush1.bf16.msra.mxu0 0
        %965 = vmatprep.subr.bf16.mxu0 0
        %966 = vmatpush1.bf16.msra.mxu0 0
        %967 = vmatprep.subr.bf16.mxu0 0
        %968 = vmatpush1.bf16.msra.mxu0 0
        %969 = vmatprep.subr.bf16.mxu0 0
        %970 = vmatpush1.bf16.msra.mxu0 0
        %971 = vmatprep.subr.bf16.mxu0 0
        %972 = vmatpush1.bf16.msra.mxu0 0
        %973 = vmatprep.subr.bf16.mxu0 0
        %974 = vmatpush1.bf16.msra.mxu0 0
        %975 = vmatprep.subr.bf16.mxu0 0
        %976 = vmatpush1.bf16.msra.mxu0 0
        %977 = vmatprep.subr.bf16.mxu0 0
        %978 = vmatpush1.bf16.msra.mxu0 0
        %979 = vmatprep.mubr.bf16.mxu0 0
        %980 = vmatmul.mubr.bf16.gmra.mrb[0].mxu0 %v770
        %v981 = vpop.f32.mrb[0].mxu0
        %v982 = vadd.f32 %v635, %v981
        %v983 = vpop.f32.mrb[0].mxu0
        %v984 = vpop.f32.mrb[0].mxu0
        %v985 = vpop.f32.mrb[0].mxu0
        %986 = vdwg.mxu0
        %v988 = vsel %vm424, %v253, 0
        %990 = vmatprep.subr.bf16.mxu0 0
        %991 = vmatpush1.bf16.msra.mxu0 %v988
        %992 = vmatprep.subr.bf16.mxu0 0
        %993 = vmatpush1.bf16.msra.mxu0 0
        %994 = vmatprep.subr.bf16.mxu0 0
        %995 = vmatpush1.bf16.msra.mxu0 0
        %996 = vmatprep.subr.bf16.mxu0 0
        %997 = vmatpush1.bf16.msra.mxu0 0
        %998 = vmatprep.subr.bf16.mxu0 0
        %999 = vmatpush1.bf16.msra.mxu0 0
        %1000 = vmatprep.subr.bf16.mxu0 0
        %1001 = vmatpush1.bf16.msra.mxu0 0
        %1002 = vmatprep.subr.bf16.mxu0 0
        %1003 = vmatpush1.bf16.msra.mxu0 0
        %1004 = vmatprep.subr.bf16.mxu0 0
        %1005 = vmatpush1.bf16.msra.mxu0 0
        %1006 = vmatprep.subr.bf16.mxu0 0
        %1007 = vmatpush1.bf16.msra.mxu0 0
        %1008 = vmatprep.subr.bf16.mxu0 0
        %1009 = vmatpush1.bf16.msra.mxu0 0
        %1010 = vmatprep.subr.bf16.mxu0 0
        %1011 = vmatpush1.bf16.msra.mxu0 0
        %1012 = vmatprep.subr.bf16.mxu0 0
        %1013 = vmatpush1.bf16.msra.mxu0 0
        %1014 = vmatprep.subr.bf16.mxu0 0
        %1015 = vmatpush1.bf16.msra.mxu0 0
        %1016 = vmatprep.subr.bf16.mxu0 0
        %1017 = vmatpush1.bf16.msra.mxu0 0
        %1018 = vmatprep.subr.bf16.mxu0 0
        %1019 = vmatpush1.bf16.msra.mxu0 0
        %1020 = vmatprep.subr.bf16.mxu0 0
        %1021 = vmatpush1.bf16.msra.mxu0 0
        %1022 = vmatprep.mubr.bf16.mxu0 0
        %1023 = vmatmul.mubr.bf16.gmra.mrb[0].mxu0 %v770
        %v1024 = vpop.f32.mrb[0].mxu0
        %v1025 = vadd.f32 %v678, %v1024
        %v1026 = vpop.f32.mrb[0].mxu0
        %v1027 = vpop.f32.mrb[0].mxu0
        %v1028 = vpop.f32.mrb[0].mxu0
        %1029 = vdwg.mxu0
        %v1031 = vsel %vm424, %v254, 0
        %1033 = vmatprep.subr.bf16.mxu0 0
        %1034 = vmatpush1.bf16.msra.mxu0 %v1031
        %1035 = vmatprep.subr.bf16.mxu0 0
        %1036 = vmatpush1.bf16.msra.mxu0 0
        %1037 = vmatprep.subr.bf16.mxu0 0
        %1038 = vmatpush1.bf16.msra.mxu0 0
        %1039 = vmatprep.subr.bf16.mxu0 0
        %1040 = vmatpush1.bf16.msra.mxu0 0
        %1041 = vmatprep.subr.bf16.mxu0 0
        %1042 = vmatpush1.bf16.msra.mxu0 0
        %1043 = vmatprep.subr.bf16.mxu0 0
        %1044 = vmatpush1.bf16.msra.mxu0 0
        %1045 = vmatprep.subr.bf16.mxu0 0
        %1046 = vmatpush1.bf16.msra.mxu0 0
        %1047 = vmatprep.subr.bf16.mxu0 0
        %1048 = vmatpush1.bf16.msra.mxu0 0
        %1049 = vmatprep.subr.bf16.mxu0 0
        %1050 = vmatpush1.bf16.msra.mxu0 0
        %1051 = vmatprep.subr.bf16.mxu0 0
        %1052 = vmatpush1.bf16.msra.mxu0 0
        %1053 = vmatprep.subr.bf16.mxu0 0
        %1054 = vmatpush1.bf16.msra.mxu0 0
        %1055 = vmatprep.subr.bf16.mxu0 0
        %1056 = vmatpush1.bf16.msra.mxu0 0
        %1057 = vmatprep.subr.bf16.mxu0 0
        %1058 = vmatpush1.bf16.msra.mxu0 0
        %1059 = vmatprep.subr.bf16.mxu0 0
        %1060 = vmatpush1.bf16.msra.mxu0 0
        %1061 = vmatprep.subr.bf16.mxu0 0
        %1062 = vmatpush1.bf16.msra.mxu0 0
        %1063 = vmatprep.subr.bf16.mxu0 0
        %1064 = vmatpush1.bf16.msra.mxu0 0
        %1065 = vmatprep.mubr.bf16.mxu0 0
        %1066 = vmatmul.mubr.bf16.gmra.mrb[0].mxu0 %v770
        %v1067 = vpop.f32.mrb[0].mxu0
        %v1068 = vadd.f32 %v721, %v1067
        %v1069 = vpop.f32.mrb[0].mxu0
        %v1070 = vpop.f32.mrb[0].mxu0
        %v1071 = vpop.f32.mrb[0].mxu0
        %1072 = vdwg.mxu0
        %v1074 = vsel %vm424, %v255, 0
        %1076 = vmatprep.subr.bf16.mxu0 0
        %1077 = vmatpush1.bf16.msra.mxu0 %v1074
        %1078 = vmatprep.subr.bf16.mxu0 0
        %1079 = vmatpush1.bf16.msra.mxu0 0
        %1080 = vmatprep.subr.bf16.mxu0 0
        %1081 = vmatpush1.bf16.msra.mxu0 0
        %1082 = vmatprep.subr.bf16.mxu0 0
        %1083 = vmatpush1.bf16.msra.mxu0 0
        %1084 = vmatprep.subr.bf16.mxu0 0
        %1085 = vmatpush1.bf16.msra.mxu0 0
        %1086 = vmatprep.subr.bf16.mxu0 0
        %1087 = vmatpush1.bf16.msra.mxu0 0
        %1088 = vmatprep.subr.bf16.mxu0 0
        %1089 = vmatpush1.bf16.msra.mxu0 0
        %1090 = vmatprep.subr.bf16.mxu0 0
        %1091 = vmatpush1.bf16.msra.mxu0 0
        %1092 = vmatprep.subr.bf16.mxu0 0
        %1093 = vmatpush1.bf16.msra.mxu0 0
        %1094 = vmatprep.subr.bf16.mxu0 0
        %1095 = vmatpush1.bf16.msra.mxu0 0
        %1096 = vmatprep.subr.bf16.mxu0 0
        %1097 = vmatpush1.bf16.msra.mxu0 0
        %1098 = vmatprep.subr.bf16.mxu0 0
        %1099 = vmatpush1.bf16.msra.mxu0 0
        %1100 = vmatprep.subr.bf16.mxu0 0
        %1101 = vmatpush1.bf16.msra.mxu0 0
        %1102 = vmatprep.subr.bf16.mxu0 0
        %1103 = vmatpush1.bf16.msra.mxu0 0
        %1104 = vmatprep.subr.bf16.mxu0 0
        %1105 = vmatpush1.bf16.msra.mxu0 0
        %1106 = vmatprep.subr.bf16.mxu0 0
        %1107 = vmatpush1.bf16.msra.mxu0 0
        %1108 = vmatprep.mubr.bf16.mxu0 0
        %1109 = vmatmul.mubr.bf16.gmra.mrb[0].mxu0 %v770
        %v1110 = vpop.f32.mrb[0].mxu0
        %v1111 = vadd.f32 %v764, %v1110
        %v1112 = vpop.f32.mrb[0].mxu0
        %v1113 = vpop.f32.mrb[0].mxu0
        %v1114 = vpop.f32.mrb[0].mxu0
        %1115 = vdwg.mxu0
        %s1116 = scalar_lea.vmem [#allocation5], 64
        %v1117 = vld [vmem:[%s1116] sm:$0xf]
        %v1118 = vld [vmem:[%s1116 + $0x4] sm:$0xf]
        %v1119 = vld [vmem:[%s1116 + $0x8] sm:$0xf]
        %v1120 = vld [vmem:[%s1116 + $0xc] sm:$0xf]
        %v1121 = vld [vmem:[%s1116 + $0x10] sm:$0xf]
        %v1122 = vld [vmem:[%s1116 + $0x14] sm:$0xf]
        %v1123 = vld [vmem:[%s1116 + $0x18] sm:$0xf]
        %v1124 = vld [vmem:[%s1116 + $0x1c] sm:$0xf]
        %v1125 = vld [vmem:[%s1116 + $0x20] sm:$0xf]
        %v1126 = vld [vmem:[%s1116 + $0x24] sm:$0xf]
        %v1127 = vld [vmem:[%s1116 + $0x28] sm:$0xf]
        %v1128 = vld [vmem:[%s1116 + $0x2c] sm:$0xf]
        %v1129 = vld [vmem:[%s1116 + $0x30] sm:$0xf]
        %v1130 = vld [vmem:[%s1116 + $0x34] sm:$0xf]
        %v1131 = vld [vmem:[%s1116 + $0x38] sm:$0xf]
        %v1132 = vld [vmem:[%s1116 + $0x3c] sm:$0xf]
        %v1149 = vunpack.c.l.b16 %v1117
        %v1150 = vunpack.c.l.b16 %v1118
        %v1151 = vunpack.c.l.b16 %v1119
        %v1152 = vunpack.c.l.b16 %v1120
        %v1153 = vunpack.c.l.b16 %v1121
        %v1154 = vunpack.c.l.b16 %v1122
        %v1155 = vunpack.c.l.b16 %v1123
        %v1156 = vunpack.c.l.b16 %v1124
        %v1157 = vunpack.c.l.b16 %v1125
        %v1158 = vunpack.c.l.b16 %v1126
        %v1159 = vunpack.c.l.b16 %v1127
        %v1160 = vunpack.c.l.b16 %v1128
        %v1161 = vunpack.c.l.b16 %v1129
        %v1162 = vunpack.c.l.b16 %v1130
        %v1163 = vunpack.c.l.b16 %v1131
        %v1164 = vunpack.c.l.b16 %v1132
        %v1165 = vpack.c.b16 %v1150, %v1149
        %v1166 = vpack.c.b16 %v1152, %v1151
        %v1167 = vpack.c.b16 %v1154, %v1153
        %v1168 = vpack.c.b16 %v1156, %v1155
        %v1169 = vpack.c.b16 %v1158, %v1157
        %v1170 = vpack.c.b16 %v1160, %v1159
        %v1171 = vpack.c.b16 %v1162, %v1161
        %v1172 = vpack.c.b16 %v1164, %v1163
        %1181 = vmatprep.subr.bf16.mxu0 0
        %1182 = vmatpush1.bf16.msra.mxu0 %v1165
        %1183 = vmatprep.subr.bf16.mxu0 0
        %1184 = vmatpush1.bf16.msra.mxu0 %v1166
        %1185 = vmatprep.subr.bf16.mxu0 0
        %1186 = vmatpush1.bf16.msra.mxu0 %v1167
        %1187 = vmatprep.subr.bf16.mxu0 0
        %1188 = vmatpush1.bf16.msra.mxu0 %v1168
        %1189 = vmatprep.subr.bf16.mxu0 0
        %1190 = vmatpush1.bf16.msra.mxu0 %v1169
        %1191 = vmatprep.subr.bf16.mxu0 0
        %1192 = vmatpush1.bf16.msra.mxu0 %v1170
        %1193 = vmatprep.subr.bf16.mxu0 0
        %1194 = vmatpush1.bf16.msra.mxu0 %v1171
        %1195 = vmatprep.subr.bf16.mxu0 0
        %1196 = vmatpush1.bf16.msra.mxu0 %v1172
        %1197 = vmatprep.subr.bf16.mxu0 0
        %1198 = vmatpush1.bf16.msra.mxu0 0
        %1199 = vmatprep.subr.bf16.mxu0 0
        %1200 = vmatpush1.bf16.msra.mxu0 0
        %1201 = vmatprep.subr.bf16.mxu0 0
        %1202 = vmatpush1.bf16.msra.mxu0 0
        %1203 = vmatprep.subr.bf16.mxu0 0
        %1204 = vmatpush1.bf16.msra.mxu0 0
        %1205 = vmatprep.subr.bf16.mxu0 0
        %1206 = vmatpush1.bf16.msra.mxu0 0
        %1207 = vmatprep.subr.bf16.mxu0 0
        %1208 = vmatpush1.bf16.msra.mxu0 0
        %1209 = vmatprep.subr.bf16.mxu0 0
        %1210 = vmatpush1.bf16.msra.mxu0 0
        %1211 = vmatprep.subr.bf16.mxu0 0
        %1212 = vmatpush1.bf16.msra.mxu0 0
        %1213 = vmatprep.mubr.bf16.mxu0 0
        %1214 = vmatmul.mubr.bf16.gmra.mrb[0].mxu0 %v289
        %v1215 = vpop.f32.mrb[0].mxu0
        %v1216 = vadd.f32 0.0, %v1215
        %v1217 = vpop.f32.mrb[0].mxu0
        %v1218 = vpop.f32.mrb[0].mxu0
        %v1219 = vadd.f32 0.0, %v1218
        %v1220 = vpop.f32.mrb[0].mxu0
        %1221 = vmatprep.mubr.bf16.mxu0 0
        %1222 = vmatmul.mubr.bf16.gmra.mrb[0].mxu0 %v290
        %v1223 = vpop.f32.mrb[0].mxu0
        %v1224 = vadd.f32 0.0, %v1223
        %v1225 = vpop.f32.mrb[0].mxu0
        %v1226 = vpop.f32.mrb[0].mxu0
        %v1227 = vadd.f32 0.0, %v1226
        %v1228 = vpop.f32.mrb[0].mxu0
        %1229 = vmatprep.mubr.bf16.mxu0 0
        %1230 = vmatmul.mubr.bf16.gmra.mrb[0].mxu0 %v291
        %v1231 = vpop.f32.mrb[0].mxu0
        %v1232 = vadd.f32 0.0, %v1231
        %v1233 = vpop.f32.mrb[0].mxu0
        %v1234 = vpop.f32.mrb[0].mxu0
        %v1235 = vadd.f32 0.0, %v1234
        %v1236 = vpop.f32.mrb[0].mxu0
        %1237 = vmatprep.mubr.bf16.mxu0 0
        %1238 = vmatmul.mubr.bf16.gmra.mrb[0].mxu0 %v292
        %v1239 = vpop.f32.mrb[0].mxu0
        %v1240 = vadd.f32 0.0, %v1239
        %v1241 = vpop.f32.mrb[0].mxu0
        %v1242 = vpop.f32.mrb[0].mxu0
        %v1243 = vadd.f32 0.0, %v1242
        %v1244 = vpop.f32.mrb[0].mxu0
        %1245 = vdwg.mxu0
        %v1246 = vpack.c.bf16 %v1216, %v1216
        %v1247 = vpack.c.bf16 %v1219, %v1219
        %v1248 = vpack.c.bf16 %v1224, %v1224
        %v1249 = vpack.c.bf16 %v1227, %v1227
        %v1250 = vpack.c.bf16 %v1232, %v1232
        %v1251 = vpack.c.bf16 %v1235, %v1235
        %v1252 = vpack.c.bf16 %v1240, %v1240
        %v1253 = vpack.c.bf16 %v1243, %v1243
        %s1254 = scalar_lea.vmem [#allocation7], 8
        %v1255 = vld [vmem:[%s1254] sm:$0xf]
        %v1257 = vsel %vm420, %v1255, 0
        %v1260 = vsel %vm424, %v1246, 0
        %1262 = vmatprep.subr.bf16.mxu0 0
        %1263 = vmatpush1.bf16.msra.mxu0 %v1260
        %1264 = vmatprep.subr.bf16.mxu0 0
        %1265 = vmatpush1.bf16.msra.mxu0 0
        %1266 = vmatprep.subr.bf16.mxu0 0
        %1267 = vmatpush1.bf16.msra.mxu0 0
        %1268 = vmatprep.subr.bf16.mxu0 0
        %1269 = vmatpush1.bf16.msra.mxu0 0
        %1270 = vmatprep.subr.bf16.mxu0 0
        %1271 = vmatpush1.bf16.msra.mxu0 0
        %1272 = vmatprep.subr.bf16.mxu0 0
        %1273 = vmatpush1.bf16.msra.mxu0 0
        %1274 = vmatprep.subr.bf16.mxu0 0
        %1275 = vmatpush1.bf16.msra.mxu0 0
        %1276 = vmatprep.subr.bf16.mxu0 0
        %1277 = vmatpush1.bf16.msra.mxu0 0
        %1278 = vmatprep.subr.bf16.mxu0 0
        %1279 = vmatpush1.bf16.msra.mxu0 0
        %1280 = vmatprep.subr.bf16.mxu0 0
        %1281 = vmatpush1.bf16.msra.mxu0 0
        %1282 = vmatprep.subr.bf16.mxu0 0
        %1283 = vmatpush1.bf16.msra.mxu0 0
        %1284 = vmatprep.subr.bf16.mxu0 0
        %1285 = vmatpush1.bf16.msra.mxu0 0
        %1286 = vmatprep.subr.bf16.mxu0 0
        %1287 = vmatpush1.bf16.msra.mxu0 0
        %1288 = vmatprep.subr.bf16.mxu0 0
        %1289 = vmatpush1.bf16.msra.mxu0 0
        %1290 = vmatprep.subr.bf16.mxu0 0
        %1291 = vmatpush1.bf16.msra.mxu0 0
        %1292 = vmatprep.subr.bf16.mxu0 0
        %1293 = vmatpush1.bf16.msra.mxu0 0
        %1294 = vmatprep.mubr.bf16.mxu0 0
        %1295 = vmatmul.mubr.bf16.gmra.mrb[0].mxu0 %v1257
        %v1296 = vpop.f32.mrb[0].mxu0
        %v1297 = vadd.f32 0.0, %v1296
        %v1298 = vpop.f32.mrb[0].mxu0
        %v1299 = vpop.f32.mrb[0].mxu0
        %v1300 = vpop.f32.mrb[0].mxu0
        %1301 = vdwg.mxu0
        %v1303 = vsel %vm424, %v1247, 0
        %1305 = vmatprep.subr.bf16.mxu0 0
        %1306 = vmatpush1.bf16.msra.mxu0 %v1303
        %1307 = vmatprep.subr.bf16.mxu0 0
        %1308 = vmatpush1.bf16.msra.mxu0 0
        %1309 = vmatprep.subr.bf16.mxu0 0
        %1310 = vmatpush1.bf16.msra.mxu0 0
        %1311 = vmatprep.subr.bf16.mxu0 0
        %1312 = vmatpush1.bf16.msra.mxu0 0
        %1313 = vmatprep.subr.bf16.mxu0 0
        %1314 = vmatpush1.bf16.msra.mxu0 0
        %1315 = vmatprep.subr.bf16.mxu0 0
        %1316 = vmatpush1.bf16.msra.mxu0 0
        %1317 = vmatprep.subr.bf16.mxu0 0
        %1318 = vmatpush1.bf16.msra.mxu0 0
        %1319 = vmatprep.subr.bf16.mxu0 0
        %1320 = vmatpush1.bf16.msra.mxu0 0
        %1321 = vmatprep.subr.bf16.mxu0 0
        %1322 = vmatpush1.bf16.msra.mxu0 0
        %1323 = vmatprep.subr.bf16.mxu0 0
        %1324 = vmatpush1.bf16.msra.mxu0 0
        %1325 = vmatprep.subr.bf16.mxu0 0
        %1326 = vmatpush1.bf16.msra.mxu0 0
        %1327 = vmatprep.subr.bf16.mxu0 0
        %1328 = vmatpush1.bf16.msra.mxu0 0
        %1329 = vmatprep.subr.bf16.mxu0 0
        %1330 = vmatpush1.bf16.msra.mxu0 0
        %1331 = vmatprep.subr.bf16.mxu0 0
        %1332 = vmatpush1.bf16.msra.mxu0 0
        %1333 = vmatprep.subr.bf16.mxu0 0
        %1334 = vmatpush1.bf16.msra.mxu0 0
        %1335 = vmatprep.subr.bf16.mxu0 0
        %1336 = vmatpush1.bf16.msra.mxu0 0
        %1337 = vmatprep.mubr.bf16.mxu0 0
        %1338 = vmatmul.mubr.bf16.gmra.mrb[0].mxu0 %v1257
        %v1339 = vpop.f32.mrb[0].mxu0
        %v1340 = vadd.f32 0.0, %v1339
        %v1341 = vpop.f32.mrb[0].mxu0
        %v1342 = vpop.f32.mrb[0].mxu0
        %v1343 = vpop.f32.mrb[0].mxu0
        %1344 = vdwg.mxu0
        %v1346 = vsel %vm424, %v1248, 0
        %1348 = vmatprep.subr.bf16.mxu0 0
        %1349 = vmatpush1.bf16.msra.mxu0 %v1346
        %1350 = vmatprep.subr.bf16.mxu0 0
        %1351 = vmatpush1.bf16.msra.mxu0 0
        %1352 = vmatprep.subr.bf16.mxu0 0
        %1353 = vmatpush1.bf16.msra.mxu0 0
        %1354 = vmatprep.subr.bf16.mxu0 0
        %1355 = vmatpush1.bf16.msra.mxu0 0
        %1356 = vmatprep.subr.bf16.mxu0 0
        %1357 = vmatpush1.bf16.msra.mxu0 0
        %1358 = vmatprep.subr.bf16.mxu0 0
        %1359 = vmatpush1.bf16.msra.mxu0 0
        %1360 = vmatprep.subr.bf16.mxu0 0
        %1361 = vmatpush1.bf16.msra.mxu0 0
        %1362 = vmatprep.subr.bf16.mxu0 0
        %1363 = vmatpush1.bf16.msra.mxu0 0
        %1364 = vmatprep.subr.bf16.mxu0 0
        %1365 = vmatpush1.bf16.msra.mxu0 0
        %1366 = vmatprep.subr.bf16.mxu0 0
        %1367 = vmatpush1.bf16.msra.mxu0 0
        %1368 = vmatprep.subr.bf16.mxu0 0
        %1369 = vmatpush1.bf16.msra.mxu0 0
        %1370 = vmatprep.subr.bf16.mxu0 0
        %1371 = vmatpush1.bf16.msra.mxu0 0
        %1372 = vmatprep.subr.bf16.mxu0 0
        %1373 = vmatpush1.bf16.msra.mxu0 0
        %1374 = vmatprep.subr.bf16.mxu0 0
        %1375 = vmatpush1.bf16.msra.mxu0 0
        %1376 = vmatprep.subr.bf16.mxu0 0
        %1377 = vmatpush1.bf16.msra.mxu0 0
        %1378 = vmatprep.subr.bf16.mxu0 0
        %1379 = vmatpush1.bf16.msra.mxu0 0
        %1380 = vmatprep.mubr.bf16.mxu0 0
        %1381 = vmatmul.mubr.bf16.gmra.mrb[0].mxu0 %v1257
        %v1382 = vpop.f32.mrb[0].mxu0
        %v1383 = vadd.f32 0.0, %v1382
        %v1384 = vpop.f32.mrb[0].mxu0
        %v1385 = vpop.f32.mrb[0].mxu0
        %v1386 = vpop.f32.mrb[0].mxu0
        %1387 = vdwg.mxu0
        %v1389 = vsel %vm424, %v1249, 0
        %1391 = vmatprep.subr.bf16.mxu0 0
        %1392 = vmatpush1.bf16.msra.mxu0 %v1389
        %1393 = vmatprep.subr.bf16.mxu0 0
        %1394 = vmatpush1.bf16.msra.mxu0 0
        %1395 = vmatprep.subr.bf16.mxu0 0
        %1396 = vmatpush1.bf16.msra.mxu0 0
        %1397 = vmatprep.subr.bf16.mxu0 0
        %1398 = vmatpush1.bf16.msra.mxu0 0
        %1399 = vmatprep.subr.bf16.mxu0 0
        %1400 = vmatpush1.bf16.msra.mxu0 0
        %1401 = vmatprep.subr.bf16.mxu0 0
        %1402 = vmatpush1.bf16.msra.mxu0 0
        %1403 = vmatprep.subr.bf16.mxu0 0
        %1404 = vmatpush1.bf16.msra.mxu0 0
        %1405 = vmatprep.subr.bf16.mxu0 0
        %1406 = vmatpush1.bf16.msra.mxu0 0
        %1407 = vmatprep.subr.bf16.mxu0 0
        %1408 = vmatpush1.bf16.msra.mxu0 0
        %1409 = vmatprep.subr.bf16.mxu0 0
        %1410 = vmatpush1.bf16.msra.mxu0 0
        %1411 = vmatprep.subr.bf16.mxu0 0
        %1412 = vmatpush1.bf16.msra.mxu0 0
        %1413 = vmatprep.subr.bf16.mxu0 0
        %1414 = vmatpush1.bf16.msra.mxu0 0
        %1415 = vmatprep.subr.bf16.mxu0 0
        %1416 = vmatpush1.bf16.msra.mxu0 0
        %1417 = vmatprep.subr.bf16.mxu0 0
        %1418 = vmatpush1.bf16.msra.mxu0 0
        %1419 = vmatprep.subr.bf16.mxu0 0
        %1420 = vmatpush1.bf16.msra.mxu0 0
        %1421 = vmatprep.subr.bf16.mxu0 0
        %1422 = vmatpush1.bf16.msra.mxu0 0
        %1423 = vmatprep.mubr.bf16.mxu0 0
        %1424 = vmatmul.mubr.bf16.gmra.mrb[0].mxu0 %v1257
        %v1425 = vpop.f32.mrb[0].mxu0
        %v1426 = vadd.f32 0.0, %v1425
        %v1427 = vpop.f32.mrb[0].mxu0
        %v1428 = vpop.f32.mrb[0].mxu0
        %v1429 = vpop.f32.mrb[0].mxu0
        %1430 = vdwg.mxu0
        %v1432 = vsel %vm424, %v1250, 0
        %1434 = vmatprep.subr.bf16.mxu0 0
        %1435 = vmatpush1.bf16.msra.mxu0 %v1432
        %1436 = vmatprep.subr.bf16.mxu0 0
        %1437 = vmatpush1.bf16.msra.mxu0 0
        %1438 = vmatprep.subr.bf16.mxu0 0
        %1439 = vmatpush1.bf16.msra.mxu0 0
        %1440 = vmatprep.subr.bf16.mxu0 0
        %1441 = vmatpush1.bf16.msra.mxu0 0
        %1442 = vmatprep.subr.bf16.mxu0 0
        %1443 = vmatpush1.bf16.msra.mxu0 0
        %1444 = vmatprep.subr.bf16.mxu0 0
        %1445 = vmatpush1.bf16.msra.mxu0 0
        %1446 = vmatprep.subr.bf16.mxu0 0
        %1447 = vmatpush1.bf16.msra.mxu0 0
        %1448 = vmatprep.subr.bf16.mxu0 0
        %1449 = vmatpush1.bf16.msra.mxu0 0
        %1450 = vmatprep.subr.bf16.mxu0 0
        %1451 = vmatpush1.bf16.msra.mxu0 0
        %1452 = vmatprep.subr.bf16.mxu0 0
        %1453 = vmatpush1.bf16.msra.mxu0 0
        %1454 = vmatprep.subr.bf16.mxu0 0
        %1455 = vmatpush1.bf16.msra.mxu0 0
        %1456 = vmatprep.subr.bf16.mxu0 0
        %1457 = vmatpush1.bf16.msra.mxu0 0
        %1458 = vmatprep.subr.bf16.mxu0 0
        %1459 = vmatpush1.bf16.msra.mxu0 0
        %1460 = vmatprep.subr.bf16.mxu0 0
        %1461 = vmatpush1.bf16.msra.mxu0 0
        %1462 = vmatprep.subr.bf16.mxu0 0
        %1463 = vmatpush1.bf16.msra.mxu0 0
        %1464 = vmatprep.subr.bf16.mxu0 0
        %1465 = vmatpush1.bf16.msra.mxu0 0
        %1466 = vmatprep.mubr.bf16.mxu0 0
        %1467 = vmatmul.mubr.bf16.gmra.mrb[0].mxu0 %v1257
        %v1468 = vpop.f32.mrb[0].mxu0
        %v1469 = vadd.f32 0.0, %v1468
        %v1470 = vpop.f32.mrb[0].mxu0
        %v1471 = vpop.f32.mrb[0].mxu0
        %v1472 = vpop.f32.mrb[0].mxu0
        %1473 = vdwg.mxu0
        %v1475 = vsel %vm424, %v1251, 0
        %1477 = vmatprep.subr.bf16.mxu0 0
        %1478 = vmatpush1.bf16.msra.mxu0 %v1475
        %1479 = vmatprep.subr.bf16.mxu0 0
        %1480 = vmatpush1.bf16.msra.mxu0 0
        %1481 = vmatprep.subr.bf16.mxu0 0
        %1482 = vmatpush1.bf16.msra.mxu0 0
        %1483 = vmatprep.subr.bf16.mxu0 0
        %1484 = vmatpush1.bf16.msra.mxu0 0
        %1485 = vmatprep.subr.bf16.mxu0 0
        %1486 = vmatpush1.bf16.msra.mxu0 0
        %1487 = vmatprep.subr.bf16.mxu0 0
        %1488 = vmatpush1.bf16.msra.mxu0 0
        %1489 = vmatprep.subr.bf16.mxu0 0
        %1490 = vmatpush1.bf16.msra.mxu0 0
        %1491 = vmatprep.subr.bf16.mxu0 0
        %1492 = vmatpush1.bf16.msra.mxu0 0
        %1493 = vmatprep.subr.bf16.mxu0 0
        %1494 = vmatpush1.bf16.msra.mxu0 0
        %1495 = vmatprep.subr.bf16.mxu0 0
        %1496 = vmatpush1.bf16.msra.mxu0 0
        %1497 = vmatprep.subr.bf16.mxu0 0
        %1498 = vmatpush1.bf16.msra.mxu0 0
        %1499 = vmatprep.subr.bf16.mxu0 0
        %1500 = vmatpush1.bf16.msra.mxu0 0
        %1501 = vmatprep.subr.bf16.mxu0 0
        %1502 = vmatpush1.bf16.msra.mxu0 0
        %1503 = vmatprep.subr.bf16.mxu0 0
        %1504 = vmatpush1.bf16.msra.mxu0 0
        %1505 = vmatprep.subr.bf16.mxu0 0
        %1506 = vmatpush1.bf16.msra.mxu0 0
        %1507 = vmatprep.subr.bf16.mxu0 0
        %1508 = vmatpush1.bf16.msra.mxu0 0
        %1509 = vmatprep.mubr.bf16.mxu0 0
        %1510 = vmatmul.mubr.bf16.gmra.mrb[0].mxu0 %v1257
        %v1511 = vpop.f32.mrb[0].mxu0
        %v1512 = vadd.f32 0.0, %v1511
        %v1513 = vpop.f32.mrb[0].mxu0
        %v1514 = vpop.f32.mrb[0].mxu0
        %v1515 = vpop.f32.mrb[0].mxu0
        %1516 = vdwg.mxu0
        %v1518 = vsel %vm424, %v1252, 0
        %1520 = vmatprep.subr.bf16.mxu0 0
        %1521 = vmatpush1.bf16.msra.mxu0 %v1518
        %1522 = vmatprep.subr.bf16.mxu0 0
        %1523 = vmatpush1.bf16.msra.mxu0 0
        %1524 = vmatprep.subr.bf16.mxu0 0
        %1525 = vmatpush1.bf16.msra.mxu0 0
        %1526 = vmatprep.subr.bf16.mxu0 0
        %1527 = vmatpush1.bf16.msra.mxu0 0
        %1528 = vmatprep.subr.bf16.mxu0 0
        %1529 = vmatpush1.bf16.msra.mxu0 0
        %1530 = vmatprep.subr.bf16.mxu0 0
        %1531 = vmatpush1.bf16.msra.mxu0 0
        %1532 = vmatprep.subr.bf16.mxu0 0
        %1533 = vmatpush1.bf16.msra.mxu0 0
        %1534 = vmatprep.subr.bf16.mxu0 0
        %1535 = vmatpush1.bf16.msra.mxu0 0
        %1536 = vmatprep.subr.bf16.mxu0 0
        %1537 = vmatpush1.bf16.msra.mxu0 0
        %1538 = vmatprep.subr.bf16.mxu0 0
        %1539 = vmatpush1.bf16.msra.mxu0 0
        %1540 = vmatprep.subr.bf16.mxu0 0
        %1541 = vmatpush1.bf16.msra.mxu0 0
        %1542 = vmatprep.subr.bf16.mxu0 0
        %1543 = vmatpush1.bf16.msra.mxu0 0
        %1544 = vmatprep.subr.bf16.mxu0 0
        %1545 = vmatpush1.bf16.msra.mxu0 0
        %1546 = vmatprep.subr.bf16.mxu0 0
        %1547 = vmatpush1.bf16.msra.mxu0 0
        %1548 = vmatprep.subr.bf16.mxu0 0
        %1549 = vmatpush1.bf16.msra.mxu0 0
        %1550 = vmatprep.subr.bf16.mxu0 0
        %1551 = vmatpush1.bf16.msra.mxu0 0
        %1552 = vmatprep.mubr.bf16.mxu0 0
        %1553 = vmatmul.mubr.bf16.gmra.mrb[0].mxu0 %v1257
        %v1554 = vpop.f32.mrb[0].mxu0
        %v1555 = vadd.f32 0.0, %v1554
        %v1556 = vpop.f32.mrb[0].mxu0
        %v1557 = vpop.f32.mrb[0].mxu0
        %v1558 = vpop.f32.mrb[0].mxu0
        %1559 = vdwg.mxu0
        %v1561 = vsel %vm424, %v1253, 0
        %1563 = vmatprep.subr.bf16.mxu0 0
        %1564 = vmatpush1.bf16.msra.mxu0 %v1561
        %1565 = vmatprep.subr.bf16.mxu0 0
        %1566 = vmatpush1.bf16.msra.mxu0 0
        %1567 = vmatprep.subr.bf16.mxu0 0
        %1568 = vmatpush1.bf16.msra.mxu0 0
        %1569 = vmatprep.subr.bf16.mxu0 0
        %1570 = vmatpush1.bf16.msra.mxu0 0
        %1571 = vmatprep.subr.bf16.mxu0 0
        %1572 = vmatpush1.bf16.msra.mxu0 0
        %1573 = vmatprep.subr.bf16.mxu0 0
        %1574 = vmatpush1.bf16.msra.mxu0 0
        %1575 = vmatprep.subr.bf16.mxu0 0
        %1576 = vmatpush1.bf16.msra.mxu0 0
        %1577 = vmatprep.subr.bf16.mxu0 0
        %1578 = vmatpush1.bf16.msra.mxu0 0
        %1579 = vmatprep.subr.bf16.mxu0 0
        %1580 = vmatpush1.bf16.msra.mxu0 0
        %1581 = vmatprep.subr.bf16.mxu0 0
        %1582 = vmatpush1.bf16.msra.mxu0 0
        %1583 = vmatprep.subr.bf16.mxu0 0
        %1584 = vmatpush1.bf16.msra.mxu0 0
        %1585 = vmatprep.subr.bf16.mxu0 0
        %1586 = vmatpush1.bf16.msra.mxu0 0
        %1587 = vmatprep.subr.bf16.mxu0 0
        %1588 = vmatpush1.bf16.msra.mxu0 0
        %1589 = vmatprep.subr.bf16.mxu0 0
        %1590 = vmatpush1.bf16.msra.mxu0 0
        %1591 = vmatprep.subr.bf16.mxu0 0
        %1592 = vmatpush1.bf16.msra.mxu0 0
        %1593 = vmatprep.subr.bf16.mxu0 0
        %1594 = vmatpush1.bf16.msra.mxu0 0
        %1595 = vmatprep.mubr.bf16.mxu0 0
        %1596 = vmatmul.mubr.bf16.gmra.mrb[0].mxu0 %v1257
        %v1597 = vpop.f32.mrb[0].mxu0
        %v1598 = vadd.f32 0.0, %v1597
        %v1599 = vpop.f32.mrb[0].mxu0
        %v1600 = vpop.f32.mrb[0].mxu0
        %v1601 = vpop.f32.mrb[0].mxu0
        %1602 = vdwg.mxu0
        %v1603 = vadd.f32 %v810, %v1297
        %v1604 = vadd.f32 %v853, %v1340
        %v1605 = vadd.f32 %v896, %v1383
        %v1606 = vadd.f32 %v939, %v1426
        %v1607 = vadd.f32 %v982, %v1469
        %v1608 = vadd.f32 %v1025, %v1512
        %v1609 = vadd.f32 %v1068, %v1555
        %v1610 = vadd.f32 %v1111, %v1598
        %s1611 = scalar_lea.vmem [#allocation5], 128
        %v1612 = vld [vmem:[%s1611] sm:$0xf]
        %v1613 = vld [vmem:[%s1611 + $0x4] sm:$0xf]
        %v1614 = vld [vmem:[%s1611 + $0x8] sm:$0xf]
        %v1615 = vld [vmem:[%s1611 + $0xc] sm:$0xf]
        %v1616 = vld [vmem:[%s1611 + $0x10] sm:$0xf]
        %v1617 = vld [vmem:[%s1611 + $0x14] sm:$0xf]
        %v1618 = vld [vmem:[%s1611 + $0x18] sm:$0xf]
        %v1619 = vld [vmem:[%s1611 + $0x1c] sm:$0xf]
        %v1620 = vld [vmem:[%s1611 + $0x20] sm:$0xf]
        %v1621 = vld [vmem:[%s1611 + $0x24] sm:$0xf]
        %v1622 = vld [vmem:[%s1611 + $0x28] sm:$0xf]
        %v1623 = vld [vmem:[%s1611 + $0x2c] sm:$0xf]
        %v1624 = vld [vmem:[%s1611 + $0x30] sm:$0xf]
        %v1625 = vld [vmem:[%s1611 + $0x34] sm:$0xf]
        %v1626 = vld [vmem:[%s1611 + $0x38] sm:$0xf]
        %v1627 = vld [vmem:[%s1611 + $0x3c] sm:$0xf]
        %v1644 = vunpack.c.l.b16 %v1612
        %v1645 = vunpack.c.l.b16 %v1613
        %v1646 = vunpack.c.l.b16 %v1614
        %v1647 = vunpack.c.l.b16 %v1615
        %v1648 = vunpack.c.l.b16 %v1616
        %v1649 = vunpack.c.l.b16 %v1617
        %v1650 = vunpack.c.l.b16 %v1618
        %v1651 = vunpack.c.l.b16 %v1619
        %v1652 = vunpack.c.l.b16 %v1620
        %v1653 = vunpack.c.l.b16 %v1621
        %v1654 = vunpack.c.l.b16 %v1622
        %v1655 = vunpack.c.l.b16 %v1623
        %v1656 = vunpack.c.l.b16 %v1624
        %v1657 = vunpack.c.l.b16 %v1625
        %v1658 = vunpack.c.l.b16 %v1626
        %v1659 = vunpack.c.l.b16 %v1627
        %v1660 = vpack.c.b16 %v1645, %v1644
        %v1661 = vpack.c.b16 %v1647, %v1646
        %v1662 = vpack.c.b16 %v1649, %v1648
        %v1663 = vpack.c.b16 %v1651, %v1650
        %v1664 = vpack.c.b16 %v1653, %v1652
        %v1665 = vpack.c.b16 %v1655, %v1654
        %v1666 = vpack.c.b16 %v1657, %v1656
        %v1667 = vpack.c.b16 %v1659, %v1658
        %1676 = vmatprep.subr.bf16.mxu0 0
        %1677 = vmatpush1.bf16.msra.mxu0 %v1660
        %1678 = vmatprep.subr.bf16.mxu0 0
        %1679 = vmatpush1.bf16.msra.mxu0 %v1661
        %1680 = vmatprep.subr.bf16.mxu0 0
        %1681 = vmatpush1.bf16.msra.mxu0 %v1662
        %1682 = vmatprep.subr.bf16.mxu0 0
        %1683 = vmatpush1.bf16.msra.mxu0 %v1663
        %1684 = vmatprep.subr.bf16.mxu0 0
        %1685 = vmatpush1.bf16.msra.mxu0 %v1664
        %1686 = vmatprep.subr.bf16.mxu0 0
        %1687 = vmatpush1.bf16.msra.mxu0 %v1665
        %1688 = vmatprep.subr.bf16.mxu0 0
        %1689 = vmatpush1.bf16.msra.mxu0 %v1666
        %1690 = vmatprep.subr.bf16.mxu0 0
        %1691 = vmatpush1.bf16.msra.mxu0 %v1667
        %1692 = vmatprep.subr.bf16.mxu0 0
        %1693 = vmatpush1.bf16.msra.mxu0 0
        %1694 = vmatprep.subr.bf16.mxu0 0
        %1695 = vmatpush1.bf16.msra.mxu0 0
        %1696 = vmatprep.subr.bf16.mxu0 0
        %1697 = vmatpush1.bf16.msra.mxu0 0
        %1698 = vmatprep.subr.bf16.mxu0 0
        %1699 = vmatpush1.bf16.msra.mxu0 0
        %1700 = vmatprep.subr.bf16.mxu0 0
        %1701 = vmatpush1.bf16.msra.mxu0 0
        %1702 = vmatprep.subr.bf16.mxu0 0
        %1703 = vmatpush1.bf16.msra.mxu0 0
        %1704 = vmatprep.subr.bf16.mxu0 0
        %1705 = vmatpush1.bf16.msra.mxu0 0
        %1706 = vmatprep.subr.bf16.mxu0 0
        %1707 = vmatpush1.bf16.msra.mxu0 0
        %1708 = vmatprep.mubr.bf16.mxu0 0
        %1709 = vmatmul.mubr.bf16.gmra.mrb[0].mxu0 %v289
        %v1710 = vpop.f32.mrb[0].mxu0
        %v1711 = vadd.f32 0.0, %v1710
        %v1712 = vpop.f32.mrb[0].mxu0
        %v1713 = vpop.f32.mrb[0].mxu0
        %v1714 = vadd.f32 0.0, %v1713
        %v1715 = vpop.f32.mrb[0].mxu0
        %1716 = vmatprep.mubr.bf16.mxu0 0
        %1717 = vmatmul.mubr.bf16.gmra.mrb[0].mxu0 %v290
        %v1718 = vpop.f32.mrb[0].mxu0
        %v1719 = vadd.f32 0.0, %v1718
        %v1720 = vpop.f32.mrb[0].mxu0
        %v1721 = vpop.f32.mrb[0].mxu0
        %v1722 = vadd.f32 0.0, %v1721
        %v1723 = vpop.f32.mrb[0].mxu0
        %1724 = vmatprep.mubr.bf16.mxu0 0
        %1725 = vmatmul.mubr.bf16.gmra.mrb[0].mxu0 %v291
        %v1726 = vpop.f32.mrb[0].mxu0
        %v1727 = vadd.f32 0.0, %v1726
        %v1728 = vpop.f32.mrb[0].mxu0
        %v1729 = vpop.f32.mrb[0].mxu0
        %v1730 = vadd.f32 0.0, %v1729
        %v1731 = vpop.f32.mrb[0].mxu0
        %1732 = vmatprep.mubr.bf16.mxu0 0
        %1733 = vmatmul.mubr.bf16.gmra.mrb[0].mxu0 %v292
        %v1734 = vpop.f32.mrb[0].mxu0
        %v1735 = vadd.f32 0.0, %v1734
        %v1736 = vpop.f32.mrb[0].mxu0
        %v1737 = vpop.f32.mrb[0].mxu0
        %v1738 = vadd.f32 0.0, %v1737
        %v1739 = vpop.f32.mrb[0].mxu0
        %1740 = vdwg.mxu0
        %v1741 = vpack.c.bf16 %v1711, %v1711
        %v1742 = vpack.c.bf16 %v1714, %v1714
        %v1743 = vpack.c.bf16 %v1719, %v1719
        %v1744 = vpack.c.bf16 %v1722, %v1722
        %v1745 = vpack.c.bf16 %v1727, %v1727
        %v1746 = vpack.c.bf16 %v1730, %v1730
        %v1747 = vpack.c.bf16 %v1735, %v1735
        %v1748 = vpack.c.bf16 %v1738, %v1738
        %s1749 = scalar_lea.vmem [#allocation7], 12
        %v1750 = vld [vmem:[%s1749] sm:$0xf]
        %v1752 = vsel %vm420, %v1750, 0
        %v1755 = vsel %vm424, %v1741, 0
        %1757 = vmatprep.subr.bf16.mxu0 0
        %1758 = vmatpush1.bf16.msra.mxu0 %v1755
        %1759 = vmatprep.subr.bf16.mxu0 0
        %1760 = vmatpush1.bf16.msra.mxu0 0
        %1761 = vmatprep.subr.bf16.mxu0 0
        %1762 = vmatpush1.bf16.msra.mxu0 0
        %1763 = vmatprep.subr.bf16.mxu0 0
        %1764 = vmatpush1.bf16.msra.mxu0 0
        %1765 = vmatprep.subr.bf16.mxu0 0
        %1766 = vmatpush1.bf16.msra.mxu0 0
        %1767 = vmatprep.subr.bf16.mxu0 0
        %1768 = vmatpush1.bf16.msra.mxu0 0
        %1769 = vmatprep.subr.bf16.mxu0 0
        %1770 = vmatpush1.bf16.msra.mxu0 0
        %1771 = vmatprep.subr.bf16.mxu0 0
        %1772 = vmatpush1.bf16.msra.mxu0 0
        %1773 = vmatprep.subr.bf16.mxu0 0
        %1774 = vmatpush1.bf16.msra.mxu0 0
        %1775 = vmatprep.subr.bf16.mxu0 0
        %1776 = vmatpush1.bf16.msra.mxu0 0
        %1777 = vmatprep.subr.bf16.mxu0 0
        %1778 = vmatpush1.bf16.msra.mxu0 0
        %1779 = vmatprep.subr.bf16.mxu0 0
        %1780 = vmatpush1.bf16.msra.mxu0 0
        %1781 = vmatprep.subr.bf16.mxu0 0
        %1782 = vmatpush1.bf16.msra.mxu0 0
        %1783 = vmatprep.subr.bf16.mxu0 0
        %1784 = vmatpush1.bf16.msra.mxu0 0
        %1785 = vmatprep.subr.bf16.mxu0 0
        %1786 = vmatpush1.bf16.msra.mxu0 0
        %1787 = vmatprep.subr.bf16.mxu0 0
        %1788 = vmatpush1.bf16.msra.mxu0 0
        %1789 = vmatprep.mubr.bf16.mxu0 0
        %1790 = vmatmul.mubr.bf16.gmra.mrb[0].mxu0 %v1752
        %v1791 = vpop.f32.mrb[0].mxu0
        %v1792 = vadd.f32 0.0, %v1791
        %v1793 = vpop.f32.mrb[0].mxu0
        %v1794 = vpop.f32.mrb[0].mxu0
        %v1795 = vpop.f32.mrb[0].mxu0
        %1796 = vdwg.mxu0
        %v1798 = vsel %vm424, %v1742, 0
        %1800 = vmatprep.subr.bf16.mxu0 0
        %1801 = vmatpush1.bf16.msra.mxu0 %v1798
        %1802 = vmatprep.subr.bf16.mxu0 0
        %1803 = vmatpush1.bf16.msra.mxu0 0
        %1804 = vmatprep.subr.bf16.mxu0 0
        %1805 = vmatpush1.bf16.msra.mxu0 0
        %1806 = vmatprep.subr.bf16.mxu0 0
        %1807 = vmatpush1.bf16.msra.mxu0 0
        %1808 = vmatprep.subr.bf16.mxu0 0
        %1809 = vmatpush1.bf16.msra.mxu0 0
        %1810 = vmatprep.subr.bf16.mxu0 0
        %1811 = vmatpush1.bf16.msra.mxu0 0
        %1812 = vmatprep.subr.bf16.mxu0 0
        %1813 = vmatpush1.bf16.msra.mxu0 0
        %1814 = vmatprep.subr.bf16.mxu0 0
        %1815 = vmatpush1.bf16.msra.mxu0 0
        %1816 = vmatprep.subr.bf16.mxu0 0
        %1817 = vmatpush1.bf16.msra.mxu0 0
        %1818 = vmatprep.subr.bf16.mxu0 0
        %1819 = vmatpush1.bf16.msra.mxu0 0
        %1820 = vmatprep.subr.bf16.mxu0 0
        %1821 = vmatpush1.bf16.msra.mxu0 0
        %1822 = vmatprep.subr.bf16.mxu0 0
        %1823 = vmatpush1.bf16.msra.mxu0 0
        %1824 = vmatprep.subr.bf16.mxu0 0
        %1825 = vmatpush1.bf16.msra.mxu0 0
        %1826 = vmatprep.subr.bf16.mxu0 0
        %1827 = vmatpush1.bf16.msra.mxu0 0
        %1828 = vmatprep.subr.bf16.mxu0 0
        %1829 = vmatpush1.bf16.msra.mxu0 0
        %1830 = vmatprep.subr.bf16.mxu0 0
        %1831 = vmatpush1.bf16.msra.mxu0 0
        %1832 = vmatprep.mubr.bf16.mxu0 0
        %1833 = vmatmul.mubr.bf16.gmra.mrb[0].mxu0 %v1752
        %v1834 = vpop.f32.mrb[0].mxu0
        %v1835 = vadd.f32 0.0, %v1834
        %v1836 = vpop.f32.mrb[0].mxu0
        %v1837 = vpop.f32.mrb[0].mxu0
        %v1838 = vpop.f32.mrb[0].mxu0
        %1839 = vdwg.mxu0
        %v1841 = vsel %vm424, %v1743, 0
        %1843 = vmatprep.subr.bf16.mxu0 0
        %1844 = vmatpush1.bf16.msra.mxu0 %v1841
        %1845 = vmatprep.subr.bf16.mxu0 0
        %1846 = vmatpush1.bf16.msra.mxu0 0
        %1847 = vmatprep.subr.bf16.mxu0 0
        %1848 = vmatpush1.bf16.msra.mxu0 0
        %1849 = vmatprep.subr.bf16.mxu0 0
        %1850 = vmatpush1.bf16.msra.mxu0 0
        %1851 = vmatprep.subr.bf16.mxu0 0
        %1852 = vmatpush1.bf16.msra.mxu0 0
        %1853 = vmatprep.subr.bf16.mxu0 0
        %1854 = vmatpush1.bf16.msra.mxu0 0
        %1855 = vmatprep.subr.bf16.mxu0 0
        %1856 = vmatpush1.bf16.msra.mxu0 0
        %1857 = vmatprep.subr.bf16.mxu0 0
        %1858 = vmatpush1.bf16.msra.mxu0 0
        %1859 = vmatprep.subr.bf16.mxu0 0
        %1860 = vmatpush1.bf16.msra.mxu0 0
        %1861 = vmatprep.subr.bf16.mxu0 0
        %1862 = vmatpush1.bf16.msra.mxu0 0
        %1863 = vmatprep.subr.bf16.mxu0 0
        %1864 = vmatpush1.bf16.msra.mxu0 0
        %1865 = vmatprep.subr.bf16.mxu0 0
        %1866 = vmatpush1.bf16.msra.mxu0 0
        %1867 = vmatprep.subr.bf16.mxu0 0
        %1868 = vmatpush1.bf16.msra.mxu0 0
        %1869 = vmatprep.subr.bf16.mxu0 0
        %1870 = vmatpush1.bf16.msra.mxu0 0
        %1871 = vmatprep.subr.bf16.mxu0 0
        %1872 = vmatpush1.bf16.msra.mxu0 0
        %1873 = vmatprep.subr.bf16.mxu0 0
        %1874 = vmatpush1.bf16.msra.mxu0 0
        %1875 = vmatprep.mubr.bf16.mxu0 0
        %1876 = vmatmul.mubr.bf16.gmra.mrb[0].mxu0 %v1752
        %v1877 = vpop.f32.mrb[0].mxu0
        %v1878 = vadd.f32 0.0, %v1877
        %v1879 = vpop.f32.mrb[0].mxu0
        %v1880 = vpop.f32.mrb[0].mxu0
        %v1881 = vpop.f32.mrb[0].mxu0
        %1882 = vdwg.mxu0
        %v1884 = vsel %vm424, %v1744, 0
        %1886 = vmatprep.subr.bf16.mxu0 0
        %1887 = vmatpush1.bf16.msra.mxu0 %v1884
        %1888 = vmatprep.subr.bf16.mxu0 0
        %1889 = vmatpush1.bf16.msra.mxu0 0
        %1890 = vmatprep.subr.bf16.mxu0 0
        %1891 = vmatpush1.bf16.msra.mxu0 0
        %1892 = vmatprep.subr.bf16.mxu0 0
        %1893 = vmatpush1.bf16.msra.mxu0 0
        %1894 = vmatprep.subr.bf16.mxu0 0
        %1895 = vmatpush1.bf16.msra.mxu0 0
        %1896 = vmatprep.subr.bf16.mxu0 0
        %1897 = vmatpush1.bf16.msra.mxu0 0
        %1898 = vmatprep.subr.bf16.mxu0 0
        %1899 = vmatpush1.bf16.msra.mxu0 0
        %1900 = vmatprep.subr.bf16.mxu0 0
        %1901 = vmatpush1.bf16.msra.mxu0 0
        %1902 = vmatprep.subr.bf16.mxu0 0
        %1903 = vmatpush1.bf16.msra.mxu0 0
        %1904 = vmatprep.subr.bf16.mxu0 0
        %1905 = vmatpush1.bf16.msra.mxu0 0
        %1906 = vmatprep.subr.bf16.mxu0 0
        %1907 = vmatpush1.bf16.msra.mxu0 0
        %1908 = vmatprep.subr.bf16.mxu0 0
        %1909 = vmatpush1.bf16.msra.mxu0 0
        %1910 = vmatprep.subr.bf16.mxu0 0
        %1911 = vmatpush1.bf16.msra.mxu0 0
        %1912 = vmatprep.subr.bf16.mxu0 0
        %1913 = vmatpush1.bf16.msra.mxu0 0
        %1914 = vmatprep.subr.bf16.mxu0 0
        %1915 = vmatpush1.bf16.msra.mxu0 0
        %1916 = vmatprep.subr.bf16.mxu0 0
        %1917 = vmatpush1.bf16.msra.mxu0 0
        %1918 = vmatprep.mubr.bf16.mxu0 0
        %1919 = vmatmul.mubr.bf16.gmra.mrb[0].mxu0 %v1752
        %v1920 = vpop.f32.mrb[0].mxu0
        %v1921 = vadd.f32 0.0, %v1920
        %v1922 = vpop.f32.mrb[0].mxu0
        %v1923 = vpop.f32.mrb[0].mxu0
        %v1924 = vpop.f32.mrb[0].mxu0
        %1925 = vdwg.mxu0
        %v1927 = vsel %vm424, %v1745, 0
        %1929 = vmatprep.subr.bf16.mxu0 0
        %1930 = vmatpush1.bf16.msra.mxu0 %v1927
        %1931 = vmatprep.subr.bf16.mxu0 0
        %1932 = vmatpush1.bf16.msra.mxu0 0
        %1933 = vmatprep.subr.bf16.mxu0 0
        %1934 = vmatpush1.bf16.msra.mxu0 0
        %1935 = vmatprep.subr.bf16.mxu0 0
        %1936 = vmatpush1.bf16.msra.mxu0 0
        %1937 = vmatprep.subr.bf16.mxu0 0
        %1938 = vmatpush1.bf16.msra.mxu0 0
        %1939 = vmatprep.subr.bf16.mxu0 0
        %1940 = vmatpush1.bf16.msra.mxu0 0
        %1941 = vmatprep.subr.bf16.mxu0 0
        %1942 = vmatpush1.bf16.msra.mxu0 0
        %1943 = vmatprep.subr.bf16.mxu0 0
        %1944 = vmatpush1.bf16.msra.mxu0 0
        %1945 = vmatprep.subr.bf16.mxu0 0
        %1946 = vmatpush1.bf16.msra.mxu0 0
        %1947 = vmatprep.subr.bf16.mxu0 0
        %1948 = vmatpush1.bf16.msra.mxu0 0
        %1949 = vmatprep.subr.bf16.mxu0 0
        %1950 = vmatpush1.bf16.msra.mxu0 0
        %1951 = vmatprep.subr.bf16.mxu0 0
        %1952 = vmatpush1.bf16.msra.mxu0 0
        %1953 = vmatprep.subr.bf16.mxu0 0
        %1954 = vmatpush1.bf16.msra.mxu0 0
        %1955 = vmatprep.subr.bf16.mxu0 0
        %1956 = vmatpush1.bf16.msra.mxu0 0
        %1957 = vmatprep.subr.bf16.mxu0 0
        %1958 = vmatpush1.bf16.msra.mxu0 0
        %1959 = vmatprep.subr.bf16.mxu0 0
        %1960 = vmatpush1.bf16.msra.mxu0 0
        %1961 = vmatprep.mubr.bf16.mxu0 0
        %1962 = vmatmul.mubr.bf16.gmra.mrb[0].mxu0 %v1752
        %v1963 = vpop.f32.mrb[0].mxu0
        %v1964 = vadd.f32 0.0, %v1963
        %v1965 = vpop.f32.mrb[0].mxu0
        %v1966 = vpop.f32.mrb[0].mxu0
        %v1967 = vpop.f32.mrb[0].mxu0
        %1968 = vdwg.mxu0
        %v1970 = vsel %vm424, %v1746, 0
        %1972 = vmatprep.subr.bf16.mxu0 0
        %1973 = vmatpush1.bf16.msra.mxu0 %v1970
        %1974 = vmatprep.subr.bf16.mxu0 0
        %1975 = vmatpush1.bf16.msra.mxu0 0
        %1976 = vmatprep.subr.bf16.mxu0 0
        %1977 = vmatpush1.bf16.msra.mxu0 0
        %1978 = vmatprep.subr.bf16.mxu0 0
        %1979 = vmatpush1.bf16.msra.mxu0 0
        %1980 = vmatprep.subr.bf16.mxu0 0
        %1981 = vmatpush1.bf16.msra.mxu0 0
        %1982 = vmatprep.subr.bf16.mxu0 0
        %1983 = vmatpush1.bf16.msra.mxu0 0
        %1984 = vmatprep.subr.bf16.mxu0 0
        %1985 = vmatpush1.bf16.msra.mxu0 0
        %1986 = vmatprep.subr.bf16.mxu0 0
        %1987 = vmatpush1.bf16.msra.mxu0 0
        %1988 = vmatprep.subr.bf16.mxu0 0
        %1989 = vmatpush1.bf16.msra.mxu0 0
        %1990 = vmatprep.subr.bf16.mxu0 0
        %1991 = vmatpush1.bf16.msra.mxu0 0
        %1992 = vmatprep.subr.bf16.mxu0 0
        %1993 = vmatpush1.bf16.msra.mxu0 0
        %1994 = vmatprep.subr.bf16.mxu0 0
        %1995 = vmatpush1.bf16.msra.mxu0 0
        %1996 = vmatprep.subr.bf16.mxu0 0
        %1997 = vmatpush1.bf16.msra.mxu0 0
        %1998 = vmatprep.subr.bf16.mxu0 0
        %1999 = vmatpush1.bf16.msra.mxu0 0
        %2000 = vmatprep.subr.bf16.mxu0 0
        %2001 = vmatpush1.bf16.msra.mxu0 0
        %2002 = vmatprep.subr.bf16.mxu0 0
        %2003 = vmatpush1.bf16.msra.mxu0 0
        %2004 = vmatprep.mubr.bf16.mxu0 0
        %2005 = vmatmul.mubr.bf16.gmra.mrb[0].mxu0 %v1752
        %v2006 = vpop.f32.mrb[0].mxu0
        %v2007 = vadd.f32 0.0, %v2006
        %v2008 = vpop.f32.mrb[0].mxu0
        %v2009 = vpop.f32.mrb[0].mxu0
        %v2010 = vpop.f32.mrb[0].mxu0
        %2011 = vdwg.mxu0
        %v2013 = vsel %vm424, %v1747, 0
        %2015 = vmatprep.subr.bf16.mxu0 0
        %2016 = vmatpush1.bf16.msra.mxu0 %v2013
        %2017 = vmatprep.subr.bf16.mxu0 0
        %2018 = vmatpush1.bf16.msra.mxu0 0
        %2019 = vmatprep.subr.bf16.mxu0 0
        %2020 = vmatpush1.bf16.msra.mxu0 0
        %2021 = vmatprep.subr.bf16.mxu0 0
        %2022 = vmatpush1.bf16.msra.mxu0 0
        %2023 = vmatprep.subr.bf16.mxu0 0
        %2024 = vmatpush1.bf16.msra.mxu0 0
        %2025 = vmatprep.subr.bf16.mxu0 0
        %2026 = vmatpush1.bf16.msra.mxu0 0
        %2027 = vmatprep.subr.bf16.mxu0 0
        %2028 = vmatpush1.bf16.msra.mxu0 0
        %2029 = vmatprep.subr.bf16.mxu0 0
        %2030 = vmatpush1.bf16.msra.mxu0 0
        %2031 = vmatprep.subr.bf16.mxu0 0
        %2032 = vmatpush1.bf16.msra.mxu0 0
        %2033 = vmatprep.subr.bf16.mxu0 0
        %2034 = vmatpush1.bf16.msra.mxu0 0
        %2035 = vmatprep.subr.bf16.mxu0 0
        %2036 = vmatpush1.bf16.msra.mxu0 0
        %2037 = vmatprep.subr.bf16.mxu0 0
        %2038 = vmatpush1.bf16.msra.mxu0 0
        %2039 = vmatprep.subr.bf16.mxu0 0
        %2040 = vmatpush1.bf16.msra.mxu0 0
        %2041 = vmatprep.subr.bf16.mxu0 0
        %2042 = vmatpush1.bf16.msra.mxu0 0
        %2043 = vmatprep.subr.bf16.mxu0 0
        %2044 = vmatpush1.bf16.msra.mxu0 0
        %2045 = vmatprep.subr.bf16.mxu0 0
        %2046 = vmatpush1.bf16.msra.mxu0 0
        %2047 = vmatprep.mubr.bf16.mxu0 0
        %2048 = vmatmul.mubr.bf16.gmra.mrb[0].mxu0 %v1752
        %v2049 = vpop.f32.mrb[0].mxu0
        %v2050 = vadd.f32 0.0, %v2049
        %v2051 = vpop.f32.mrb[0].mxu0
        %v2052 = vpop.f32.mrb[0].mxu0
        %v2053 = vpop.f32.mrb[0].mxu0
        %2054 = vdwg.mxu0
        %v2056 = vsel %vm424, %v1748, 0
        %2058 = vmatprep.subr.bf16.mxu0 0
        %2059 = vmatpush1.bf16.msra.mxu0 %v2056
        %2060 = vmatprep.subr.bf16.mxu0 0
        %2061 = vmatpush1.bf16.msra.mxu0 0
        %2062 = vmatprep.subr.bf16.mxu0 0
        %2063 = vmatpush1.bf16.msra.mxu0 0
        %2064 = vmatprep.subr.bf16.mxu0 0
        %2065 = vmatpush1.bf16.msra.mxu0 0
        %2066 = vmatprep.subr.bf16.mxu0 0
        %2067 = vmatpush1.bf16.msra.mxu0 0
        %2068 = vmatprep.subr.bf16.mxu0 0
        %2069 = vmatpush1.bf16.msra.mxu0 0
        %2070 = vmatprep.subr.bf16.mxu0 0
        %2071 = vmatpush1.bf16.msra.mxu0 0
        %2072 = vmatprep.subr.bf16.mxu0 0
        %2073 = vmatpush1.bf16.msra.mxu0 0
        %2074 = vmatprep.subr.bf16.mxu0 0
        %2075 = vmatpush1.bf16.msra.mxu0 0
        %2076 = vmatprep.subr.bf16.mxu0 0
        %2077 = vmatpush1.bf16.msra.mxu0 0
        %2078 = vmatprep.subr.bf16.mxu0 0
        %2079 = vmatpush1.bf16.msra.mxu0 0
        %2080 = vmatprep.subr.bf16.mxu0 0
        %2081 = vmatpush1.bf16.msra.mxu0 0
        %2082 = vmatprep.subr.bf16.mxu0 0
        %2083 = vmatpush1.bf16.msra.mxu0 0
        %2084 = vmatprep.subr.bf16.mxu0 0
        %2085 = vmatpush1.bf16.msra.mxu0 0
        %2086 = vmatprep.subr.bf16.mxu0 0
        %2087 = vmatpush1.bf16.msra.mxu0 0
        %2088 = vmatprep.subr.bf16.mxu0 0
        %2089 = vmatpush1.bf16.msra.mxu0 0
        %2090 = vmatprep.mubr.bf16.mxu0 0
        %2091 = vmatmul.mubr.bf16.gmra.mrb[0].mxu0 %v1752
        %v2092 = vpop.f32.mrb[0].mxu0
        %v2093 = vadd.f32 0.0, %v2092
        %v2094 = vpop.f32.mrb[0].mxu0
        %v2095 = vpop.f32.mrb[0].mxu0
        %v2096 = vpop.f32.mrb[0].mxu0
        %2097 = vdwg.mxu0
        %v2098 = vadd.f32 %v1603, %v1792
        %v2099 = vadd.f32 %v1604, %v1835
        %v2100 = vadd.f32 %v1605, %v1878
        %v2101 = vadd.f32 %v1606, %v1921
        %v2102 = vadd.f32 %v1607, %v1964
        %v2103 = vadd.f32 %v1608, %v2007
        %v2104 = vadd.f32 %v1609, %v2050
        %v2105 = vadd.f32 %v1610, %v2093
        %s2106 = scalar_lea.vmem [#allocation5], 192
        %v2107 = vld [vmem:[%s2106] sm:$0xf]
        %v2108 = vld [vmem:[%s2106 + $0x4] sm:$0xf]
        %v2109 = vld [vmem:[%s2106 + $0x8] sm:$0xf]
        %v2110 = vld [vmem:[%s2106 + $0xc] sm:$0xf]
        %v2111 = vld [vmem:[%s2106 + $0x10] sm:$0xf]
        %v2112 = vld [vmem:[%s2106 + $0x14] sm:$0xf]
        %v2113 = vld [vmem:[%s2106 + $0x18] sm:$0xf]
        %v2114 = vld [vmem:[%s2106 + $0x1c] sm:$0xf]
        %v2115 = vld [vmem:[%s2106 + $0x20] sm:$0xf]
        %v2116 = vld [vmem:[%s2106 + $0x24] sm:$0xf]
        %v2117 = vld [vmem:[%s2106 + $0x28] sm:$0xf]
        %v2118 = vld [vmem:[%s2106 + $0x2c] sm:$0xf]
        %v2119 = vld [vmem:[%s2106 + $0x30] sm:$0xf]
        %v2120 = vld [vmem:[%s2106 + $0x34] sm:$0xf]
        %v2121 = vld [vmem:[%s2106 + $0x38] sm:$0xf]
        %v2122 = vld [vmem:[%s2106 + $0x3c] sm:$0xf]
        %v2139 = vunpack.c.l.b16 %v2107
        %v2140 = vunpack.c.l.b16 %v2108
        %v2141 = vunpack.c.l.b16 %v2109
        %v2142 = vunpack.c.l.b16 %v2110
        %v2143 = vunpack.c.l.b16 %v2111
        %v2144 = vunpack.c.l.b16 %v2112
        %v2145 = vunpack.c.l.b16 %v2113
        %v2146 = vunpack.c.l.b16 %v2114
        %v2147 = vunpack.c.l.b16 %v2115
        %v2148 = vunpack.c.l.b16 %v2116
        %v2149 = vunpack.c.l.b16 %v2117
        %v2150 = vunpack.c.l.b16 %v2118
        %v2151 = vunpack.c.l.b16 %v2119
        %v2152 = vunpack.c.l.b16 %v2120
        %v2153 = vunpack.c.l.b16 %v2121
        %v2154 = vunpack.c.l.b16 %v2122
        %v2155 = vpack.c.b16 %v2140, %v2139
        %v2156 = vpack.c.b16 %v2142, %v2141
        %v2157 = vpack.c.b16 %v2144, %v2143
        %v2158 = vpack.c.b16 %v2146, %v2145
        %v2159 = vpack.c.b16 %v2148, %v2147
        %v2160 = vpack.c.b16 %v2150, %v2149
        %v2161 = vpack.c.b16 %v2152, %v2151
        %v2162 = vpack.c.b16 %v2154, %v2153
        %2171 = vmatprep.subr.bf16.mxu0 0
        %2172 = vmatpush1.bf16.msra.mxu0 %v2155
        %2173 = vmatprep.subr.bf16.mxu0 0
        %2174 = vmatpush1.bf16.msra.mxu0 %v2156
        %2175 = vmatprep.subr.bf16.mxu0 0
        %2176 = vmatpush1.bf16.msra.mxu0 %v2157
        %2177 = vmatprep.subr.bf16.mxu0 0
        %2178 = vmatpush1.bf16.msra.mxu0 %v2158
        %2179 = vmatprep.subr.bf16.mxu0 0
        %2180 = vmatpush1.bf16.msra.mxu0 %v2159
        %2181 = vmatprep.subr.bf16.mxu0 0
        %2182 = vmatpush1.bf16.msra.mxu0 %v2160
        %2183 = vmatprep.subr.bf16.mxu0 0
        %2184 = vmatpush1.bf16.msra.mxu0 %v2161
        %2185 = vmatprep.subr.bf16.mxu0 0
        %2186 = vmatpush1.bf16.msra.mxu0 %v2162
        %2187 = vmatprep.subr.bf16.mxu0 0
        %2188 = vmatpush1.bf16.msra.mxu0 0
        %2189 = vmatprep.subr.bf16.mxu0 0
        %2190 = vmatpush1.bf16.msra.mxu0 0
        %2191 = vmatprep.subr.bf16.mxu0 0
        %2192 = vmatpush1.bf16.msra.mxu0 0
        %2193 = vmatprep.subr.bf16.mxu0 0
        %2194 = vmatpush1.bf16.msra.mxu0 0
        %2195 = vmatprep.subr.bf16.mxu0 0
        %2196 = vmatpush1.bf16.msra.mxu0 0
        %2197 = vmatprep.subr.bf16.mxu0 0
        %2198 = vmatpush1.bf16.msra.mxu0 0
        %2199 = vmatprep.subr.bf16.mxu0 0
        %2200 = vmatpush1.bf16.msra.mxu0 0
        %2201 = vmatprep.subr.bf16.mxu0 0
        %2202 = vmatpush1.bf16.msra.mxu0 0
        %2203 = vmatprep.mubr.bf16.mxu0 0
        %2204 = vmatmul.mubr.bf16.gmra.mrb[0].mxu0 %v289
        %v2205 = vpop.f32.mrb[0].mxu0
        %v2206 = vadd.f32 0.0, %v2205
        %v2207 = vpop.f32.mrb[0].mxu0
        %v2208 = vpop.f32.mrb[0].mxu0
        %v2209 = vadd.f32 0.0, %v2208
        %v2210 = vpop.f32.mrb[0].mxu0
        %2211 = vmatprep.mubr.bf16.mxu0 0
        %2212 = vmatmul.mubr.bf16.gmra.mrb[0].mxu0 %v290
        %v2213 = vpop.f32.mrb[0].mxu0
        %v2214 = vadd.f32 0.0, %v2213
        %v2215 = vpop.f32.mrb[0].mxu0
        %v2216 = vpop.f32.mrb[0].mxu0
        %v2217 = vadd.f32 0.0, %v2216
        %v2218 = vpop.f32.mrb[0].mxu0
        %2219 = vmatprep.mubr.bf16.mxu0 0
        %2220 = vmatmul.mubr.bf16.gmra.mrb[0].mxu0 %v291
        %v2221 = vpop.f32.mrb[0].mxu0
        %v2222 = vadd.f32 0.0, %v2221
        %v2223 = vpop.f32.mrb[0].mxu0
        %v2224 = vpop.f32.mrb[0].mxu0
        %v2225 = vadd.f32 0.0, %v2224
        %v2226 = vpop.f32.mrb[0].mxu0
        %2227 = vmatprep.mubr.bf16.mxu0 0
        %2228 = vmatmul.mubr.bf16.gmra.mrb[0].mxu0 %v292
        %v2229 = vpop.f32.mrb[0].mxu0
        %v2230 = vadd.f32 0.0, %v2229
        %v2231 = vpop.f32.mrb[0].mxu0
        %v2232 = vpop.f32.mrb[0].mxu0
        %v2233 = vadd.f32 0.0, %v2232
        %v2234 = vpop.f32.mrb[0].mxu0
        %2235 = vdwg.mxu0
        %v2236 = vpack.c.bf16 %v2206, %v2206
        %v2237 = vpack.c.bf16 %v2209, %v2209
        %v2238 = vpack.c.bf16 %v2214, %v2214
        %v2239 = vpack.c.bf16 %v2217, %v2217
        %v2240 = vpack.c.bf16 %v2222, %v2222
        %v2241 = vpack.c.bf16 %v2225, %v2225
        %v2242 = vpack.c.bf16 %v2230, %v2230
        %v2243 = vpack.c.bf16 %v2233, %v2233
        %s2244 = scalar_lea.vmem [#allocation7], 16
        %v2245 = vld [vmem:[%s2244] sm:$0xf]
        %v2247 = vsel %vm420, %v2245, 0
        %v2250 = vsel %vm424, %v2236, 0
        %2252 = vmatprep.subr.bf16.mxu0 0
        %2253 = vmatpush1.bf16.msra.mxu0 %v2250
        %2254 = vmatprep.subr.bf16.mxu0 0
        %2255 = vmatpush1.bf16.msra.mxu0 0
        %2256 = vmatprep.subr.bf16.mxu0 0
        %2257 = vmatpush1.bf16.msra.mxu0 0
        %2258 = vmatprep.subr.bf16.mxu0 0
        %2259 = vmatpush1.bf16.msra.mxu0 0
        %2260 = vmatprep.subr.bf16.mxu0 0
        %2261 = vmatpush1.bf16.msra.mxu0 0
        %2262 = vmatprep.subr.bf16.mxu0 0
        %2263 = vmatpush1.bf16.msra.mxu0 0
        %2264 = vmatprep.subr.bf16.mxu0 0
        %2265 = vmatpush1.bf16.msra.mxu0 0
        %2266 = vmatprep.subr.bf16.mxu0 0
        %2267 = vmatpush1.bf16.msra.mxu0 0
        %2268 = vmatprep.subr.bf16.mxu0 0
        %2269 = vmatpush1.bf16.msra.mxu0 0
        %2270 = vmatprep.subr.bf16.mxu0 0
        %2271 = vmatpush1.bf16.msra.mxu0 0
        %2272 = vmatprep.subr.bf16.mxu0 0
        %2273 = vmatpush1.bf16.msra.mxu0 0
        %2274 = vmatprep.subr.bf16.mxu0 0
        %2275 = vmatpush1.bf16.msra.mxu0 0
        %2276 = vmatprep.subr.bf16.mxu0 0
        %2277 = vmatpush1.bf16.msra.mxu0 0
        %2278 = vmatprep.subr.bf16.mxu0 0
        %2279 = vmatpush1.bf16.msra.mxu0 0
        %2280 = vmatprep.subr.bf16.mxu0 0
        %2281 = vmatpush1.bf16.msra.mxu0 0
        %2282 = vmatprep.subr.bf16.mxu0 0
        %2283 = vmatpush1.bf16.msra.mxu0 0
        %2284 = vmatprep.mubr.bf16.mxu0 0
        %2285 = vmatmul.mubr.bf16.gmra.mrb[0].mxu0 %v2247
        %v2286 = vpop.f32.mrb[0].mxu0
        %v2287 = vadd.f32 0.0, %v2286
        %v2288 = vpop.f32.mrb[0].mxu0
        %v2289 = vpop.f32.mrb[0].mxu0
        %v2290 = vpop.f32.mrb[0].mxu0
        %2291 = vdwg.mxu0
        %v2293 = vsel %vm424, %v2237, 0
        %2295 = vmatprep.subr.bf16.mxu0 0
        %2296 = vmatpush1.bf16.msra.mxu0 %v2293
        %2297 = vmatprep.subr.bf16.mxu0 0
        %2298 = vmatpush1.bf16.msra.mxu0 0
        %2299 = vmatprep.subr.bf16.mxu0 0
        %2300 = vmatpush1.bf16.msra.mxu0 0
        %2301 = vmatprep.subr.bf16.mxu0 0
        %2302 = vmatpush1.bf16.msra.mxu0 0
        %2303 = vmatprep.subr.bf16.mxu0 0
        %2304 = vmatpush1.bf16.msra.mxu0 0
        %2305 = vmatprep.subr.bf16.mxu0 0
        %2306 = vmatpush1.bf16.msra.mxu0 0
        %2307 = vmatprep.subr.bf16.mxu0 0
        %2308 = vmatpush1.bf16.msra.mxu0 0
        %2309 = vmatprep.subr.bf16.mxu0 0
        %2310 = vmatpush1.bf16.msra.mxu0 0
        %2311 = vmatprep.subr.bf16.mxu0 0
        %2312 = vmatpush1.bf16.msra.mxu0 0
        %2313 = vmatprep.subr.bf16.mxu0 0
        %2314 = vmatpush1.bf16.msra.mxu0 0
        %2315 = vmatprep.subr.bf16.mxu0 0
        %2316 = vmatpush1.bf16.msra.mxu0 0
        %2317 = vmatprep.subr.bf16.mxu0 0
        %2318 = vmatpush1.bf16.msra.mxu0 0
        %2319 = vmatprep.subr.bf16.mxu0 0
        %2320 = vmatpush1.bf16.msra.mxu0 0
        %2321 = vmatprep.subr.bf16.mxu0 0
        %2322 = vmatpush1.bf16.msra.mxu0 0
        %2323 = vmatprep.subr.bf16.mxu0 0
        %2324 = vmatpush1.bf16.msra.mxu0 0
        %2325 = vmatprep.subr.bf16.mxu0 0
        %2326 = vmatpush1.bf16.msra.mxu0 0
        %2327 = vmatprep.mubr.bf16.mxu0 0
        %2328 = vmatmul.mubr.bf16.gmra.mrb[0].mxu0 %v2247
        %v2329 = vpop.f32.mrb[0].mxu0
        %v2330 = vadd.f32 0.0, %v2329
        %v2331 = vpop.f32.mrb[0].mxu0
        %v2332 = vpop.f32.mrb[0].mxu0
        %v2333 = vpop.f32.mrb[0].mxu0
        %2334 = vdwg.mxu0
        %v2336 = vsel %vm424, %v2238, 0
        %2338 = vmatprep.subr.bf16.mxu0 0
        %2339 = vmatpush1.bf16.msra.mxu0 %v2336
        %2340 = vmatprep.subr.bf16.mxu0 0
        %2341 = vmatpush1.bf16.msra.mxu0 0
        %2342 = vmatprep.subr.bf16.mxu0 0
        %2343 = vmatpush1.bf16.msra.mxu0 0
        %2344 = vmatprep.subr.bf16.mxu0 0
        %2345 = vmatpush1.bf16.msra.mxu0 0
        %2346 = vmatprep.subr.bf16.mxu0 0
        %2347 = vmatpush1.bf16.msra.mxu0 0
        %2348 = vmatprep.subr.bf16.mxu0 0
        %2349 = vmatpush1.bf16.msra.mxu0 0
        %2350 = vmatprep.subr.bf16.mxu0 0
        %2351 = vmatpush1.bf16.msra.mxu0 0
        %2352 = vmatprep.subr.bf16.mxu0 0
        %2353 = vmatpush1.bf16.msra.mxu0 0
        %2354 = vmatprep.subr.bf16.mxu0 0
        %2355 = vmatpush1.bf16.msra.mxu0 0
        %2356 = vmatprep.subr.bf16.mxu0 0
        %2357 = vmatpush1.bf16.msra.mxu0 0
        %2358 = vmatprep.subr.bf16.mxu0 0
        %2359 = vmatpush1.bf16.msra.mxu0 0
        %2360 = vmatprep.subr.bf16.mxu0 0
        %2361 = vmatpush1.bf16.msra.mxu0 0
        %2362 = vmatprep.subr.bf16.mxu0 0
        %2363 = vmatpush1.bf16.msra.mxu0 0
        %2364 = vmatprep.subr.bf16.mxu0 0
        %2365 = vmatpush1.bf16.msra.mxu0 0
        %2366 = vmatprep.subr.bf16.mxu0 0
        %2367 = vmatpush1.bf16.msra.mxu0 0
        %2368 = vmatprep.subr.bf16.mxu0 0
        %2369 = vmatpush1.bf16.msra.mxu0 0
        %2370 = vmatprep.mubr.bf16.mxu0 0
        %2371 = vmatmul.mubr.bf16.gmra.mrb[0].mxu0 %v2247
        %v2372 = vpop.f32.mrb[0].mxu0
        %v2373 = vadd.f32 0.0, %v2372
        %v2374 = vpop.f32.mrb[0].mxu0
        %v2375 = vpop.f32.mrb[0].mxu0
        %v2376 = vpop.f32.mrb[0].mxu0
        %2377 = vdwg.mxu0
        %v2379 = vsel %vm424, %v2239, 0
        %2381 = vmatprep.subr.bf16.mxu0 0
        %2382 = vmatpush1.bf16.msra.mxu0 %v2379
        %2383 = vmatprep.subr.bf16.mxu0 0
        %2384 = vmatpush1.bf16.msra.mxu0 0
        %2385 = vmatprep.subr.bf16.mxu0 0
        %2386 = vmatpush1.bf16.msra.mxu0 0
        %2387 = vmatprep.subr.bf16.mxu0 0
        %2388 = vmatpush1.bf16.msra.mxu0 0
        %2389 = vmatprep.subr.bf16.mxu0 0
        %2390 = vmatpush1.bf16.msra.mxu0 0
        %2391 = vmatprep.subr.bf16.mxu0 0
        %2392 = vmatpush1.bf16.msra.mxu0 0
        %2393 = vmatprep.subr.bf16.mxu0 0
        %2394 = vmatpush1.bf16.msra.mxu0 0
        %2395 = vmatprep.subr.bf16.mxu0 0
        %2396 = vmatpush1.bf16.msra.mxu0 0
        %2397 = vmatprep.subr.bf16.mxu0 0
        %2398 = vmatpush1.bf16.msra.mxu0 0
        %2399 = vmatprep.subr.bf16.mxu0 0
        %2400 = vmatpush1.bf16.msra.mxu0 0
        %2401 = vmatprep.subr.bf16.mxu0 0
        %2402 = vmatpush1.bf16.msra.mxu0 0
        %2403 = vmatprep.subr.bf16.mxu0 0
        %2404 = vmatpush1.bf16.msra.mxu0 0
        %2405 = vmatprep.subr.bf16.mxu0 0
        %2406 = vmatpush1.bf16.msra.mxu0 0
        %2407 = vmatprep.subr.bf16.mxu0 0
        %2408 = vmatpush1.bf16.msra.mxu0 0
        %2409 = vmatprep.subr.bf16.mxu0 0
        %2410 = vmatpush1.bf16.msra.mxu0 0
        %2411 = vmatprep.subr.bf16.mxu0 0
        %2412 = vmatpush1.bf16.msra.mxu0 0
        %2413 = vmatprep.mubr.bf16.mxu0 0
        %2414 = vmatmul.mubr.bf16.gmra.mrb[0].mxu0 %v2247
        %v2415 = vpop.f32.mrb[0].mxu0
        %v2416 = vadd.f32 0.0, %v2415
        %v2417 = vpop.f32.mrb[0].mxu0
        %v2418 = vpop.f32.mrb[0].mxu0
        %v2419 = vpop.f32.mrb[0].mxu0
        %2420 = vdwg.mxu0
        %v2422 = vsel %vm424, %v2240, 0
        %2424 = vmatprep.subr.bf16.mxu0 0
        %2425 = vmatpush1.bf16.msra.mxu0 %v2422
        %2426 = vmatprep.subr.bf16.mxu0 0
        %2427 = vmatpush1.bf16.msra.mxu0 0
        %2428 = vmatprep.subr.bf16.mxu0 0
        %2429 = vmatpush1.bf16.msra.mxu0 0
        %2430 = vmatprep.subr.bf16.mxu0 0
        %2431 = vmatpush1.bf16.msra.mxu0 0
        %2432 = vmatprep.subr.bf16.mxu0 0
        %2433 = vmatpush1.bf16.msra.mxu0 0
        %2434 = vmatprep.subr.bf16.mxu0 0
        %2435 = vmatpush1.bf16.msra.mxu0 0
        %2436 = vmatprep.subr.bf16.mxu0 0
        %2437 = vmatpush1.bf16.msra.mxu0 0
        %2438 = vmatprep.subr.bf16.mxu0 0
        %2439 = vmatpush1.bf16.msra.mxu0 0
        %2440 = vmatprep.subr.bf16.mxu0 0
        %2441 = vmatpush1.bf16.msra.mxu0 0
        %2442 = vmatprep.subr.bf16.mxu0 0
        %2443 = vmatpush1.bf16.msra.mxu0 0
        %2444 = vmatprep.subr.bf16.mxu0 0
        %2445 = vmatpush1.bf16.msra.mxu0 0
        %2446 = vmatprep.subr.bf16.mxu0 0
        %2447 = vmatpush1.bf16.msra.mxu0 0
        %2448 = vmatprep.subr.bf16.mxu0 0
        %2449 = vmatpush1.bf16.msra.mxu0 0
        %2450 = vmatprep.subr.bf16.mxu0 0
        %2451 = vmatpush1.bf16.msra.mxu0 0
        %2452 = vmatprep.subr.bf16.mxu0 0
        %2453 = vmatpush1.bf16.msra.mxu0 0
        %2454 = vmatprep.subr.bf16.mxu0 0
        %2455 = vmatpush1.bf16.msra.mxu0 0
        %2456 = vmatprep.mubr.bf16.mxu0 0
        %2457 = vmatmul.mubr.bf16.gmra.mrb[0].mxu0 %v2247
        %v2458 = vpop.f32.mrb[0].mxu0
        %v2459 = vadd.f32 0.0, %v2458
        %v2460 = vpop.f32.mrb[0].mxu0
        %v2461 = vpop.f32.mrb[0].mxu0
        %v2462 = vpop.f32.mrb[0].mxu0
        %2463 = vdwg.mxu0
        %v2465 = vsel %vm424, %v2241, 0
        %2467 = vmatprep.subr.bf16.mxu0 0
        %2468 = vmatpush1.bf16.msra.mxu0 %v2465
        %2469 = vmatprep.subr.bf16.mxu0 0
        %2470 = vmatpush1.bf16.msra.mxu0 0
        %2471 = vmatprep.subr.bf16.mxu0 0
        %2472 = vmatpush1.bf16.msra.mxu0 0
        %2473 = vmatprep.subr.bf16.mxu0 0
        %2474 = vmatpush1.bf16.msra.mxu0 0
        %2475 = vmatprep.subr.bf16.mxu0 0
        %2476 = vmatpush1.bf16.msra.mxu0 0
        %2477 = vmatprep.subr.bf16.mxu0 0
        %2478 = vmatpush1.bf16.msra.mxu0 0
        %2479 = vmatprep.subr.bf16.mxu0 0
        %2480 = vmatpush1.bf16.msra.mxu0 0
        %2481 = vmatprep.subr.bf16.mxu0 0
        %2482 = vmatpush1.bf16.msra.mxu0 0
        %2483 = vmatprep.subr.bf16.mxu0 0
        %2484 = vmatpush1.bf16.msra.mxu0 0
        %2485 = vmatprep.subr.bf16.mxu0 0
        %2486 = vmatpush1.bf16.msra.mxu0 0
        %2487 = vmatprep.subr.bf16.mxu0 0
        %2488 = vmatpush1.bf16.msra.mxu0 0
        %2489 = vmatprep.subr.bf16.mxu0 0
        %2490 = vmatpush1.bf16.msra.mxu0 0
        %2491 = vmatprep.subr.bf16.mxu0 0
        %2492 = vmatpush1.bf16.msra.mxu0 0
        %2493 = vmatprep.subr.bf16.mxu0 0
        %2494 = vmatpush1.bf16.msra.mxu0 0
        %2495 = vmatprep.subr.bf16.mxu0 0
        %2496 = vmatpush1.bf16.msra.mxu0 0
        %2497 = vmatprep.subr.bf16.mxu0 0
        %2498 = vmatpush1.bf16.msra.mxu0 0
        %2499 = vmatprep.mubr.bf16.mxu0 0
        %2500 = vmatmul.mubr.bf16.gmra.mrb[0].mxu0 %v2247
        %v2501 = vpop.f32.mrb[0].mxu0
        %v2502 = vadd.f32 0.0, %v2501
        %v2503 = vpop.f32.mrb[0].mxu0
        %v2504 = vpop.f32.mrb[0].mxu0
        %v2505 = vpop.f32.mrb[0].mxu0
        %2506 = vdwg.mxu0
        %v2508 = vsel %vm424, %v2242, 0
        %2510 = vmatprep.subr.bf16.mxu0 0
        %2511 = vmatpush1.bf16.msra.mxu0 %v2508
        %2512 = vmatprep.subr.bf16.mxu0 0
        %2513 = vmatpush1.bf16.msra.mxu0 0
        %2514 = vmatprep.subr.bf16.mxu0 0
        %2515 = vmatpush1.bf16.msra.mxu0 0
        %2516 = vmatprep.subr.bf16.mxu0 0
        %2517 = vmatpush1.bf16.msra.mxu0 0
        %2518 = vmatprep.subr.bf16.mxu0 0
        %2519 = vmatpush1.bf16.msra.mxu0 0
        %2520 = vmatprep.subr.bf16.mxu0 0
        %2521 = vmatpush1.bf16.msra.mxu0 0
        %2522 = vmatprep.subr.bf16.mxu0 0
        %2523 = vmatpush1.bf16.msra.mxu0 0
        %2524 = vmatprep.subr.bf16.mxu0 0
        %2525 = vmatpush1.bf16.msra.mxu0 0
        %2526 = vmatprep.subr.bf16.mxu0 0
        %2527 = vmatpush1.bf16.msra.mxu0 0
        %2528 = vmatprep.subr.bf16.mxu0 0
        %2529 = vmatpush1.bf16.msra.mxu0 0
        %2530 = vmatprep.subr.bf16.mxu0 0
        %2531 = vmatpush1.bf16.msra.mxu0 0
        %2532 = vmatprep.subr.bf16.mxu0 0
        %2533 = vmatpush1.bf16.msra.mxu0 0
        %2534 = vmatprep.subr.bf16.mxu0 0
        %2535 = vmatpush1.bf16.msra.mxu0 0
        %2536 = vmatprep.subr.bf16.mxu0 0
        %2537 = vmatpush1.bf16.msra.mxu0 0
        %2538 = vmatprep.subr.bf16.mxu0 0
        %2539 = vmatpush1.bf16.msra.mxu0 0
        %2540 = vmatprep.subr.bf16.mxu0 0
        %2541 = vmatpush1.bf16.msra.mxu0 0
        %2542 = vmatprep.mubr.bf16.mxu0 0
        %2543 = vmatmul.mubr.bf16.gmra.mrb[0].mxu0 %v2247
        %v2544 = vpop.f32.mrb[0].mxu0
        %v2545 = vadd.f32 0.0, %v2544
        %v2546 = vpop.f32.mrb[0].mxu0
        %v2547 = vpop.f32.mrb[0].mxu0
        %v2548 = vpop.f32.mrb[0].mxu0
        %2549 = vdwg.mxu0
        %v2551 = vsel %vm424, %v2243, 0
        %2553 = vmatprep.subr.bf16.mxu0 0
        %2554 = vmatpush1.bf16.msra.mxu0 %v2551
        %2555 = vmatprep.subr.bf16.mxu0 0
        %2556 = vmatpush1.bf16.msra.mxu0 0
        %2557 = vmatprep.subr.bf16.mxu0 0
        %2558 = vmatpush1.bf16.msra.mxu0 0
        %2559 = vmatprep.subr.bf16.mxu0 0
        %2560 = vmatpush1.bf16.msra.mxu0 0
        %2561 = vmatprep.subr.bf16.mxu0 0
        %2562 = vmatpush1.bf16.msra.mxu0 0
        %2563 = vmatprep.subr.bf16.mxu0 0
        %2564 = vmatpush1.bf16.msra.mxu0 0
        %2565 = vmatprep.subr.bf16.mxu0 0
        %2566 = vmatpush1.bf16.msra.mxu0 0
        %2567 = vmatprep.subr.bf16.mxu0 0
        %2568 = vmatpush1.bf16.msra.mxu0 0
        %2569 = vmatprep.subr.bf16.mxu0 0
        %2570 = vmatpush1.bf16.msra.mxu0 0
        %2571 = vmatprep.subr.bf16.mxu0 0
        %2572 = vmatpush1.bf16.msra.mxu0 0
        %2573 = vmatprep.subr.bf16.mxu0 0
        %2574 = vmatpush1.bf16.msra.mxu0 0
        %2575 = vmatprep.subr.bf16.mxu0 0
        %2576 = vmatpush1.bf16.msra.mxu0 0
        %2577 = vmatprep.subr.bf16.mxu0 0
        %2578 = vmatpush1.bf16.msra.mxu0 0
        %2579 = vmatprep.subr.bf16.mxu0 0
        %2580 = vmatpush1.bf16.msra.mxu0 0
        %2581 = vmatprep.subr.bf16.mxu0 0
        %2582 = vmatpush1.bf16.msra.mxu0 0
        %2583 = vmatprep.subr.bf16.mxu0 0
        %2584 = vmatpush1.bf16.msra.mxu0 0
        %2585 = vmatprep.mubr.bf16.mxu0 0
        %2586 = vmatmul.mubr.bf16.gmra.mrb[0].mxu0 %v2247
        %v2587 = vpop.f32.mrb[0].mxu0
        %v2588 = vadd.f32 0.0, %v2587
        %v2589 = vpop.f32.mrb[0].mxu0
        %v2590 = vpop.f32.mrb[0].mxu0
        %v2591 = vpop.f32.mrb[0].mxu0
        %2592 = vdwg.mxu0
        %v2593 = vadd.f32 %v2098, %v2287
        %v2594 = vadd.f32 %v2099, %v2330
        %v2595 = vadd.f32 %v2100, %v2373
        %v2596 = vadd.f32 %v2101, %v2416
        %v2597 = vadd.f32 %v2102, %v2459
        %v2598 = vadd.f32 %v2103, %v2502
        %v2599 = vadd.f32 %v2104, %v2545
        %v2600 = vadd.f32 %v2105, %v2588
        %s2601 = scalar_lea.vmem [#allocation5], 256
        %v2602 = vld [vmem:[%s2601] sm:$0xf]
        %v2603 = vld [vmem:[%s2601 + $0x4] sm:$0xf]
        %v2604 = vld [vmem:[%s2601 + $0x8] sm:$0xf]
        %v2605 = vld [vmem:[%s2601 + $0xc] sm:$0xf]
        %v2606 = vld [vmem:[%s2601 + $0x10] sm:$0xf]
        %v2607 = vld [vmem:[%s2601 + $0x14] sm:$0xf]
        %v2608 = vld [vmem:[%s2601 + $0x18] sm:$0xf]
        %v2609 = vld [vmem:[%s2601 + $0x1c] sm:$0xf]
        %v2610 = vld [vmem:[%s2601 + $0x20] sm:$0xf]
        %v2611 = vld [vmem:[%s2601 + $0x24] sm:$0xf]
        %v2612 = vld [vmem:[%s2601 + $0x28] sm:$0xf]
        %v2613 = vld [vmem:[%s2601 + $0x2c] sm:$0xf]
        %v2614 = vld [vmem:[%s2601 + $0x30] sm:$0xf]
        %v2615 = vld [vmem:[%s2601 + $0x34] sm:$0xf]
        %v2616 = vld [vmem:[%s2601 + $0x38] sm:$0xf]
        %v2617 = vld [vmem:[%s2601 + $0x3c] sm:$0xf]
        %v2634 = vunpack.c.l.b16 %v2602
        %v2635 = vunpack.c.l.b16 %v2603
        %v2636 = vunpack.c.l.b16 %v2604
        %v2637 = vunpack.c.l.b16 %v2605
        %v2638 = vunpack.c.l.b16 %v2606
        %v2639 = vunpack.c.l.b16 %v2607
        %v2640 = vunpack.c.l.b16 %v2608
        %v2641 = vunpack.c.l.b16 %v2609
        %v2642 = vunpack.c.l.b16 %v2610
        %v2643 = vunpack.c.l.b16 %v2611
        %v2644 = vunpack.c.l.b16 %v2612
        %v2645 = vunpack.c.l.b16 %v2613
        %v2646 = vunpack.c.l.b16 %v2614
        %v2647 = vunpack.c.l.b16 %v2615
        %v2648 = vunpack.c.l.b16 %v2616
        %v2649 = vunpack.c.l.b16 %v2617
        %v2650 = vpack.c.b16 %v2635, %v2634
        %v2651 = vpack.c.b16 %v2637, %v2636
        %v2652 = vpack.c.b16 %v2639, %v2638
        %v2653 = vpack.c.b16 %v2641, %v2640
        %v2654 = vpack.c.b16 %v2643, %v2642
        %v2655 = vpack.c.b16 %v2645, %v2644
        %v2656 = vpack.c.b16 %v2647, %v2646
        %v2657 = vpack.c.b16 %v2649, %v2648
        %2666 = vmatprep.subr.bf16.mxu0 0
        %2667 = vmatpush1.bf16.msra.mxu0 %v2650
        %2668 = vmatprep.subr.bf16.mxu0 0
        %2669 = vmatpush1.bf16.msra.mxu0 %v2651
        %2670 = vmatprep.subr.bf16.mxu0 0
        %2671 = vmatpush1.bf16.msra.mxu0 %v2652
        %2672 = vmatprep.subr.bf16.mxu0 0
        %2673 = vmatpush1.bf16.msra.mxu0 %v2653
        %2674 = vmatprep.subr.bf16.mxu0 0
        %2675 = vmatpush1.bf16.msra.mxu0 %v2654
        %2676 = vmatprep.subr.bf16.mxu0 0
        %2677 = vmatpush1.bf16.msra.mxu0 %v2655
        %2678 = vmatprep.subr.bf16.mxu0 0
        %2679 = vmatpush1.bf16.msra.mxu0 %v2656
        %2680 = vmatprep.subr.bf16.mxu0 0
        %2681 = vmatpush1.bf16.msra.mxu0 %v2657
        %2682 = vmatprep.subr.bf16.mxu0 0
        %2683 = vmatpush1.bf16.msra.mxu0 0
        %2684 = vmatprep.subr.bf16.mxu0 0
        %2685 = vmatpush1.bf16.msra.mxu0 0
        %2686 = vmatprep.subr.bf16.mxu0 0
        %2687 = vmatpush1.bf16.msra.mxu0 0
        %2688 = vmatprep.subr.bf16.mxu0 0
        %2689 = vmatpush1.bf16.msra.mxu0 0
        %2690 = vmatprep.subr.bf16.mxu0 0
        %2691 = vmatpush1.bf16.msra.mxu0 0
        %2692 = vmatprep.subr.bf16.mxu0 0
        %2693 = vmatpush1.bf16.msra.mxu0 0
        %2694 = vmatprep.subr.bf16.mxu0 0
        %2695 = vmatpush1.bf16.msra.mxu0 0
        %2696 = vmatprep.subr.bf16.mxu0 0
        %2697 = vmatpush1.bf16.msra.mxu0 0
        %2698 = vmatprep.mubr.bf16.mxu0 0
        %2699 = vmatmul.mubr.bf16.gmra.mrb[0].mxu0 %v289
        %v2700 = vpop.f32.mrb[0].mxu0
        %v2701 = vadd.f32 0.0, %v2700
        %v2702 = vpop.f32.mrb[0].mxu0
        %v2703 = vpop.f32.mrb[0].mxu0
        %v2704 = vadd.f32 0.0, %v2703
        %v2705 = vpop.f32.mrb[0].mxu0
        %2706 = vmatprep.mubr.bf16.mxu0 0
        %2707 = vmatmul.mubr.bf16.gmra.mrb[0].mxu0 %v290
        %v2708 = vpop.f32.mrb[0].mxu0
        %v2709 = vadd.f32 0.0, %v2708
        %v2710 = vpop.f32.mrb[0].mxu0
        %v2711 = vpop.f32.mrb[0].mxu0
        %v2712 = vadd.f32 0.0, %v2711
        %v2713 = vpop.f32.mrb[0].mxu0
        %2714 = vmatprep.mubr.bf16.mxu0 0
        %2715 = vmatmul.mubr.bf16.gmra.mrb[0].mxu0 %v291
        %v2716 = vpop.f32.mrb[0].mxu0
        %v2717 = vadd.f32 0.0, %v2716
        %v2718 = vpop.f32.mrb[0].mxu0
        %v2719 = vpop.f32.mrb[0].mxu0
        %v2720 = vadd.f32 0.0, %v2719
        %v2721 = vpop.f32.mrb[0].mxu0
        %2722 = vmatprep.mubr.bf16.mxu0 0
        %2723 = vmatmul.mubr.bf16.gmra.mrb[0].mxu0 %v292
        %v2724 = vpop.f32.mrb[0].mxu0
        %v2725 = vadd.f32 0.0, %v2724
        %v2726 = vpop.f32.mrb[0].mxu0
        %v2727 = vpop.f32.mrb[0].mxu0
        %v2728 = vadd.f32 0.0, %v2727
        %v2729 = vpop.f32.mrb[0].mxu0
        %2730 = vdwg.mxu0
        %v2731 = vpack.c.bf16 %v2701, %v2701
        %v2732 = vpack.c.bf16 %v2704, %v2704
        %v2733 = vpack.c.bf16 %v2709, %v2709
        %v2734 = vpack.c.bf16 %v2712, %v2712
        %v2735 = vpack.c.bf16 %v2717, %v2717
        %v2736 = vpack.c.bf16 %v2720, %v2720
        %v2737 = vpack.c.bf16 %v2725, %v2725
        %v2738 = vpack.c.bf16 %v2728, %v2728
        %s2739 = scalar_lea.vmem [#allocation7], 20
        %v2740 = vld [vmem:[%s2739] sm:$0xf]
        %v2742 = vsel %vm420, %v2740, 0
        %v2745 = vsel %vm424, %v2731, 0
        %2747 = vmatprep.subr.bf16.mxu0 0
        %2748 = vmatpush1.bf16.msra.mxu0 %v2745
        %2749 = vmatprep.subr.bf16.mxu0 0
        %2750 = vmatpush1.bf16.msra.mxu0 0
        %2751 = vmatprep.subr.bf16.mxu0 0
        %2752 = vmatpush1.bf16.msra.mxu0 0
        %2753 = vmatprep.subr.bf16.mxu0 0
        %2754 = vmatpush1.bf16.msra.mxu0 0
        %2755 = vmatprep.subr.bf16.mxu0 0
        %2756 = vmatpush1.bf16.msra.mxu0 0
        %2757 = vmatprep.subr.bf16.mxu0 0
        %2758 = vmatpush1.bf16.msra.mxu0 0
        %2759 = vmatprep.subr.bf16.mxu0 0
        %2760 = vmatpush1.bf16.msra.mxu0 0
        %2761 = vmatprep.subr.bf16.mxu0 0
        %2762 = vmatpush1.bf16.msra.mxu0 0
        %2763 = vmatprep.subr.bf16.mxu0 0
        %2764 = vmatpush1.bf16.msra.mxu0 0
        %2765 = vmatprep.subr.bf16.mxu0 0
        %2766 = vmatpush1.bf16.msra.mxu0 0
        %2767 = vmatprep.subr.bf16.mxu0 0
        %2768 = vmatpush1.bf16.msra.mxu0 0
        %2769 = vmatprep.subr.bf16.mxu0 0
        %2770 = vmatpush1.bf16.msra.mxu0 0
        %2771 = vmatprep.subr.bf16.mxu0 0
        %2772 = vmatpush1.bf16.msra.mxu0 0
        %2773 = vmatprep.subr.bf16.mxu0 0
        %2774 = vmatpush1.bf16.msra.mxu0 0
        %2775 = vmatprep.subr.bf16.mxu0 0
        %2776 = vmatpush1.bf16.msra.mxu0 0
        %2777 = vmatprep.subr.bf16.mxu0 0
        %2778 = vmatpush1.bf16.msra.mxu0 0
        %2779 = vmatprep.mubr.bf16.mxu0 0
        %2780 = vmatmul.mubr.bf16.gmra.mrb[0].mxu0 %v2742
        %v2781 = vpop.f32.mrb[0].mxu0
        %v2782 = vadd.f32 0.0, %v2781
        %v2783 = vpop.f32.mrb[0].mxu0
        %v2784 = vpop.f32.mrb[0].mxu0
        %v2785 = vpop.f32.mrb[0].mxu0
        %2786 = vdwg.mxu0
        %v2788 = vsel %vm424, %v2732, 0
        %2790 = vmatprep.subr.bf16.mxu0 0
        %2791 = vmatpush1.bf16.msra.mxu0 %v2788
        %2792 = vmatprep.subr.bf16.mxu0 0
        %2793 = vmatpush1.bf16.msra.mxu0 0
        %2794 = vmatprep.subr.bf16.mxu0 0
        %2795 = vmatpush1.bf16.msra.mxu0 0
        %2796 = vmatprep.subr.bf16.mxu0 0
        %2797 = vmatpush1.bf16.msra.mxu0 0
        %2798 = vmatprep.subr.bf16.mxu0 0
        %2799 = vmatpush1.bf16.msra.mxu0 0
        %2800 = vmatprep.subr.bf16.mxu0 0
        %2801 = vmatpush1.bf16.msra.mxu0 0
        %2802 = vmatprep.subr.bf16.mxu0 0
        %2803 = vmatpush1.bf16.msra.mxu0 0
        %2804 = vmatprep.subr.bf16.mxu0 0
        %2805 = vmatpush1.bf16.msra.mxu0 0
        %2806 = vmatprep.subr.bf16.mxu0 0
        %2807 = vmatpush1.bf16.msra.mxu0 0
        %2808 = vmatprep.subr.bf16.mxu0 0
        %2809 = vmatpush1.bf16.msra.mxu0 0
        %2810 = vmatprep.subr.bf16.mxu0 0
        %2811 = vmatpush1.bf16.msra.mxu0 0
        %2812 = vmatprep.subr.bf16.mxu0 0
        %2813 = vmatpush1.bf16.msra.mxu0 0
        %2814 = vmatprep.subr.bf16.mxu0 0
        %2815 = vmatpush1.bf16.msra.mxu0 0
        %2816 = vmatprep.subr.bf16.mxu0 0
        %2817 = vmatpush1.bf16.msra.mxu0 0
        %2818 = vmatprep.subr.bf16.mxu0 0
        %2819 = vmatpush1.bf16.msra.mxu0 0
        %2820 = vmatprep.subr.bf16.mxu0 0
        %2821 = vmatpush1.bf16.msra.mxu0 0
        %2822 = vmatprep.mubr.bf16.mxu0 0
        %2823 = vmatmul.mubr.bf16.gmra.mrb[0].mxu0 %v2742
        %v2824 = vpop.f32.mrb[0].mxu0
        %v2825 = vadd.f32 0.0, %v2824
        %v2826 = vpop.f32.mrb[0].mxu0
        %v2827 = vpop.f32.mrb[0].mxu0
        %v2828 = vpop.f32.mrb[0].mxu0
        %2829 = vdwg.mxu0
        %v2831 = vsel %vm424, %v2733, 0
        %2833 = vmatprep.subr.bf16.mxu0 0
        %2834 = vmatpush1.bf16.msra.mxu0 %v2831
        %2835 = vmatprep.subr.bf16.mxu0 0
        %2836 = vmatpush1.bf16.msra.mxu0 0
        %2837 = vmatprep.subr.bf16.mxu0 0
        %2838 = vmatpush1.bf16.msra.mxu0 0
        %2839 = vmatprep.subr.bf16.mxu0 0
        %2840 = vmatpush1.bf16.msra.mxu0 0
        %2841 = vmatprep.subr.bf16.mxu0 0
        %2842 = vmatpush1.bf16.msra.mxu0 0
        %2843 = vmatprep.subr.bf16.mxu0 0
        %2844 = vmatpush1.bf16.msra.mxu0 0
        %2845 = vmatprep.subr.bf16.mxu0 0
        %2846 = vmatpush1.bf16.msra.mxu0 0
        %2847 = vmatprep.subr.bf16.mxu0 0
        %2848 = vmatpush1.bf16.msra.mxu0 0
        %2849 = vmatprep.subr.bf16.mxu0 0
        %2850 = vmatpush1.bf16.msra.mxu0 0
        %2851 = vmatprep.subr.bf16.mxu0 0
        %2852 = vmatpush1.bf16.msra.mxu0 0
        %2853 = vmatprep.subr.bf16.mxu0 0
        %2854 = vmatpush1.bf16.msra.mxu0 0
        %2855 = vmatprep.subr.bf16.mxu0 0
        %2856 = vmatpush1.bf16.msra.mxu0 0
        %2857 = vmatprep.subr.bf16.mxu0 0
        %2858 = vmatpush1.bf16.msra.mxu0 0
        %2859 = vmatprep.subr.bf16.mxu0 0
        %2860 = vmatpush1.bf16.msra.mxu0 0
        %2861 = vmatprep.subr.bf16.mxu0 0
        %2862 = vmatpush1.bf16.msra.mxu0 0
        %2863 = vmatprep.subr.bf16.mxu0 0
        %2864 = vmatpush1.bf16.msra.mxu0 0
        %2865 = vmatprep.mubr.bf16.mxu0 0
        %2866 = vmatmul.mubr.bf16.gmra.mrb[0].mxu0 %v2742
        %v2867 = vpop.f32.mrb[0].mxu0
        %v2868 = vadd.f32 0.0, %v2867
        %v2869 = vpop.f32.mrb[0].mxu0
        %v2870 = vpop.f32.mrb[0].mxu0
        %v2871 = vpop.f32.mrb[0].mxu0
        %2872 = vdwg.mxu0
        %v2874 = vsel %vm424, %v2734, 0
        %2876 = vmatprep.subr.bf16.mxu0 0
        %2877 = vmatpush1.bf16.msra.mxu0 %v2874
        %2878 = vmatprep.subr.bf16.mxu0 0
        %2879 = vmatpush1.bf16.msra.mxu0 0
        %2880 = vmatprep.subr.bf16.mxu0 0
        %2881 = vmatpush1.bf16.msra.mxu0 0
        %2882 = vmatprep.subr.bf16.mxu0 0
        %2883 = vmatpush1.bf16.msra.mxu0 0
        %2884 = vmatprep.subr.bf16.mxu0 0
        %2885 = vmatpush1.bf16.msra.mxu0 0
        %2886 = vmatprep.subr.bf16.mxu0 0
        %2887 = vmatpush1.bf16.msra.mxu0 0
        %2888 = vmatprep.subr.bf16.mxu0 0
        %2889 = vmatpush1.bf16.msra.mxu0 0
        %2890 = vmatprep.subr.bf16.mxu0 0
        %2891 = vmatpush1.bf16.msra.mxu0 0
        %2892 = vmatprep.subr.bf16.mxu0 0
        %2893 = vmatpush1.bf16.msra.mxu0 0
        %2894 = vmatprep.subr.bf16.mxu0 0
        %2895 = vmatpush1.bf16.msra.mxu0 0
        %2896 = vmatprep.subr.bf16.mxu0 0
        %2897 = vmatpush1.bf16.msra.mxu0 0
        %2898 = vmatprep.subr.bf16.mxu0 0
        %2899 = vmatpush1.bf16.msra.mxu0 0
        %2900 = vmatprep.subr.bf16.mxu0 0
        %2901 = vmatpush1.bf16.msra.mxu0 0
        %2902 = vmatprep.subr.bf16.mxu0 0
        %2903 = vmatpush1.bf16.msra.mxu0 0
        %2904 = vmatprep.subr.bf16.mxu0 0
        %2905 = vmatpush1.bf16.msra.mxu0 0
        %2906 = vmatprep.subr.bf16.mxu0 0
        %2907 = vmatpush1.bf16.msra.mxu0 0
        %2908 = vmatprep.mubr.bf16.mxu0 0
        %2909 = vmatmul.mubr.bf16.gmra.mrb[0].mxu0 %v2742
        %v2910 = vpop.f32.mrb[0].mxu0
        %v2911 = vadd.f32 0.0, %v2910
        %v2912 = vpop.f32.mrb[0].mxu0
        %v2913 = vpop.f32.mrb[0].mxu0
        %v2914 = vpop.f32.mrb[0].mxu0
        %2915 = vdwg.mxu0
        %v2917 = vsel %vm424, %v2735, 0
        %2919 = vmatprep.subr.bf16.mxu0 0
        %2920 = vmatpush1.bf16.msra.mxu0 %v2917
        %2921 = vmatprep.subr.bf16.mxu0 0
        %2922 = vmatpush1.bf16.msra.mxu0 0
        %2923 = vmatprep.subr.bf16.mxu0 0
        %2924 = vmatpush1.bf16.msra.mxu0 0
        %2925 = vmatprep.subr.bf16.mxu0 0
        %2926 = vmatpush1.bf16.msra.mxu0 0
        %2927 = vmatprep.subr.bf16.mxu0 0
        %2928 = vmatpush1.bf16.msra.mxu0 0
        %2929 = vmatprep.subr.bf16.mxu0 0
        %2930 = vmatpush1.bf16.msra.mxu0 0
        %2931 = vmatprep.subr.bf16.mxu0 0
        %2932 = vmatpush1.bf16.msra.mxu0 0
        %2933 = vmatprep.subr.bf16.mxu0 0
        %2934 = vmatpush1.bf16.msra.mxu0 0
        %2935 = vmatprep.subr.bf16.mxu0 0
        %2936 = vmatpush1.bf16.msra.mxu0 0
        %2937 = vmatprep.subr.bf16.mxu0 0
        %2938 = vmatpush1.bf16.msra.mxu0 0
        %2939 = vmatprep.subr.bf16.mxu0 0
        %2940 = vmatpush1.bf16.msra.mxu0 0
        %2941 = vmatprep.subr.bf16.mxu0 0
        %2942 = vmatpush1.bf16.msra.mxu0 0
        %2943 = vmatprep.subr.bf16.mxu0 0
        %2944 = vmatpush1.bf16.msra.mxu0 0
        %2945 = vmatprep.subr.bf16.mxu0 0
        %2946 = vmatpush1.bf16.msra.mxu0 0
        %2947 = vmatprep.subr.bf16.mxu0 0
        %2948 = vmatpush1.bf16.msra.mxu0 0
        %2949 = vmatprep.subr.bf16.mxu0 0
        %2950 = vmatpush1.bf16.msra.mxu0 0
        %2951 = vmatprep.mubr.bf16.mxu0 0
        %2952 = vmatmul.mubr.bf16.gmra.mrb[0].mxu0 %v2742
        %v2953 = vpop.f32.mrb[0].mxu0
        %v2954 = vadd.f32 0.0, %v2953
        %v2955 = vpop.f32.mrb[0].mxu0
        %v2956 = vpop.f32.mrb[0].mxu0
        %v2957 = vpop.f32.mrb[0].mxu0
        %2958 = vdwg.mxu0
        %v2960 = vsel %vm424, %v2736, 0
        %2962 = vmatprep.subr.bf16.mxu0 0
        %2963 = vmatpush1.bf16.msra.mxu0 %v2960
        %2964 = vmatprep.subr.bf16.mxu0 0
        %2965 = vmatpush1.bf16.msra.mxu0 0
        %2966 = vmatprep.subr.bf16.mxu0 0
        %2967 = vmatpush1.bf16.msra.mxu0 0
        %2968 = vmatprep.subr.bf16.mxu0 0
        %2969 = vmatpush1.bf16.msra.mxu0 0
        %2970 = vmatprep.subr.bf16.mxu0 0
        %2971 = vmatpush1.bf16.msra.mxu0 0
        %2972 = vmatprep.subr.bf16.mxu0 0
        %2973 = vmatpush1.bf16.msra.mxu0 0
        %2974 = vmatprep.subr.bf16.mxu0 0
        %2975 = vmatpush1.bf16.msra.mxu0 0
        %2976 = vmatprep.subr.bf16.mxu0 0
        %2977 = vmatpush1.bf16.msra.mxu0 0
        %2978 = vmatprep.subr.bf16.mxu0 0
        %2979 = vmatpush1.bf16.msra.mxu0 0
        %2980 = vmatprep.subr.bf16.mxu0 0
        %2981 = vmatpush1.bf16.msra.mxu0 0
        %2982 = vmatprep.subr.bf16.mxu0 0
        %2983 = vmatpush1.bf16.msra.mxu0 0
        %2984 = vmatprep.subr.bf16.mxu0 0
        %2985 = vmatpush1.bf16.msra.mxu0 0
        %2986 = vmatprep.subr.bf16.mxu0 0
        %2987 = vmatpush1.bf16.msra.mxu0 0
        %2988 = vmatprep.subr.bf16.mxu0 0
        %2989 = vmatpush1.bf16.msra.mxu0 0
        %2990 = vmatprep.subr.bf16.mxu0 0
        %2991 = vmatpush1.bf16.msra.mxu0 0
        %2992 = vmatprep.subr.bf16.mxu0 0
        %2993 = vmatpush1.bf16.msra.mxu0 0
        %2994 = vmatprep.mubr.bf16.mxu0 0
        %2995 = vmatmul.mubr.bf16.gmra.mrb[0].mxu0 %v2742
        %v2996 = vpop.f32.mrb[0].mxu0
        %v2997 = vadd.f32 0.0, %v2996
        %v2998 = vpop.f32.mrb[0].mxu0
        %v2999 = vpop.f32.mrb[0].mxu0
        %v3000 = vpop.f32.mrb[0].mxu0
        %3001 = vdwg.mxu0
        %v3003 = vsel %vm424, %v2737, 0
        %3005 = vmatprep.subr.bf16.mxu0 0
        %3006 = vmatpush1.bf16.msra.mxu0 %v3003
        %3007 = vmatprep.subr.bf16.mxu0 0
        %3008 = vmatpush1.bf16.msra.mxu0 0
        %3009 = vmatprep.subr.bf16.mxu0 0
        %3010 = vmatpush1.bf16.msra.mxu0 0
        %3011 = vmatprep.subr.bf16.mxu0 0
        %3012 = vmatpush1.bf16.msra.mxu0 0
        %3013 = vmatprep.subr.bf16.mxu0 0
        %3014 = vmatpush1.bf16.msra.mxu0 0
        %3015 = vmatprep.subr.bf16.mxu0 0
        %3016 = vmatpush1.bf16.msra.mxu0 0
        %3017 = vmatprep.subr.bf16.mxu0 0
        %3018 = vmatpush1.bf16.msra.mxu0 0
        %3019 = vmatprep.subr.bf16.mxu0 0
        %3020 = vmatpush1.bf16.msra.mxu0 0
        %3021 = vmatprep.subr.bf16.mxu0 0
        %3022 = vmatpush1.bf16.msra.mxu0 0
        %3023 = vmatprep.subr.bf16.mxu0 0
        %3024 = vmatpush1.bf16.msra.mxu0 0
        %3025 = vmatprep.subr.bf16.mxu0 0
        %3026 = vmatpush1.bf16.msra.mxu0 0
        %3027 = vmatprep.subr.bf16.mxu0 0
        %3028 = vmatpush1.bf16.msra.mxu0 0
        %3029 = vmatprep.subr.bf16.mxu0 0
        %3030 = vmatpush1.bf16.msra.mxu0 0
        %3031 = vmatprep.subr.bf16.mxu0 0
        %3032 = vmatpush1.bf16.msra.mxu0 0
        %3033 = vmatprep.subr.bf16.mxu0 0
        %3034 = vmatpush1.bf16.msra.mxu0 0
        %3035 = vmatprep.subr.bf16.mxu0 0
        %3036 = vmatpush1.bf16.msra.mxu0 0
        %3037 = vmatprep.mubr.bf16.mxu0 0
        %3038 = vmatmul.mubr.bf16.gmra.mrb[0].mxu0 %v2742
        %v3039 = vpop.f32.mrb[0].mxu0
        %v3040 = vadd.f32 0.0, %v3039
        %v3041 = vpop.f32.mrb[0].mxu0
        %v3042 = vpop.f32.mrb[0].mxu0
        %v3043 = vpop.f32.mrb[0].mxu0
        %3044 = vdwg.mxu0
        %v3046 = vsel %vm424, %v2738, 0
        %3048 = vmatprep.subr.bf16.mxu0 0
        %3049 = vmatpush1.bf16.msra.mxu0 %v3046
        %3050 = vmatprep.subr.bf16.mxu0 0
        %3051 = vmatpush1.bf16.msra.mxu0 0
        %3052 = vmatprep.subr.bf16.mxu0 0
        %3053 = vmatpush1.bf16.msra.mxu0 0
        %3054 = vmatprep.subr.bf16.mxu0 0
        %3055 = vmatpush1.bf16.msra.mxu0 0
        %3056 = vmatprep.subr.bf16.mxu0 0
        %3057 = vmatpush1.bf16.msra.mxu0 0
        %3058 = vmatprep.subr.bf16.mxu0 0
        %3059 = vmatpush1.bf16.msra.mxu0 0
        %3060 = vmatprep.subr.bf16.mxu0 0
        %3061 = vmatpush1.bf16.msra.mxu0 0
        %3062 = vmatprep.subr.bf16.mxu0 0
        %3063 = vmatpush1.bf16.msra.mxu0 0
        %3064 = vmatprep.subr.bf16.mxu0 0
        %3065 = vmatpush1.bf16.msra.mxu0 0
        %3066 = vmatprep.subr.bf16.mxu0 0
        %3067 = vmatpush1.bf16.msra.mxu0 0
        %3068 = vmatprep.subr.bf16.mxu0 0
        %3069 = vmatpush1.bf16.msra.mxu0 0
        %3070 = vmatprep.subr.bf16.mxu0 0
        %3071 = vmatpush1.bf16.msra.mxu0 0
        %3072 = vmatprep.subr.bf16.mxu0 0
        %3073 = vmatpush1.bf16.msra.mxu0 0
        %3074 = vmatprep.subr.bf16.mxu0 0
        %3075 = vmatpush1.bf16.msra.mxu0 0
        %3076 = vmatprep.subr.bf16.mxu0 0
        %3077 = vmatpush1.bf16.msra.mxu0 0
        %3078 = vmatprep.subr.bf16.mxu0 0
        %3079 = vmatpush1.bf16.msra.mxu0 0
        %3080 = vmatprep.mubr.bf16.mxu0 0
        %3081 = vmatmul.mubr.bf16.gmra.mrb[0].mxu0 %v2742
        %v3082 = vpop.f32.mrb[0].mxu0
        %v3083 = vadd.f32 0.0, %v3082
        %v3084 = vpop.f32.mrb[0].mxu0
        %v3085 = vpop.f32.mrb[0].mxu0
        %v3086 = vpop.f32.mrb[0].mxu0
        %3087 = vdwg.mxu0
        %v3088 = vadd.f32 %v2593, %v2782
        %v3089 = vadd.f32 %v2594, %v2825
        %v3090 = vadd.f32 %v2595, %v2868
        %v3091 = vadd.f32 %v2596, %v2911
        %v3092 = vadd.f32 %v2597, %v2954
        %v3093 = vadd.f32 %v2598, %v2997
        %v3094 = vadd.f32 %v2599, %v3040
        %v3095 = vadd.f32 %v2600, %v3083
        %s3096 = scalar_lea.vmem [#allocation5], 320
        %v3097 = vld [vmem:[%s3096] sm:$0xf]
        %v3098 = vld [vmem:[%s3096 + $0x4] sm:$0xf]
        %v3099 = vld [vmem:[%s3096 + $0x8] sm:$0xf]
        %v3100 = vld [vmem:[%s3096 + $0xc] sm:$0xf]
        %v3101 = vld [vmem:[%s3096 + $0x10] sm:$0xf]
        %v3102 = vld [vmem:[%s3096 + $0x14] sm:$0xf]
        %v3103 = vld [vmem:[%s3096 + $0x18] sm:$0xf]
        %v3104 = vld [vmem:[%s3096 + $0x1c] sm:$0xf]
        %v3105 = vld [vmem:[%s3096 + $0x20] sm:$0xf]
        %v3106 = vld [vmem:[%s3096 + $0x24] sm:$0xf]
        %v3107 = vld [vmem:[%s3096 + $0x28] sm:$0xf]
        %v3108 = vld [vmem:[%s3096 + $0x2c] sm:$0xf]
        %v3109 = vld [vmem:[%s3096 + $0x30] sm:$0xf]
        %v3110 = vld [vmem:[%s3096 + $0x34] sm:$0xf]
        %v3111 = vld [vmem:[%s3096 + $0x38] sm:$0xf]
        %v3112 = vld [vmem:[%s3096 + $0x3c] sm:$0xf]
        %v3129 = vunpack.c.l.b16 %v3097
        %v3130 = vunpack.c.l.b16 %v3098
        %v3131 = vunpack.c.l.b16 %v3099
        %v3132 = vunpack.c.l.b16 %v3100
        %v3133 = vunpack.c.l.b16 %v3101
        %v3134 = vunpack.c.l.b16 %v3102
        %v3135 = vunpack.c.l.b16 %v3103
        %v3136 = vunpack.c.l.b16 %v3104
        %v3137 = vunpack.c.l.b16 %v3105
        %v3138 = vunpack.c.l.b16 %v3106
        %v3139 = vunpack.c.l.b16 %v3107
        %v3140 = vunpack.c.l.b16 %v3108
        %v3141 = vunpack.c.l.b16 %v3109
        %v3142 = vunpack.c.l.b16 %v3110
        %v3143 = vunpack.c.l.b16 %v3111
        %v3144 = vunpack.c.l.b16 %v3112
        %v3145 = vpack.c.b16 %v3130, %v3129
        %v3146 = vpack.c.b16 %v3132, %v3131
        %v3147 = vpack.c.b16 %v3134, %v3133
        %v3148 = vpack.c.b16 %v3136, %v3135
        %v3149 = vpack.c.b16 %v3138, %v3137
        %v3150 = vpack.c.b16 %v3140, %v3139
        %v3151 = vpack.c.b16 %v3142, %v3141
        %v3152 = vpack.c.b16 %v3144, %v3143
        %3161 = vmatprep.subr.bf16.mxu0 0
        %3162 = vmatpush1.bf16.msra.mxu0 %v3145
        %3163 = vmatprep.subr.bf16.mxu0 0
        %3164 = vmatpush1.bf16.msra.mxu0 %v3146
        %3165 = vmatprep.subr.bf16.mxu0 0
        %3166 = vmatpush1.bf16.msra.mxu0 %v3147
        %3167 = vmatprep.subr.bf16.mxu0 0
        %3168 = vmatpush1.bf16.msra.mxu0 %v3148
        %3169 = vmatprep.subr.bf16.mxu0 0
        %3170 = vmatpush1.bf16.msra.mxu0 %v3149
        %3171 = vmatprep.subr.bf16.mxu0 0
        %3172 = vmatpush1.bf16.msra.mxu0 %v3150
        %3173 = vmatprep.subr.bf16.mxu0 0
        %3174 = vmatpush1.bf16.msra.mxu0 %v3151
        %3175 = vmatprep.subr.bf16.mxu0 0
        %3176 = vmatpush1.bf16.msra.mxu0 %v3152
        %3177 = vmatprep.subr.bf16.mxu0 0
        %3178 = vmatpush1.bf16.msra.mxu0 0
        %3179 = vmatprep.subr.bf16.mxu0 0
        %3180 = vmatpush1.bf16.msra.mxu0 0
        %3181 = vmatprep.subr.bf16.mxu0 0
        %3182 = vmatpush1.bf16.msra.mxu0 0
        %3183 = vmatprep.subr.bf16.mxu0 0
        %3184 = vmatpush1.bf16.msra.mxu0 0
        %3185 = vmatprep.subr.bf16.mxu0 0
        %3186 = vmatpush1.bf16.msra.mxu0 0
        %3187 = vmatprep.subr.bf16.mxu0 0
        %3188 = vmatpush1.bf16.msra.mxu0 0
        %3189 = vmatprep.subr.bf16.mxu0 0
        %3190 = vmatpush1.bf16.msra.mxu0 0
        %3191 = vmatprep.subr.bf16.mxu0 0
        %3192 = vmatpush1.bf16.msra.mxu0 0
        %3193 = vmatprep.mubr.bf16.mxu0 0
        %3194 = vmatmul.mubr.bf16.gmra.mrb[0].mxu0 %v289
        %v3195 = vpop.f32.mrb[0].mxu0
        %v3196 = vadd.f32 0.0, %v3195
        %v3197 = vpop.f32.mrb[0].mxu0
        %v3198 = vpop.f32.mrb[0].mxu0
        %v3199 = vadd.f32 0.0, %v3198
        %v3200 = vpop.f32.mrb[0].mxu0
        %3201 = vmatprep.mubr.bf16.mxu0 0
        %3202 = vmatmul.mubr.bf16.gmra.mrb[0].mxu0 %v290
        %v3203 = vpop.f32.mrb[0].mxu0
        %v3204 = vadd.f32 0.0, %v3203
        %v3205 = vpop.f32.mrb[0].mxu0
        %v3206 = vpop.f32.mrb[0].mxu0
        %v3207 = vadd.f32 0.0, %v3206
        %v3208 = vpop.f32.mrb[0].mxu0
        %3209 = vmatprep.mubr.bf16.mxu0 0
        %3210 = vmatmul.mubr.bf16.gmra.mrb[0].mxu0 %v291
        %v3211 = vpop.f32.mrb[0].mxu0
        %v3212 = vadd.f32 0.0, %v3211
        %v3213 = vpop.f32.mrb[0].mxu0
        %v3214 = vpop.f32.mrb[0].mxu0
        %v3215 = vadd.f32 0.0, %v3214
        %v3216 = vpop.f32.mrb[0].mxu0
        %3217 = vmatprep.mubr.bf16.mxu0 0
        %3218 = vmatmul.mubr.bf16.gmra.mrb[0].mxu0 %v292
        %v3219 = vpop.f32.mrb[0].mxu0
        %v3220 = vadd.f32 0.0, %v3219
        %v3221 = vpop.f32.mrb[0].mxu0
        %v3222 = vpop.f32.mrb[0].mxu0
        %v3223 = vadd.f32 0.0, %v3222
        %v3224 = vpop.f32.mrb[0].mxu0
        %3225 = vdwg.mxu0
        %v3226 = vpack.c.bf16 %v3196, %v3196
        %v3227 = vpack.c.bf16 %v3199, %v3199
        %v3228 = vpack.c.bf16 %v3204, %v3204
        %v3229 = vpack.c.bf16 %v3207, %v3207
        %v3230 = vpack.c.bf16 %v3212, %v3212
        %v3231 = vpack.c.bf16 %v3215, %v3215
        %v3232 = vpack.c.bf16 %v3220, %v3220
        %v3233 = vpack.c.bf16 %v3223, %v3223
        %s3234 = scalar_lea.vmem [#allocation7], 24
        %v3235 = vld [vmem:[%s3234] sm:$0xf]
        %v3237 = vsel %vm420, %v3235, 0
        %v3240 = vsel %vm424, %v3226, 0
        %3242 = vmatprep.subr.bf16.mxu0 0
        %3243 = vmatpush1.bf16.msra.mxu0 %v3240
        %3244 = vmatprep.subr.bf16.mxu0 0
        %3245 = vmatpush1.bf16.msra.mxu0 0
        %3246 = vmatprep.subr.bf16.mxu0 0
        %3247 = vmatpush1.bf16.msra.mxu0 0
        %3248 = vmatprep.subr.bf16.mxu0 0
        %3249 = vmatpush1.bf16.msra.mxu0 0
        %3250 = vmatprep.subr.bf16.mxu0 0
        %3251 = vmatpush1.bf16.msra.mxu0 0
        %3252 = vmatprep.subr.bf16.mxu0 0
        %3253 = vmatpush1.bf16.msra.mxu0 0
        %3254 = vmatprep.subr.bf16.mxu0 0
        %3255 = vmatpush1.bf16.msra.mxu0 0
        %3256 = vmatprep.subr.bf16.mxu0 0
        %3257 = vmatpush1.bf16.msra.mxu0 0
        %3258 = vmatprep.subr.bf16.mxu0 0
        %3259 = vmatpush1.bf16.msra.mxu0 0
        %3260 = vmatprep.subr.bf16.mxu0 0
        %3261 = vmatpush1.bf16.msra.mxu0 0
        %3262 = vmatprep.subr.bf16.mxu0 0
        %3263 = vmatpush1.bf16.msra.mxu0 0
        %3264 = vmatprep.subr.bf16.mxu0 0
        %3265 = vmatpush1.bf16.msra.mxu0 0
        %3266 = vmatprep.subr.bf16.mxu0 0
        %3267 = vmatpush1.bf16.msra.mxu0 0
        %3268 = vmatprep.subr.bf16.mxu0 0
        %3269 = vmatpush1.bf16.msra.mxu0 0
        %3270 = vmatprep.subr.bf16.mxu0 0
        %3271 = vmatpush1.bf16.msra.mxu0 0
        %3272 = vmatprep.subr.bf16.mxu0 0
        %3273 = vmatpush1.bf16.msra.mxu0 0
        %3274 = vmatprep.mubr.bf16.mxu0 0
        %3275 = vmatmul.mubr.bf16.gmra.mrb[0].mxu0 %v3237
        %v3276 = vpop.f32.mrb[0].mxu0
        %v3277 = vadd.f32 0.0, %v3276
        %v3278 = vpop.f32.mrb[0].mxu0
        %v3279 = vpop.f32.mrb[0].mxu0
        %v3280 = vpop.f32.mrb[0].mxu0
        %3281 = vdwg.mxu0
        %v3283 = vsel %vm424, %v3227, 0
        %3285 = vmatprep.subr.bf16.mxu0 0
        %3286 = vmatpush1.bf16.msra.mxu0 %v3283
        %3287 = vmatprep.subr.bf16.mxu0 0
        %3288 = vmatpush1.bf16.msra.mxu0 0
        %3289 = vmatprep.subr.bf16.mxu0 0
        %3290 = vmatpush1.bf16.msra.mxu0 0
        %3291 = vmatprep.subr.bf16.mxu0 0
        %3292 = vmatpush1.bf16.msra.mxu0 0
        %3293 = vmatprep.subr.bf16.mxu0 0
        %3294 = vmatpush1.bf16.msra.mxu0 0
        %3295 = vmatprep.subr.bf16.mxu0 0
        %3296 = vmatpush1.bf16.msra.mxu0 0
        %3297 = vmatprep.subr.bf16.mxu0 0
        %3298 = vmatpush1.bf16.msra.mxu0 0
        %3299 = vmatprep.subr.bf16.mxu0 0
        %3300 = vmatpush1.bf16.msra.mxu0 0
        %3301 = vmatprep.subr.bf16.mxu0 0
        %3302 = vmatpush1.bf16.msra.mxu0 0
        %3303 = vmatprep.subr.bf16.mxu0 0
        %3304 = vmatpush1.bf16.msra.mxu0 0
        %3305 = vmatprep.subr.bf16.mxu0 0
        %3306 = vmatpush1.bf16.msra.mxu0 0
        %3307 = vmatprep.subr.bf16.mxu0 0
        %3308 = vmatpush1.bf16.msra.mxu0 0
        %3309 = vmatprep.subr.bf16.mxu0 0
        %3310 = vmatpush1.bf16.msra.mxu0 0
        %3311 = vmatprep.subr.bf16.mxu0 0
        %3312 = vmatpush1.bf16.msra.mxu0 0
        %3313 = vmatprep.subr.bf16.mxu0 0
        %3314 = vmatpush1.bf16.msra.mxu0 0
        %3315 = vmatprep.subr.bf16.mxu0 0
        %3316 = vmatpush1.bf16.msra.mxu0 0
        %3317 = vmatprep.mubr.bf16.mxu0 0
        %3318 = vmatmul.mubr.bf16.gmra.mrb[0].mxu0 %v3237
        %v3319 = vpop.f32.mrb[0].mxu0
        %v3320 = vadd.f32 0.0, %v3319
        %v3321 = vpop.f32.mrb[0].mxu0
        %v3322 = vpop.f32.mrb[0].mxu0
        %v3323 = vpop.f32.mrb[0].mxu0
        %3324 = vdwg.mxu0
        %v3326 = vsel %vm424, %v3228, 0
        %3328 = vmatprep.subr.bf16.mxu0 0
        %3329 = vmatpush1.bf16.msra.mxu0 %v3326
        %3330 = vmatprep.subr.bf16.mxu0 0
        %3331 = vmatpush1.bf16.msra.mxu0 0
        %3332 = vmatprep.subr.bf16.mxu0 0
        %3333 = vmatpush1.bf16.msra.mxu0 0
        %3334 = vmatprep.subr.bf16.mxu0 0
        %3335 = vmatpush1.bf16.msra.mxu0 0
        %3336 = vmatprep.subr.bf16.mxu0 0
        %3337 = vmatpush1.bf16.msra.mxu0 0
        %3338 = vmatprep.subr.bf16.mxu0 0
        %3339 = vmatpush1.bf16.msra.mxu0 0
        %3340 = vmatprep.subr.bf16.mxu0 0
        %3341 = vmatpush1.bf16.msra.mxu0 0
        %3342 = vmatprep.subr.bf16.mxu0 0
        %3343 = vmatpush1.bf16.msra.mxu0 0
        %3344 = vmatprep.subr.bf16.mxu0 0
        %3345 = vmatpush1.bf16.msra.mxu0 0
        %3346 = vmatprep.subr.bf16.mxu0 0
        %3347 = vmatpush1.bf16.msra.mxu0 0
        %3348 = vmatprep.subr.bf16.mxu0 0
        %3349 = vmatpush1.bf16.msra.mxu0 0
        %3350 = vmatprep.subr.bf16.mxu0 0
        %3351 = vmatpush1.bf16.msra.mxu0 0
        %3352 = vmatprep.subr.bf16.mxu0 0
        %3353 = vmatpush1.bf16.msra.mxu0 0
        %3354 = vmatprep.subr.bf16.mxu0 0
        %3355 = vmatpush1.bf16.msra.mxu0 0
        %3356 = vmatprep.subr.bf16.mxu0 0
        %3357 = vmatpush1.bf16.msra.mxu0 0
        %3358 = vmatprep.subr.bf16.mxu0 0
        %3359 = vmatpush1.bf16.msra.mxu0 0
        %3360 = vmatprep.mubr.bf16.mxu0 0
        %3361 = vmatmul.mubr.bf16.gmra.mrb[0].mxu0 %v3237
        %v3362 = vpop.f32.mrb[0].mxu0
        %v3363 = vadd.f32 0.0, %v3362
        %v3364 = vpop.f32.mrb[0].mxu0
        %v3365 = vpop.f32.mrb[0].mxu0
        %v3366 = vpop.f32.mrb[0].mxu0
        %3367 = vdwg.mxu0
        %v3369 = vsel %vm424, %v3229, 0
        %3371 = vmatprep.subr.bf16.mxu0 0
        %3372 = vmatpush1.bf16.msra.mxu0 %v3369
        %3373 = vmatprep.subr.bf16.mxu0 0
        %3374 = vmatpush1.bf16.msra.mxu0 0
        %3375 = vmatprep.subr.bf16.mxu0 0
        %3376 = vmatpush1.bf16.msra.mxu0 0
        %3377 = vmatprep.subr.bf16.mxu0 0
        %3378 = vmatpush1.bf16.msra.mxu0 0
        %3379 = vmatprep.subr.bf16.mxu0 0
        %3380 = vmatpush1.bf16.msra.mxu0 0
        %3381 = vmatprep.subr.bf16.mxu0 0
        %3382 = vmatpush1.bf16.msra.mxu0 0
        %3383 = vmatprep.subr.bf16.mxu0 0
        %3384 = vmatpush1.bf16.msra.mxu0 0
        %3385 = vmatprep.subr.bf16.mxu0 0
        %3386 = vmatpush1.bf16.msra.mxu0 0
        %3387 = vmatprep.subr.bf16.mxu0 0
        %3388 = vmatpush1.bf16.msra.mxu0 0
        %3389 = vmatprep.subr.bf16.mxu0 0
        %3390 = vmatpush1.bf16.msra.mxu0 0
        %3391 = vmatprep.subr.bf16.mxu0 0
        %3392 = vmatpush1.bf16.msra.mxu0 0
        %3393 = vmatprep.subr.bf16.mxu0 0
        %3394 = vmatpush1.bf16.msra.mxu0 0
        %3395 = vmatprep.subr.bf16.mxu0 0
        %3396 = vmatpush1.bf16.msra.mxu0 0
        %3397 = vmatprep.subr.bf16.mxu0 0
        %3398 = vmatpush1.bf16.msra.mxu0 0
        %3399 = vmatprep.subr.bf16.mxu0 0
        %3400 = vmatpush1.bf16.msra.mxu0 0
        %3401 = vmatprep.subr.bf16.mxu0 0
        %3402 = vmatpush1.bf16.msra.mxu0 0
        %3403 = vmatprep.mubr.bf16.mxu0 0
        %3404 = vmatmul.mubr.bf16.gmra.mrb[0].mxu0 %v3237
        %v3405 = vpop.f32.mrb[0].mxu0
        %v3406 = vadd.f32 0.0, %v3405
        %v3407 = vpop.f32.mrb[0].mxu0
        %v3408 = vpop.f32.mrb[0].mxu0
        %v3409 = vpop.f32.mrb[0].mxu0
        %3410 = vdwg.mxu0
        %v3412 = vsel %vm424, %v3230, 0
        %3414 = vmatprep.subr.bf16.mxu0 0
        %3415 = vmatpush1.bf16.msra.mxu0 %v3412
        %3416 = vmatprep.subr.bf16.mxu0 0
        %3417 = vmatpush1.bf16.msra.mxu0 0
        %3418 = vmatprep.subr.bf16.mxu0 0
        %3419 = vmatpush1.bf16.msra.mxu0 0
        %3420 = vmatprep.subr.bf16.mxu0 0
        %3421 = vmatpush1.bf16.msra.mxu0 0
        %3422 = vmatprep.subr.bf16.mxu0 0
        %3423 = vmatpush1.bf16.msra.mxu0 0
        %3424 = vmatprep.subr.bf16.mxu0 0
        %3425 = vmatpush1.bf16.msra.mxu0 0
        %3426 = vmatprep.subr.bf16.mxu0 0
        %3427 = vmatpush1.bf16.msra.mxu0 0
        %3428 = vmatprep.subr.bf16.mxu0 0
        %3429 = vmatpush1.bf16.msra.mxu0 0
        %3430 = vmatprep.subr.bf16.mxu0 0
        %3431 = vmatpush1.bf16.msra.mxu0 0
        %3432 = vmatprep.subr.bf16.mxu0 0
        %3433 = vmatpush1.bf16.msra.mxu0 0
        %3434 = vmatprep.subr.bf16.mxu0 0
        %3435 = vmatpush1.bf16.msra.mxu0 0
        %3436 = vmatprep.subr.bf16.mxu0 0
        %3437 = vmatpush1.bf16.msra.mxu0 0
        %3438 = vmatprep.subr.bf16.mxu0 0
        %3439 = vmatpush1.bf16.msra.mxu0 0
        %3440 = vmatprep.subr.bf16.mxu0 0
        %3441 = vmatpush1.bf16.msra.mxu0 0
        %3442 = vmatprep.subr.bf16.mxu0 0
        %3443 = vmatpush1.bf16.msra.mxu0 0
        %3444 = vmatprep.subr.bf16.mxu0 0
        %3445 = vmatpush1.bf16.msra.mxu0 0
        %3446 = vmatprep.mubr.bf16.mxu0 0
        %3447 = vmatmul.mubr.bf16.gmra.mrb[0].mxu0 %v3237
        %v3448 = vpop.f32.mrb[0].mxu0
        %v3449 = vadd.f32 0.0, %v3448
        %v3450 = vpop.f32.mrb[0].mxu0
        %v3451 = vpop.f32.mrb[0].mxu0
        %v3452 = vpop.f32.mrb[0].mxu0
        %3453 = vdwg.mxu0
        %v3455 = vsel %vm424, %v3231, 0
        %3457 = vmatprep.subr.bf16.mxu0 0
        %3458 = vmatpush1.bf16.msra.mxu0 %v3455
        %3459 = vmatprep.subr.bf16.mxu0 0
        %3460 = vmatpush1.bf16.msra.mxu0 0
        %3461 = vmatprep.subr.bf16.mxu0 0
        %3462 = vmatpush1.bf16.msra.mxu0 0
        %3463 = vmatprep.subr.bf16.mxu0 0
        %3464 = vmatpush1.bf16.msra.mxu0 0
        %3465 = vmatprep.subr.bf16.mxu0 0
        %3466 = vmatpush1.bf16.msra.mxu0 0
        %3467 = vmatprep.subr.bf16.mxu0 0
        %3468 = vmatpush1.bf16.msra.mxu0 0
        %3469 = vmatprep.subr.bf16.mxu0 0
        %3470 = vmatpush1.bf16.msra.mxu0 0
        %3471 = vmatprep.subr.bf16.mxu0 0
        %3472 = vmatpush1.bf16.msra.mxu0 0
        %3473 = vmatprep.subr.bf16.mxu0 0
        %3474 = vmatpush1.bf16.msra.mxu0 0
        %3475 = vmatprep.subr.bf16.mxu0 0
        %3476 = vmatpush1.bf16.msra.mxu0 0
        %3477 = vmatprep.subr.bf16.mxu0 0
        %3478 = vmatpush1.bf16.msra.mxu0 0
        %3479 = vmatprep.subr.bf16.mxu0 0
        %3480 = vmatpush1.bf16.msra.mxu0 0
        %3481 = vmatprep.subr.bf16.mxu0 0
        %3482 = vmatpush1.bf16.msra.mxu0 0
        %3483 = vmatprep.subr.bf16.mxu0 0
        %3484 = vmatpush1.bf16.msra.mxu0 0
        %3485 = vmatprep.subr.bf16.mxu0 0
        %3486 = vmatpush1.bf16.msra.mxu0 0
        %3487 = vmatprep.subr.bf16.mxu0 0
        %3488 = vmatpush1.bf16.msra.mxu0 0
        %3489 = vmatprep.mubr.bf16.mxu0 0
        %3490 = vmatmul.mubr.bf16.gmra.mrb[0].mxu0 %v3237
        %v3491 = vpop.f32.mrb[0].mxu0
        %v3492 = vadd.f32 0.0, %v3491
        %v3493 = vpop.f32.mrb[0].mxu0
        %v3494 = vpop.f32.mrb[0].mxu0
        %v3495 = vpop.f32.mrb[0].mxu0
        %3496 = vdwg.mxu0
        %v3498 = vsel %vm424, %v3232, 0
        %3500 = vmatprep.subr.bf16.mxu0 0
        %3501 = vmatpush1.bf16.msra.mxu0 %v3498
        %3502 = vmatprep.subr.bf16.mxu0 0
        %3503 = vmatpush1.bf16.msra.mxu0 0
        %3504 = vmatprep.subr.bf16.mxu0 0
        %3505 = vmatpush1.bf16.msra.mxu0 0
        %3506 = vmatprep.subr.bf16.mxu0 0
        %3507 = vmatpush1.bf16.msra.mxu0 0
        %3508 = vmatprep.subr.bf16.mxu0 0
        %3509 = vmatpush1.bf16.msra.mxu0 0
        %3510 = vmatprep.subr.bf16.mxu0 0
        %3511 = vmatpush1.bf16.msra.mxu0 0
        %3512 = vmatprep.subr.bf16.mxu0 0
        %3513 = vmatpush1.bf16.msra.mxu0 0
        %3514 = vmatprep.subr.bf16.mxu0 0
        %3515 = vmatpush1.bf16.msra.mxu0 0
        %3516 = vmatprep.subr.bf16.mxu0 0
        %3517 = vmatpush1.bf16.msra.mxu0 0
        %3518 = vmatprep.subr.bf16.mxu0 0
        %3519 = vmatpush1.bf16.msra.mxu0 0
        %3520 = vmatprep.subr.bf16.mxu0 0
        %3521 = vmatpush1.bf16.msra.mxu0 0
        %3522 = vmatprep.subr.bf16.mxu0 0
        %3523 = vmatpush1.bf16.msra.mxu0 0
        %3524 = vmatprep.subr.bf16.mxu0 0
        %3525 = vmatpush1.bf16.msra.mxu0 0
        %3526 = vmatprep.subr.bf16.mxu0 0
        %3527 = vmatpush1.bf16.msra.mxu0 0
        %3528 = vmatprep.subr.bf16.mxu0 0
        %3529 = vmatpush1.bf16.msra.mxu0 0
        %3530 = vmatprep.subr.bf16.mxu0 0
        %3531 = vmatpush1.bf16.msra.mxu0 0
        %3532 = vmatprep.mubr.bf16.mxu0 0
        %3533 = vmatmul.mubr.bf16.gmra.mrb[0].mxu0 %v3237
        %v3534 = vpop.f32.mrb[0].mxu0
        %v3535 = vadd.f32 0.0, %v3534
        %v3536 = vpop.f32.mrb[0].mxu0
        %v3537 = vpop.f32.mrb[0].mxu0
        %v3538 = vpop.f32.mrb[0].mxu0
        %3539 = vdwg.mxu0
        %v3541 = vsel %vm424, %v3233, 0
        %3543 = vmatprep.subr.bf16.mxu0 0
        %3544 = vmatpush1.bf16.msra.mxu0 %v3541
        %3545 = vmatprep.subr.bf16.mxu0 0
        %3546 = vmatpush1.bf16.msra.mxu0 0
        %3547 = vmatprep.subr.bf16.mxu0 0
        %3548 = vmatpush1.bf16.msra.mxu0 0
        %3549 = vmatprep.subr.bf16.mxu0 0
        %3550 = vmatpush1.bf16.msra.mxu0 0
        %3551 = vmatprep.subr.bf16.mxu0 0
        %3552 = vmatpush1.bf16.msra.mxu0 0
        %3553 = vmatprep.subr.bf16.mxu0 0
        %3554 = vmatpush1.bf16.msra.mxu0 0
        %3555 = vmatprep.subr.bf16.mxu0 0
        %3556 = vmatpush1.bf16.msra.mxu0 0
        %3557 = vmatprep.subr.bf16.mxu0 0
        %3558 = vmatpush1.bf16.msra.mxu0 0
        %3559 = vmatprep.subr.bf16.mxu0 0
        %3560 = vmatpush1.bf16.msra.mxu0 0
        %3561 = vmatprep.subr.bf16.mxu0 0
        %3562 = vmatpush1.bf16.msra.mxu0 0
        %3563 = vmatprep.subr.bf16.mxu0 0
        %3564 = vmatpush1.bf16.msra.mxu0 0
        %3565 = vmatprep.subr.bf16.mxu0 0
        %3566 = vmatpush1.bf16.msra.mxu0 0
        %3567 = vmatprep.subr.bf16.mxu0 0
        %3568 = vmatpush1.bf16.msra.mxu0 0
        %3569 = vmatprep.subr.bf16.mxu0 0
        %3570 = vmatpush1.bf16.msra.mxu0 0
        %3571 = vmatprep.subr.bf16.mxu0 0
        %3572 = vmatpush1.bf16.msra.mxu0 0
        %3573 = vmatprep.subr.bf16.mxu0 0
        %3574 = vmatpush1.bf16.msra.mxu0 0
        %3575 = vmatprep.mubr.bf16.mxu0 0
        %3576 = vmatmul.mubr.bf16.gmra.mrb[0].mxu0 %v3237
        %v3577 = vpop.f32.mrb[0].mxu0
        %v3578 = vadd.f32 0.0, %v3577
        %v3579 = vpop.f32.mrb[0].mxu0
        %v3580 = vpop.f32.mrb[0].mxu0
        %v3581 = vpop.f32.mrb[0].mxu0
        %3582 = vdwg.mxu0
        %v3583 = vadd.f32 %v3088, %v3277
        %v3584 = vadd.f32 %v3089, %v3320
        %v3585 = vadd.f32 %v3090, %v3363
        %v3586 = vadd.f32 %v3091, %v3406
        %v3587 = vadd.f32 %v3092, %v3449
        %v3588 = vadd.f32 %v3093, %v3492
        %v3589 = vadd.f32 %v3094, %v3535
        %v3590 = vadd.f32 %v3095, %v3578
        %v3591 = vld [vmem:[%s3] sm:$0xff]
        %3593 = vset.pattern.permute.xlu0 0
        %3594 = vperm.xlu0 %3593, %v3591
        %v3595 = vpop.permute.xlu0 %3594
        %v3597 = vadd.f32 %v3583, %v3595
        %v3598 = vadd.f32 %v3584, %v3595
        %v3599 = vadd.f32 %v3585, %v3595
        %v3600 = vadd.f32 %v3586, %v3595
        %v3601 = vadd.f32 %v3587, %v3595
        %v3602 = vadd.f32 %v3588, %v3595
        %v3603 = vadd.f32 %v3589, %v3595
        %v3604 = vadd.f32 %v3590, %v3595
        %v3605 = vpack.c.bf16 %v3597, %v3597
        %v3606 = vpack.c.bf16 %v3598, %v3598
        %v3607 = vpack.c.bf16 %v3599, %v3599
        %v3608 = vpack.c.bf16 %v3600, %v3600
        %v3609 = vpack.c.bf16 %v3601, %v3601
        %v3610 = vpack.c.bf16 %v3602, %v3602
        %v3611 = vpack.c.bf16 %v3603, %v3603
        %v3612 = vpack.c.bf16 %v3604, %v3604
        %3613 = vst [vmem:[%s244] sm:$0xf] %v3605
        %3614 = vst [vmem:[%s244 + $0x4] sm:$0xf] %v3606
        %3615 = vst [vmem:[%s244 + $0x8] sm:$0xf] %v3607
        %3616 = vst [vmem:[%s244 + $0xc] sm:$0xf] %v3608
        %3617 = vst [vmem:[%s244 + $0x10] sm:$0xf] %v3609
        %3618 = vst [vmem:[%s244 + $0x14] sm:$0xf] %v3610
        %3619 = vst [vmem:[%s244 + $0x18] sm:$0xf] %v3611
        %3620 = vst [vmem:[%s244 + $0x1c] sm:$0xf] %v3612
        %s3621 = sand.u32 %s119, 1
        %s3622 = scalar_lea.sflag [#allocation4], %s3621
        %s3623 = sand.u32 %s119, 1
        %s3624 = smul.addr %s3623, 32
        %s3625 = scalar_lea.vmem [#allocation8], %s3624
        // Predicated region
        $region49: #{tpu_custom_call.1} parent=35 // pred_check
          %p3626 = pneg %p129
        $region50: #{tpu_custom_call.1} parent=35 // pred_check_branch
          %3628 = sbr.rel (%p3626) target = $region52
        $region51: #{tpu_custom_call.1} parent=35 // pred_region
          %s3629 = smul.u32 8, %s22
          %s3631 = ssub.s32 512, 512
          %3632 = vsyncadd %s3622, %s3631
          %s3633 = smul.addr %s3629, 64
          %s3634 = scalar_lea.hbm %s4, %s3633
          %s3635 = sshll.u32 %s3625, 4
          %s3636 = int_to_ptr.vmem [resolvable:$true] %s3635
          %3641 = dma.vmem_to_hbm [thread:$0]  %s3636, 512, %s3634, %s3622, 64, 64, 4
        $region52: #{tpu_custom_call.1} parent=35 // pred_fallthru
          _
      $region36: #{tpu_custom_call.1} parent=5 // pred_fallthru
        _
      %p3642 = scmp.le.s32.totalorder 2, %s17
      // Predicated region
      $region53: #{tpu_custom_call.1} parent=5 // pred_check
        %p3643 = pneg %p3642
      $region54: #{tpu_custom_call.1} parent=5 // pred_check_branch
        %3645 = sbr.rel (%p3643) target = $region56
      $region55: #{tpu_custom_call.1} parent=5 // pred_region
        %s3646 = ssub.s32 %s17, 2
        // Predicated region
        $region57: #{tpu_custom_call.1} parent=55 // pred_check
          %p3647 = pneg %p135
        $region58: #{tpu_custom_call.1} parent=55 // pred_check_branch
          %3649 = sbr.rel (%p3647) target = $region60
        $region59: #{tpu_custom_call.1} parent=55 // pred_region
          %s3650 = sand.u32 %s120, 1
          %s3651 = scalar_lea.sflag [#allocation4], %s3650
          %s3652 = sand.u32 %s120, 1
          %s3653 = smul.addr %s3652, 32
          %s3654 = scalar_lea.vmem [#allocation8], %s3653
          %3655 = dma.done %s3651, 512
        $region60: #{tpu_custom_call.1} parent=55 // pred_fallthru
          _
      $region56: #{tpu_custom_call.1} parent=5 // pred_fallthru
        _
    $region6: #{tpu_custom_call.1} parent=1 // loop_footer
      %s21 = sadd.s32 1, %s17
    $region7: #{tpu_custom_call.1} parent=1 // loop_footer_branch
      %16 = sbr.rel target = $region3
    $region8: #{tpu_custom_call.1} parent=1 // loop_exit
      _
    %3656 = vsyncpa [#allocation3], 1
    %s3657 = scalar_lea.sflag [#allocation3], 1
    %3658 = vsyncpa %s3657, 1
    %3659 = vsyncpa [#allocation6], 1
    %3660 = vsyncpa [#allocation4], 1
    %s3661 = scalar_lea.sflag [#allocation4], 1
    %3662 = vsyncpa %s3661, 1

</llo_original>
